<compile_context>
chip_gen: v6e
topology: v6e:2x2x1
jax: 0.10.0
libtpu: 0.0.40
codegen_flags: <defaults>
</compile_context>

<pallas_src>
import jax
import jax.numpy as jnp
import numpy as np
from jax.experimental import pallas as pl
from jax.experimental.pallas import tpu as pltpu  # noqa: F401  (kept for scale-up knobs)


# ---------------------------------------------------------------------------
# Fused forward kernel: single invocation, no grid, no scratch slabs.
# ---------------------------------------------------------------------------
def fused_forward_kernel(x_ref, wih0_ref, whh0_ref, b0_ref,
                         wih1_ref, whh1_ref, b1_ref,
                         wattn_ref, wres_ref, bres_ref,
                         wfc_ref, bfc_ref,
                         logits_ref, attnw_ref):
    I = x_ref.shape[1]
    H = whh0_ref.shape[0]
    B, T = attnw_ref.shape

    x = x_ref[...]                       # (T*B, I), time-major flat
    whh0 = whh0_ref[...]
    wih1 = wih1_ref[...]
    whh1 = whh1_ref[...]
    b1 = b1_ref[...]
    wattn = wattn_ref[...]               # (H, 1) column -> MXU score matmul

    # Hoisted layer-0 input projection: one MXU matmul covering all T steps.
    g0 = (jnp.dot(x, wih0_ref[...], preferred_element_type=jnp.float32)
          + b0_ref[...])                 # (T*B, 4H)

    def cell(gates, c):
        # gate order [i | f | o | g]: one contiguous sigmoid, one tanh
        ifo = jax.nn.sigmoid(gates[:, :3 * H])
        g = jnp.tanh(gates[:, 3 * H:])
        c_new = ifo[:, H:2 * H] * c + ifo[:, :H] * g
        h_new = ifo[:, 2 * H:] * jnp.tanh(c_new)
        return h_new, c_new

    zeros_bh = jnp.zeros((B, H), jnp.float32)
    h1, c1 = zeros_bh, zeros_bh
    h2, c2 = zeros_bh, zeros_bh
    xsum = jnp.zeros((B, I), jnp.float32)

    # Online-softmax attention accumulators (flash-style, exact).
    m_run = jnp.full((B, 1), -1e30, jnp.float32)
    l_run = jnp.zeros((B, 1), jnp.float32)
    acc = jnp.zeros((B, H), jnp.float32)
    scores = jnp.zeros((B, T), jnp.float32)
    lane_t = jax.lax.broadcasted_iota(jnp.int32, (B, T), 1)

    # Wavefront over the two layers: iteration t runs layer-0 step t and
    # layer-1 step t-1 as independent chains.  T is small & static -> unroll.
    for t in range(T + 1):
        h1_new, c1_new = h1, c1
        if t < T:
            # layer-0 step t (uses h1_{t-1}, c1_{t-1})
            gates0 = (g0[t * B:(t + 1) * B, :]
                      + jnp.dot(h1, whh0, preferred_element_type=jnp.float32))
            h1_new, c1_new = cell(gates0, c1)
            # residual-path accumulation of mean(x) rides in the slack
            xsum = xsum + x[t * B:(t + 1) * B, :]
        if t >= 1:
            # layer-1 step t-1 consumes the *pre-update* h1 (= h1_{t-1});
            # inter-layer dropout is identity in eval mode.
            gates1 = (jnp.dot(h1, wih1, preferred_element_type=jnp.float32)
                      + b1
                      + jnp.dot(h2, whh1, preferred_element_type=jnp.float32))
            h2, c2 = cell(gates1, c2)
            # attention score for step t-1 (MXU; off the recurrence's path)
            s = jnp.dot(h2, wattn, preferred_element_type=jnp.float32)  # (B,1)
            scores = jnp.where(lane_t == (t - 1), s, scores)
            # online softmax update
            m_new = jnp.maximum(m_run, s)
            alpha = jnp.exp(m_run - m_new)
            p = jnp.exp(s - m_new)
            l_run = alpha * l_run + p
            acc = alpha * acc + p * h2
            m_run = m_new
        h1, c1 = h1_new, c1_new

    # Finalize attention: weights (lane-dense (B,T)) and pooled context.
    inv_l = pl.reciprocal(l_run, approx=True)                 # EUP slot
    attnw_ref[...] = jnp.exp(scores - m_run) * inv_l          # (B, T)
    context = acc * inv_l                                     # (B, H)

    # Residual Linear(I -> H) on mean over time of x.
    residual = (jnp.dot(xsum * (1.0 / T), wres_ref[...],
                        preferred_element_type=jnp.float32) + bres_ref[...])
    context = context + residual

    # SiLU; dropout is identity in eval mode.
    context = context * jax.nn.sigmoid(context)
    logits_ref[...] = (jnp.dot(context, wfc_ref[...],
                               preferred_element_type=jnp.float32)
                       + bfc_ref[...])


# ---------------------------------------------------------------------------
# Wrapper
# ---------------------------------------------------------------------------
@jax.jit
def disease_lstm_attention_forward(x, kp):
    """x: (B, T, I) float32; kp: kernel-prepped params.
    Returns (logits (B, C), attn_weights (B, T, 1))."""
    B, T, I = x.shape
    C = kp["wfc"].shape[1]

    # Free layout plumbing in XLA: time-major flat x so the kernel needs no
    # in-kernel transpose/relayout before the hoisted layer-0 projection.
    x_tm = jnp.transpose(x, (1, 0, 2)).reshape(T * B, I)

    logits, attn_w = pl.pallas_call(
        fused_forward_kernel,
        out_shape=(jax.ShapeDtypeStruct((B, C), jnp.float32),
                   jax.ShapeDtypeStruct((B, T), jnp.float32)),
    )(x_tm, kp["wih0"], kp["whh0"], kp["b0"], kp["wih1"], kp["whh1"],
      kp["b1"], kp["wattn"], kp["wres"], kp["bres"], kp["wfc"], kp["bfc"])
    return logits, attn_w[..., None]    # (B, T, 1) to match PyTorch layout


# ---------------------------------------------------------------------------
# Host-side weight prep:
#   * reorder LSTM gate columns [i,f,g,o] -> [i,f,o,g],
#   * wattn as an (H,1) column for the MXU score matmul,
#   * drop battn (softmax over time is invariant to a per-score constant).
# ---------------------------------------------------------------------------
def _reorder_gates(w):
    H = w.shape[-1] // 4
    return jnp.concatenate(
        [w[..., :2 * H], w[..., 3 * H:], w[..., 2 * H:3 * H]], axis=-1)


def prepare_kernel_params(p):
    kp = {}
    for name in ("wih0", "whh0", "b0", "wih1", "whh1", "b1"):
        kp[name] = _reorder_gates(p[name])
    kp["wattn"] = jnp.transpose(p["wattn"])          # (H, 1)
    for name in ("wres", "bres", "wfc", "bfc"):
        kp[name] = p[name]
    return kp


# ---------------------------------------------------------------------------
# Pure-JAX reference (PyTorch semantics / layout) for correctness check.
# ---------------------------------------------------------------------------
def reference_forward(x, p):
    B, T, I = x.shape
    H = p["whh0"].shape[0]

    def run_layer(inp, wih, whh, b):
        def step(carry, x_t):
            h, c = carry
            g = x_t @ wih + h @ whh + b
            i = jax.nn.sigmoid(g[:, :H])
            f = jax.nn.sigmoid(g[:, H:2 * H])
            gg = jnp.tanh(g[:, 2 * H:3 * H])
            o = jax.nn.sigmoid(g[:, 3 * H:])
            c = f * c + i * gg
            h = o * jnp.tanh(c)
            return (h, c), h
        init = (jnp.zeros((B, H), jnp.float32), jnp.zeros((B, H), jnp.float32))
        _, hs = jax.lax.scan(step, init, jnp.swapaxes(inp, 0, 1))
        return jnp.swapaxes(hs, 0, 1)

    l1 = run_layer(x, p["wih0"], p["whh0"], p["b0"][0])
    rnn = run_layer(l1, p["wih1"], p["whh1"], p["b1"][0])
    scores = jnp.einsum("bth,h->bt", rnn, p["wattn"][0])[..., None] + p["battn"][0, 0]
    w = jax.nn.softmax(scores, axis=1)
    context = jnp.sum(w * rnn, axis=1)
    context = context + x.mean(axis=1) @ p["wres"] + p["bres"][0]
    context = context * jax.nn.sigmoid(context)
    logits = context @ p["wfc"] + p["bfc"][0]
    return logits, w


def init_params(key, input_size, hidden_size, num_classes):
    H, I, C = hidden_size, input_size, num_classes
    k = 1.0 / np.sqrt(H)
    keys = jax.random.split(key, 16)
    u = lambda kk, shape: jax.random.uniform(kk, shape, jnp.float32, -k, k)
    return {
        # LSTM layer 0 (weights pre-transposed; biases b_ih + b_hh combined)
        "wih0": u(keys[0], (I, 4 * H)),
        "whh0": u(keys[1], (H, 4 * H)),
        "b0":   u(keys[2], (1, 4 * H)) + u(keys[3], (1, 4 * H)),
        # LSTM layer 1
        "wih1": u(keys[4], (H, 4 * H)),
        "whh1": u(keys[5], (H, 4 * H)),
        "b1":   u(keys[6], (1, 4 * H)) + u(keys[7], (1, 4 * H)),
        # attention Linear(H -> 1)
        "wattn": u(keys[8], (1, H)),
        "battn": u(keys[9], (1, 1)),
        # residual Linear(I -> H)
        "wres": u(keys[10], (I, H)),
        "bres": u(keys[11], (1, H)),
        # fc Linear(H -> C)
        "wfc": u(keys[12], (H, C)),
        "bfc": u(keys[13], (1, C)),
    }


if __name__ == "__main__":
    B, T, I, H, C = 2, 8, 16, 32, 2
    key = jax.random.PRNGKey(0)
    kx, kparam = jax.random.split(key)
    x = jax.random.normal(kx, (B, T, I), jnp.float32)
    params = init_params(kparam, I, H, C)
    kernel_params = prepare_kernel_params(params)

    logits, attn_w = disease_lstm_attention_forward(x, kernel_params)
    logits = jax.block_until_ready(logits)
    attn_w = jax.block_until_ready(attn_w)

    ref_logits, ref_w = reference_forward(x, params)
    assert logits.shape == (B, C) and attn_w.shape == (B, T, 1)
    # Tolerances relaxed slightly vs 1e-4 because the softmax denominator uses
    # the EUP approximate reciprocal (pl.reciprocal(approx=True)).
    assert np.allclose(np.asarray(logits), np.asarray(ref_logits),
                       atol=5e-3, rtol=5e-3)
    assert np.allclose(np.asarray(attn_w), np.asarray(ref_w),
                       atol=2e-3, rtol=2e-3)

    print("KERNEL_OK")
</pallas_src>

<mosaic_0001>
module attributes {stable_mosaic.version = 11 : i64} {
  func.func @fused_forward_kernel(%arg0: memref<16x16xf32, #tpu.memory_space<vmem>>, %arg1: memref<16x128xf32, #tpu.memory_space<vmem>>, %arg2: memref<32x128xf32, #tpu.memory_space<vmem>>, %arg3: memref<1x128xf32, #tpu.memory_space<vmem>>, %arg4: memref<32x128xf32, #tpu.memory_space<vmem>>, %arg5: memref<32x128xf32, #tpu.memory_space<vmem>>, %arg6: memref<1x128xf32, #tpu.memory_space<vmem>>, %arg7: memref<32x1xf32, #tpu.memory_space<vmem>>, %arg8: memref<16x32xf32, #tpu.memory_space<vmem>>, %arg9: memref<1x32xf32, #tpu.memory_space<vmem>>, %arg10: memref<32x2xf32, #tpu.memory_space<vmem>>, %arg11: memref<1x2xf32, #tpu.memory_space<vmem>>, %arg12: memref<2x2xf32, #tpu.memory_space<vmem>>, %arg13: memref<2x8xf32, #tpu.memory_space<vmem>>) attributes {dimension_semantics = [], scalar_prefetch = 0 : i64, scratch_operands = 0 : i64, tpu.core_type = #tpu.core_type<tc>} {
    %c0 = arith.constant 0 : index
    %c0_0 = arith.constant 0 : index
    %0 = vector.load %arg0[%c0, %c0_0] : memref<16x16xf32, #tpu.memory_space<vmem>>, vector<16x16xf32>
    %c0_1 = arith.constant 0 : index
    %c0_2 = arith.constant 0 : index
    %1 = vector.load %arg2[%c0_1, %c0_2] : memref<32x128xf32, #tpu.memory_space<vmem>>, vector<32x128xf32>
    %c0_3 = arith.constant 0 : index
    %c0_4 = arith.constant 0 : index
    %2 = vector.load %arg4[%c0_3, %c0_4] : memref<32x128xf32, #tpu.memory_space<vmem>>, vector<32x128xf32>
    %c0_5 = arith.constant 0 : index
    %c0_6 = arith.constant 0 : index
    %3 = vector.load %arg5[%c0_5, %c0_6] : memref<32x128xf32, #tpu.memory_space<vmem>>, vector<32x128xf32>
    %c0_7 = arith.constant 0 : index
    %c0_8 = arith.constant 0 : index
    %4 = vector.load %arg6[%c0_7, %c0_8] : memref<1x128xf32, #tpu.memory_space<vmem>>, vector<1x128xf32>
    %c0_9 = arith.constant 0 : index
    %c0_10 = arith.constant 0 : index
    %5 = vector.load %arg7[%c0_9, %c0_10] : memref<32x1xf32, #tpu.memory_space<vmem>>, vector<32x1xf32>
    %c0_11 = arith.constant 0 : index
    %c0_12 = arith.constant 0 : index
    %6 = vector.load %arg1[%c0_11, %c0_12] : memref<16x128xf32, #tpu.memory_space<vmem>>, vector<16x128xf32>
    %cst = arith.constant dense<0.000000e+00> : vector<16x128xf32>
    %7 = tpu.matmul %0, %6, %cst {dimension_numbers = #tpu.dot_dimension_numbers<[1], [0], [0], [1], [0, 0, 1, 1], [], []>} : vector<16x16xf32>, vector<16x128xf32>, vector<16x128xf32> -> vector<16x128xf32>
    %c0_13 = arith.constant 0 : index
    %c0_14 = arith.constant 0 : index
    %8 = vector.load %arg3[%c0_13, %c0_14] : memref<1x128xf32, #tpu.memory_space<vmem>>, vector<1x128xf32>
    %9 = vector.broadcast %8 : vector<1x128xf32> to vector<16x128xf32>
    %10 = arith.addf %7, %9 : vector<16x128xf32>
    %cst_15 = arith.constant 0.000000e+00 : f32
    %11 = vector.broadcast %cst_15 : f32 to vector<2x32xf32>
    %cst_16 = arith.constant 0.000000e+00 : f32
    %12 = vector.broadcast %cst_16 : f32 to vector<2x16xf32>
    %cst_17 = arith.constant -1.000000e+30 : f32
    %13 = vector.broadcast %cst_17 : f32 to vector<2x1xf32>
    %cst_18 = arith.constant 0.000000e+00 : f32
    %14 = vector.broadcast %cst_18 : f32 to vector<2x1xf32>
    %cst_19 = arith.constant 0.000000e+00 : f32
    %15 = vector.broadcast %cst_19 : f32 to vector<2x32xf32>
    %cst_20 = arith.constant 0.000000e+00 : f32
    %16 = vector.broadcast %cst_20 : f32 to vector<2x8xf32>
    %17 = tpu.iota {dimensions = array<i32: 1>} : vector<2x8xi32>
    %18 = vector.extract_strided_slice %10 {offsets = [0, 0], sizes = [2, 128], strides = [1, 1]} : vector<16x128xf32> to vector<2x128xf32>
    %cst_21 = arith.constant dense<0.000000e+00> : vector<2x128xf32>
    %19 = tpu.matmul %11, %1, %cst_21 {dimension_numbers = #tpu.dot_dimension_numbers<[1], [0], [0], [1], [0, 0, 1, 1], [], []>} : vector<2x32xf32>, vector<32x128xf32>, vector<2x128xf32> -> vector<2x128xf32>
    %20 = arith.addf %18, %19 : vector<2x128xf32>
    %21 = vector.extract_strided_slice %20 {offsets = [0, 0], sizes = [2, 96], strides = [1, 1]} : vector<2x128xf32> to vector<2x96xf32>
    %22 = arith.negf %21 : vector<2x96xf32>
    %23 = math.exp %22 : vector<2x96xf32>
    %cst_22 = arith.constant 1.000000e+00 : f32
    %24 = vector.broadcast %cst_22 : f32 to vector<2x96xf32>
    %25 = arith.addf %24, %23 : vector<2x96xf32>
    %26 = arith.divf %24, %25 : vector<2x96xf32>
    %27 = vector.extract_strided_slice %20 {offsets = [0, 96], sizes = [2, 32], strides = [1, 1]} : vector<2x128xf32> to vector<2x32xf32>
    %28 = math.tanh %27 : vector<2x32xf32>
    %29 = vector.extract_strided_slice %26 {offsets = [0, 32], sizes = [2, 32], strides = [1, 1]} : vector<2x96xf32> to vector<2x32xf32>
    %30 = arith.mulf %29, %11 : vector<2x32xf32>
    %31 = vector.extract_strided_slice %26 {offsets = [0, 0], sizes = [2, 32], strides = [1, 1]} : vector<2x96xf32> to vector<2x32xf32>
    %32 = arith.mulf %31, %28 : vector<2x32xf32>
    %33 = arith.addf %30, %32 : vector<2x32xf32>
    %34 = vector.extract_strided_slice %26 {offsets = [0, 64], sizes = [2, 32], strides = [1, 1]} : vector<2x96xf32> to vector<2x32xf32>
    %35 = math.tanh %33 : vector<2x32xf32>
    %36 = arith.mulf %34, %35 : vector<2x32xf32>
    %37 = vector.extract_strided_slice %0 {offsets = [0, 0], sizes = [2, 16], strides = [1, 1]} : vector<16x16xf32> to vector<2x16xf32>
    %38 = arith.addf %12, %37 : vector<2x16xf32>
    %39 = vector.extract_strided_slice %10 {offsets = [2, 0], sizes = [2, 128], strides = [1, 1]} : vector<16x128xf32> to vector<2x128xf32>
    %cst_23 = arith.constant dense<0.000000e+00> : vector<2x128xf32>
    %40 = tpu.matmul %36, %1, %cst_23 {dimension_numbers = #tpu.dot_dimension_numbers<[1], [0], [0], [1], [0, 0, 1, 1], [], []>} : vector<2x32xf32>, vector<32x128xf32>, vector<2x128xf32> -> vector<2x128xf32>
    %41 = arith.addf %39, %40 : vector<2x128xf32>
    %42 = vector.extract_strided_slice %41 {offsets = [0, 0], sizes = [2, 96], strides = [1, 1]} : vector<2x128xf32> to vector<2x96xf32>
    %43 = arith.negf %42 : vector<2x96xf32>
    %44 = math.exp %43 : vector<2x96xf32>
    %cst_24 = arith.constant 1.000000e+00 : f32
    %45 = vector.broadcast %cst_24 : f32 to vector<2x96xf32>
    %46 = arith.addf %45, %44 : vector<2x96xf32>
    %47 = arith.divf %45, %46 : vector<2x96xf32>
    %48 = vector.extract_strided_slice %41 {offsets = [0, 96], sizes = [2, 32], strides = [1, 1]} : vector<2x128xf32> to vector<2x32xf32>
    %49 = math.tanh %48 : vector<2x32xf32>
    %50 = vector.extract_strided_slice %47 {offsets = [0, 32], sizes = [2, 32], strides = [1, 1]} : vector<2x96xf32> to vector<2x32xf32>
    %51 = arith.mulf %50, %33 : vector<2x32xf32>
    %52 = vector.extract_strided_slice %47 {offsets = [0, 0], sizes = [2, 32], strides = [1, 1]} : vector<2x96xf32> to vector<2x32xf32>
    %53 = arith.mulf %52, %49 : vector<2x32xf32>
    %54 = arith.addf %51, %53 : vector<2x32xf32>
    %55 = vector.extract_strided_slice %47 {offsets = [0, 64], sizes = [2, 32], strides = [1, 1]} : vector<2x96xf32> to vector<2x32xf32>
    %56 = math.tanh %54 : vector<2x32xf32>
    %57 = arith.mulf %55, %56 : vector<2x32xf32>
    %58 = vector.extract_strided_slice %0 {offsets = [2, 0], sizes = [2, 16], strides = [1, 1]} : vector<16x16xf32> to vector<2x16xf32>
    %59 = arith.addf %38, %58 : vector<2x16xf32>
    %cst_25 = arith.constant dense<0.000000e+00> : vector<2x128xf32>
    %60 = tpu.matmul %36, %2, %cst_25 {dimension_numbers = #tpu.dot_dimension_numbers<[1], [0], [0], [1], [0, 0, 1, 1], [], []>} : vector<2x32xf32>, vector<32x128xf32>, vector<2x128xf32> -> vector<2x128xf32>
    %61 = vector.broadcast %4 : vector<1x128xf32> to vector<2x128xf32>
    %62 = arith.addf %60, %61 : vector<2x128xf32>
    %cst_26 = arith.constant dense<0.000000e+00> : vector<2x128xf32>
    %63 = tpu.matmul %11, %3, %cst_26 {dimension_numbers = #tpu.dot_dimension_numbers<[1], [0], [0], [1], [0, 0, 1, 1], [], []>} : vector<2x32xf32>, vector<32x128xf32>, vector<2x128xf32> -> vector<2x128xf32>
    %64 = arith.addf %62, %63 : vector<2x128xf32>
    %65 = vector.extract_strided_slice %64 {offsets = [0, 0], sizes = [2, 96], strides = [1, 1]} : vector<2x128xf32> to vector<2x96xf32>
    %66 = arith.negf %65 : vector<2x96xf32>
    %67 = math.exp %66 : vector<2x96xf32>
    %cst_27 = arith.constant 1.000000e+00 : f32
    %68 = vector.broadcast %cst_27 : f32 to vector<2x96xf32>
    %69 = arith.addf %68, %67 : vector<2x96xf32>
    %70 = arith.divf %68, %69 : vector<2x96xf32>
    %71 = vector.extract_strided_slice %64 {offsets = [0, 96], sizes = [2, 32], strides = [1, 1]} : vector<2x128xf32> to vector<2x32xf32>
    %72 = math.tanh %71 : vector<2x32xf32>
    %73 = vector.extract_strided_slice %70 {offsets = [0, 32], sizes = [2, 32], strides = [1, 1]} : vector<2x96xf32> to vector<2x32xf32>
    %74 = arith.mulf %73, %11 : vector<2x32xf32>
    %75 = vector.extract_strided_slice %70 {offsets = [0, 0], sizes = [2, 32], strides = [1, 1]} : vector<2x96xf32> to vector<2x32xf32>
    %76 = arith.mulf %75, %72 : vector<2x32xf32>
    %77 = arith.addf %74, %76 : vector<2x32xf32>
    %78 = vector.extract_strided_slice %70 {offsets = [0, 64], sizes = [2, 32], strides = [1, 1]} : vector<2x96xf32> to vector<2x32xf32>
    %79 = math.tanh %77 : vector<2x32xf32>
    %80 = arith.mulf %78, %79 : vector<2x32xf32>
    %cst_28 = arith.constant dense<0.000000e+00> : vector<2x1xf32>
    %81 = tpu.matmul %80, %5, %cst_28 {dimension_numbers = #tpu.dot_dimension_numbers<[1], [0], [0], [1], [0, 0, 1, 1], [], []>} : vector<2x32xf32>, vector<32x1xf32>, vector<2x1xf32> -> vector<2x1xf32>
    %c0_i32 = arith.constant 0 : i32
    %82 = vector.broadcast %c0_i32 : i32 to vector<2x8xi32>
    %83 = arith.cmpi eq, %17, %82 : vector<2x8xi32>
    %84 = vector.shape_cast %81 : vector<2x1xf32> to vector<2x1xf32>
    %85 = vector.broadcast %84 : vector<2x1xf32> to vector<2x8xf32>
    %86 = arith.select %83, %85, %16 : vector<2x8xi1>, vector<2x8xf32>
    %87 = arith.maximumf %13, %81 : vector<2x1xf32>
    %88 = arith.subf %13, %87 : vector<2x1xf32>
    %89 = math.exp %88 : vector<2x1xf32>
    %90 = arith.subf %81, %87 : vector<2x1xf32>
    %91 = math.exp %90 : vector<2x1xf32>
    %92 = arith.mulf %89, %14 : vector<2x1xf32>
    %93 = arith.addf %92, %91 : vector<2x1xf32>
    %94 = vector.broadcast %89 : vector<2x1xf32> to vector<2x32xf32>
    %95 = arith.mulf %94, %15 : vector<2x32xf32>
    %96 = vector.broadcast %91 : vector<2x1xf32> to vector<2x32xf32>
    %97 = arith.mulf %96, %80 : vector<2x32xf32>
    %98 = arith.addf %95, %97 : vector<2x32xf32>
    %99 = vector.extract_strided_slice %10 {offsets = [4, 0], sizes = [2, 128], strides = [1, 1]} : vector<16x128xf32> to vector<2x128xf32>
    %cst_29 = arith.constant dense<0.000000e+00> : vector<2x128xf32>
    %100 = tpu.matmul %57, %1, %cst_29 {dimension_numbers = #tpu.dot_dimension_numbers<[1], [0], [0], [1], [0, 0, 1, 1], [], []>} : vector<2x32xf32>, vector<32x128xf32>, vector<2x128xf32> -> vector<2x128xf32>
    %101 = arith.addf %99, %100 : vector<2x128xf32>
    %102 = vector.extract_strided_slice %101 {offsets = [0, 0], sizes = [2, 96], strides = [1, 1]} : vector<2x128xf32> to vector<2x96xf32>
    %103 = arith.negf %102 : vector<2x96xf32>
    %104 = math.exp %103 : vector<2x96xf32>
    %cst_30 = arith.constant 1.000000e+00 : f32
    %105 = vector.broadcast %cst_30 : f32 to vector<2x96xf32>
    %106 = arith.addf %105, %104 : vector<2x96xf32>
    %107 = arith.divf %105, %106 : vector<2x96xf32>
    %108 = vector.extract_strided_slice %101 {offsets = [0, 96], sizes = [2, 32], strides = [1, 1]} : vector<2x128xf32> to vector<2x32xf32>
    %109 = math.tanh %108 : vector<2x32xf32>
    %110 = vector.extract_strided_slice %107 {offsets = [0, 32], sizes = [2, 32], strides = [1, 1]} : vector<2x96xf32> to vector<2x32xf32>
    %111 = arith.mulf %110, %54 : vector<2x32xf32>
    %112 = vector.extract_strided_slice %107 {offsets = [0, 0], sizes = [2, 32], strides = [1, 1]} : vector<2x96xf32> to vector<2x32xf32>
    %113 = arith.mulf %112, %109 : vector<2x32xf32>
    %114 = arith.addf %111, %113 : vector<2x32xf32>
    %115 = vector.extract_strided_slice %107 {offsets = [0, 64], sizes = [2, 32], strides = [1, 1]} : vector<2x96xf32> to vector<2x32xf32>
    %116 = math.tanh %114 : vector<2x32xf32>
    %117 = arith.mulf %115, %116 : vector<2x32xf32>
    %118 = vector.extract_strided_slice %0 {offsets = [4, 0], sizes = [2, 16], strides = [1, 1]} : vector<16x16xf32> to vector<2x16xf32>
    %119 = arith.addf %59, %118 : vector<2x16xf32>
    %cst_31 = arith.constant dense<0.000000e+00> : vector<2x128xf32>
    %120 = tpu.matmul %57, %2, %cst_31 {dimension_numbers = #tpu.dot_dimension_numbers<[1], [0], [0], [1], [0, 0, 1, 1], [], []>} : vector<2x32xf32>, vector<32x128xf32>, vector<2x128xf32> -> vector<2x128xf32>
    %121 = vector.broadcast %4 : vector<1x128xf32> to vector<2x128xf32>
    %122 = arith.addf %120, %121 : vector<2x128xf32>
    %cst_32 = arith.constant dense<0.000000e+00> : vector<2x128xf32>
    %123 = tpu.matmul %80, %3, %cst_32 {dimension_numbers = #tpu.dot_dimension_numbers<[1], [0], [0], [1], [0, 0, 1, 1], [], []>} : vector<2x32xf32>, vector<32x128xf32>, vector<2x128xf32> -> vector<2x128xf32>
    %124 = arith.addf %122, %123 : vector<2x128xf32>
    %125 = vector.extract_strided_slice %124 {offsets = [0, 0], sizes = [2, 96], strides = [1, 1]} : vector<2x128xf32> to vector<2x96xf32>
    %126 = arith.negf %125 : vector<2x96xf32>
    %127 = math.exp %126 : vector<2x96xf32>
    %cst_33 = arith.constant 1.000000e+00 : f32
    %128 = vector.broadcast %cst_33 : f32 to vector<2x96xf32>
    %129 = arith.addf %128, %127 : vector<2x96xf32>
    %130 = arith.divf %128, %129 : vector<2x96xf32>
    %131 = vector.extract_strided_slice %124 {offsets = [0, 96], sizes = [2, 32], strides = [1, 1]} : vector<2x128xf32> to vector<2x32xf32>
    %132 = math.tanh %131 : vector<2x32xf32>
    %133 = vector.extract_strided_slice %130 {offsets = [0, 32], sizes = [2, 32], strides = [1, 1]} : vector<2x96xf32> to vector<2x32xf32>
    %134 = arith.mulf %133, %77 : vector<2x32xf32>
    %135 = vector.extract_strided_slice %130 {offsets = [0, 0], sizes = [2, 32], strides = [1, 1]} : vector<2x96xf32> to vector<2x32xf32>
    %136 = arith.mulf %135, %132 : vector<2x32xf32>
    %137 = arith.addf %134, %136 : vector<2x32xf32>
    %138 = vector.extract_strided_slice %130 {offsets = [0, 64], sizes = [2, 32], strides = [1, 1]} : vector<2x96xf32> to vector<2x32xf32>
    %139 = math.tanh %137 : vector<2x32xf32>
    %140 = arith.mulf %138, %139 : vector<2x32xf32>
    %cst_34 = arith.constant dense<0.000000e+00> : vector<2x1xf32>
    %141 = tpu.matmul %140, %5, %cst_34 {dimension_numbers = #tpu.dot_dimension_numbers<[1], [0], [0], [1], [0, 0, 1, 1], [], []>} : vector<2x32xf32>, vector<32x1xf32>, vector<2x1xf32> -> vector<2x1xf32>
    %c1_i32 = arith.constant 1 : i32
    %142 = vector.broadcast %c1_i32 : i32 to vector<2x8xi32>
    %143 = arith.cmpi eq, %17, %142 : vector<2x8xi32>
    %144 = vector.shape_cast %141 : vector<2x1xf32> to vector<2x1xf32>
    %145 = vector.broadcast %144 : vector<2x1xf32> to vector<2x8xf32>
    %146 = arith.select %143, %145, %86 : vector<2x8xi1>, vector<2x8xf32>
    %147 = arith.maximumf %87, %141 : vector<2x1xf32>
    %148 = arith.subf %87, %147 : vector<2x1xf32>
    %149 = math.exp %148 : vector<2x1xf32>
    %150 = arith.subf %141, %147 : vector<2x1xf32>
    %151 = math.exp %150 : vector<2x1xf32>
    %152 = arith.mulf %149, %93 : vector<2x1xf32>
    %153 = arith.addf %152, %151 : vector<2x1xf32>
    %154 = vector.broadcast %149 : vector<2x1xf32> to vector<2x32xf32>
    %155 = arith.mulf %154, %98 : vector<2x32xf32>
    %156 = vector.broadcast %151 : vector<2x1xf32> to vector<2x32xf32>
    %157 = arith.mulf %156, %140 : vector<2x32xf32>
    %158 = arith.addf %155, %157 : vector<2x32xf32>
    %159 = vector.extract_strided_slice %10 {offsets = [6, 0], sizes = [2, 128], strides = [1, 1]} : vector<16x128xf32> to vector<2x128xf32>
    %cst_35 = arith.constant dense<0.000000e+00> : vector<2x128xf32>
    %160 = tpu.matmul %117, %1, %cst_35 {dimension_numbers = #tpu.dot_dimension_numbers<[1], [0], [0], [1], [0, 0, 1, 1], [], []>} : vector<2x32xf32>, vector<32x128xf32>, vector<2x128xf32> -> vector<2x128xf32>
    %161 = arith.addf %159, %160 : vector<2x128xf32>
    %162 = vector.extract_strided_slice %161 {offsets = [0, 0], sizes = [2, 96], strides = [1, 1]} : vector<2x128xf32> to vector<2x96xf32>
    %163 = arith.negf %162 : vector<2x96xf32>
    %164 = math.exp %163 : vector<2x96xf32>
    %cst_36 = arith.constant 1.000000e+00 : f32
    %165 = vector.broadcast %cst_36 : f32 to vector<2x96xf32>
    %166 = arith.addf %165, %164 : vector<2x96xf32>
    %167 = arith.divf %165, %166 : vector<2x96xf32>
    %168 = vector.extract_strided_slice %161 {offsets = [0, 96], sizes = [2, 32], strides = [1, 1]} : vector<2x128xf32> to vector<2x32xf32>
    %169 = math.tanh %168 : vector<2x32xf32>
    %170 = vector.extract_strided_slice %167 {offsets = [0, 32], sizes = [2, 32], strides = [1, 1]} : vector<2x96xf32> to vector<2x32xf32>
    %171 = arith.mulf %170, %114 : vector<2x32xf32>
    %172 = vector.extract_strided_slice %167 {offsets = [0, 0], sizes = [2, 32], strides = [1, 1]} : vector<2x96xf32> to vector<2x32xf32>
    %173 = arith.mulf %172, %169 : vector<2x32xf32>
    %174 = arith.addf %171, %173 : vector<2x32xf32>
    %175 = vector.extract_strided_slice %167 {offsets = [0, 64], sizes = [2, 32], strides = [1, 1]} : vector<2x96xf32> to vector<2x32xf32>
    %176 = math.tanh %174 : vector<2x32xf32>
    %177 = arith.mulf %175, %176 : vector<2x32xf32>
    %178 = vector.extract_strided_slice %0 {offsets = [6, 0], sizes = [2, 16], strides = [1, 1]} : vector<16x16xf32> to vector<2x16xf32>
    %179 = arith.addf %119, %178 : vector<2x16xf32>
    %cst_37 = arith.constant dense<0.000000e+00> : vector<2x128xf32>
    %180 = tpu.matmul %117, %2, %cst_37 {dimension_numbers = #tpu.dot_dimension_numbers<[1], [0], [0], [1], [0, 0, 1, 1], [], []>} : vector<2x32xf32>, vector<32x128xf32>, vector<2x128xf32> -> vector<2x128xf32>
    %181 = vector.broadcast %4 : vector<1x128xf32> to vector<2x128xf32>
    %182 = arith.addf %180, %181 : vector<2x128xf32>
    %cst_38 = arith.constant dense<0.000000e+00> : vector<2x128xf32>
    %183 = tpu.matmul %140, %3, %cst_38 {dimension_numbers = #tpu.dot_dimension_numbers<[1], [0], [0], [1], [0, 0, 1, 1], [], []>} : vector<2x32xf32>, vector<32x128xf32>, vector<2x128xf32> -> vector<2x128xf32>
    %184 = arith.addf %182, %183 : vector<2x128xf32>
    %185 = vector.extract_strided_slice %184 {offsets = [0, 0], sizes = [2, 96], strides = [1, 1]} : vector<2x128xf32> to vector<2x96xf32>
    %186 = arith.negf %185 : vector<2x96xf32>
    %187 = math.exp %186 : vector<2x96xf32>
    %cst_39 = arith.constant 1.000000e+00 : f32
    %188 = vector.broadcast %cst_39 : f32 to vector<2x96xf32>
    %189 = arith.addf %188, %187 : vector<2x96xf32>
    %190 = arith.divf %188, %189 : vector<2x96xf32>
    %191 = vector.extract_strided_slice %184 {offsets = [0, 96], sizes = [2, 32], strides = [1, 1]} : vector<2x128xf32> to vector<2x32xf32>
    %192 = math.tanh %191 : vector<2x32xf32>
    %193 = vector.extract_strided_slice %190 {offsets = [0, 32], sizes = [2, 32], strides = [1, 1]} : vector<2x96xf32> to vector<2x32xf32>
    %194 = arith.mulf %193, %137 : vector<2x32xf32>
    %195 = vector.extract_strided_slice %190 {offsets = [0, 0], sizes = [2, 32], strides = [1, 1]} : vector<2x96xf32> to vector<2x32xf32>
    %196 = arith.mulf %195, %192 : vector<2x32xf32>
    %197 = arith.addf %194, %196 : vector<2x32xf32>
    %198 = vector.extract_strided_slice %190 {offsets = [0, 64], sizes = [2, 32], strides = [1, 1]} : vector<2x96xf32> to vector<2x32xf32>
    %199 = math.tanh %197 : vector<2x32xf32>
    %200 = arith.mulf %198, %199 : vector<2x32xf32>
    %cst_40 = arith.constant dense<0.000000e+00> : vector<2x1xf32>
    %201 = tpu.matmul %200, %5, %cst_40 {dimension_numbers = #tpu.dot_dimension_numbers<[1], [0], [0], [1], [0, 0, 1, 1], [], []>} : vector<2x32xf32>, vector<32x1xf32>, vector<2x1xf32> -> vector<2x1xf32>
    %c2_i32 = arith.constant 2 : i32
    %202 = vector.broadcast %c2_i32 : i32 to vector<2x8xi32>
    %203 = arith.cmpi eq, %17, %202 : vector<2x8xi32>
    %204 = vector.shape_cast %201 : vector<2x1xf32> to vector<2x1xf32>
    %205 = vector.broadcast %204 : vector<2x1xf32> to vector<2x8xf32>
    %206 = arith.select %203, %205, %146 : vector<2x8xi1>, vector<2x8xf32>
    %207 = arith.maximumf %147, %201 : vector<2x1xf32>
    %208 = arith.subf %147, %207 : vector<2x1xf32>
    %209 = math.exp %208 : vector<2x1xf32>
    %210 = arith.subf %201, %207 : vector<2x1xf32>
    %211 = math.exp %210 : vector<2x1xf32>
    %212 = arith.mulf %209, %153 : vector<2x1xf32>
    %213 = arith.addf %212, %211 : vector<2x1xf32>
    %214 = vector.broadcast %209 : vector<2x1xf32> to vector<2x32xf32>
    %215 = arith.mulf %214, %158 : vector<2x32xf32>
    %216 = vector.broadcast %211 : vector<2x1xf32> to vector<2x32xf32>
    %217 = arith.mulf %216, %200 : vector<2x32xf32>
    %218 = arith.addf %215, %217 : vector<2x32xf32>
    %219 = vector.extract_strided_slice %10 {offsets = [8, 0], sizes = [2, 128], strides = [1, 1]} : vector<16x128xf32> to vector<2x128xf32>
    %cst_41 = arith.constant dense<0.000000e+00> : vector<2x128xf32>
    %220 = tpu.matmul %177, %1, %cst_41 {dimension_numbers = #tpu.dot_dimension_numbers<[1], [0], [0], [1], [0, 0, 1, 1], [], []>} : vector<2x32xf32>, vector<32x128xf32>, vector<2x128xf32> -> vector<2x128xf32>
    %221 = arith.addf %219, %220 : vector<2x128xf32>
    %222 = vector.extract_strided_slice %221 {offsets = [0, 0], sizes = [2, 96], strides = [1, 1]} : vector<2x128xf32> to vector<2x96xf32>
    %223 = arith.negf %222 : vector<2x96xf32>
    %224 = math.exp %223 : vector<2x96xf32>
    %cst_42 = arith.constant 1.000000e+00 : f32
    %225 = vector.broadcast %cst_42 : f32 to vector<2x96xf32>
    %226 = arith.addf %225, %224 : vector<2x96xf32>
    %227 = arith.divf %225, %226 : vector<2x96xf32>
    %228 = vector.extract_strided_slice %221 {offsets = [0, 96], sizes = [2, 32], strides = [1, 1]} : vector<2x128xf32> to vector<2x32xf32>
    %229 = math.tanh %228 : vector<2x32xf32>
    %230 = vector.extract_strided_slice %227 {offsets = [0, 32], sizes = [2, 32], strides = [1, 1]} : vector<2x96xf32> to vector<2x32xf32>
    %231 = arith.mulf %230, %174 : vector<2x32xf32>
    %232 = vector.extract_strided_slice %227 {offsets = [0, 0], sizes = [2, 32], strides = [1, 1]} : vector<2x96xf32> to vector<2x32xf32>
    %233 = arith.mulf %232, %229 : vector<2x32xf32>
    %234 = arith.addf %231, %233 : vector<2x32xf32>
    %235 = vector.extract_strided_slice %227 {offsets = [0, 64], sizes = [2, 32], strides = [1, 1]} : vector<2x96xf32> to vector<2x32xf32>
    %236 = math.tanh %234 : vector<2x32xf32>
    %237 = arith.mulf %235, %236 : vector<2x32xf32>
    %238 = vector.extract_strided_slice %0 {offsets = [8, 0], sizes = [2, 16], strides = [1, 1]} : vector<16x16xf32> to vector<2x16xf32>
    %239 = arith.addf %179, %238 : vector<2x16xf32>
    %cst_43 = arith.constant dense<0.000000e+00> : vector<2x128xf32>
    %240 = tpu.matmul %177, %2, %cst_43 {dimension_numbers = #tpu.dot_dimension_numbers<[1], [0], [0], [1], [0, 0, 1, 1], [], []>} : vector<2x32xf32>, vector<32x128xf32>, vector<2x128xf32> -> vector<2x128xf32>
    %241 = vector.broadcast %4 : vector<1x128xf32> to vector<2x128xf32>
    %242 = arith.addf %240, %241 : vector<2x128xf32>
    %cst_44 = arith.constant dense<0.000000e+00> : vector<2x128xf32>
    %243 = tpu.matmul %200, %3, %cst_44 {dimension_numbers = #tpu.dot_dimension_numbers<[1], [0], [0], [1], [0, 0, 1, 1], [], []>} : vector<2x32xf32>, vector<32x128xf32>, vector<2x128xf32> -> vector<2x128xf32>
    %244 = arith.addf %242, %243 : vector<2x128xf32>
    %245 = vector.extract_strided_slice %244 {offsets = [0, 0], sizes = [2, 96], strides = [1, 1]} : vector<2x128xf32> to vector<2x96xf32>
    %246 = arith.negf %245 : vector<2x96xf32>
    %247 = math.exp %246 : vector<2x96xf32>
    %cst_45 = arith.constant 1.000000e+00 : f32
    %248 = vector.broadcast %cst_45 : f32 to vector<2x96xf32>
    %249 = arith.addf %248, %247 : vector<2x96xf32>
    %250 = arith.divf %248, %249 : vector<2x96xf32>
    %251 = vector.extract_strided_slice %244 {offsets = [0, 96], sizes = [2, 32], strides = [1, 1]} : vector<2x128xf32> to vector<2x32xf32>
    %252 = math.tanh %251 : vector<2x32xf32>
    %253 = vector.extract_strided_slice %250 {offsets = [0, 32], sizes = [2, 32], strides = [1, 1]} : vector<2x96xf32> to vector<2x32xf32>
    %254 = arith.mulf %253, %197 : vector<2x32xf32>
    %255 = vector.extract_strided_slice %250 {offsets = [0, 0], sizes = [2, 32], strides = [1, 1]} : vector<2x96xf32> to vector<2x32xf32>
    %256 = arith.mulf %255, %252 : vector<2x32xf32>
    %257 = arith.addf %254, %256 : vector<2x32xf32>
    %258 = vector.extract_strided_slice %250 {offsets = [0, 64], sizes = [2, 32], strides = [1, 1]} : vector<2x96xf32> to vector<2x32xf32>
    %259 = math.tanh %257 : vector<2x32xf32>
    %260 = arith.mulf %258, %259 : vector<2x32xf32>
    %cst_46 = arith.constant dense<0.000000e+00> : vector<2x1xf32>
    %261 = tpu.matmul %260, %5, %cst_46 {dimension_numbers = #tpu.dot_dimension_numbers<[1], [0], [0], [1], [0, 0, 1, 1], [], []>} : vector<2x32xf32>, vector<32x1xf32>, vector<2x1xf32> -> vector<2x1xf32>
    %c3_i32 = arith.constant 3 : i32
    %262 = vector.broadcast %c3_i32 : i32 to vector<2x8xi32>
    %263 = arith.cmpi eq, %17, %262 : vector<2x8xi32>
    %264 = vector.shape_cast %261 : vector<2x1xf32> to vector<2x1xf32>
    %265 = vector.broadcast %264 : vector<2x1xf32> to vector<2x8xf32>
    %266 = arith.select %263, %265, %206 : vector<2x8xi1>, vector<2x8xf32>
    %267 = arith.maximumf %207, %261 : vector<2x1xf32>
    %268 = arith.subf %207, %267 : vector<2x1xf32>
    %269 = math.exp %268 : vector<2x1xf32>
    %270 = arith.subf %261, %267 : vector<2x1xf32>
    %271 = math.exp %270 : vector<2x1xf32>
    %272 = arith.mulf %269, %213 : vector<2x1xf32>
    %273 = arith.addf %272, %271 : vector<2x1xf32>
    %274 = vector.broadcast %269 : vector<2x1xf32> to vector<2x32xf32>
    %275 = arith.mulf %274, %218 : vector<2x32xf32>
    %276 = vector.broadcast %271 : vector<2x1xf32> to vector<2x32xf32>
    %277 = arith.mulf %276, %260 : vector<2x32xf32>
    %278 = arith.addf %275, %277 : vector<2x32xf32>
    %279 = vector.extract_strided_slice %10 {offsets = [10, 0], sizes = [2, 128], strides = [1, 1]} : vector<16x128xf32> to vector<2x128xf32>
    %cst_47 = arith.constant dense<0.000000e+00> : vector<2x128xf32>
    %280 = tpu.matmul %237, %1, %cst_47 {dimension_numbers = #tpu.dot_dimension_numbers<[1], [0], [0], [1], [0, 0, 1, 1], [], []>} : vector<2x32xf32>, vector<32x128xf32>, vector<2x128xf32> -> vector<2x128xf32>
    %281 = arith.addf %279, %280 : vector<2x128xf32>
    %282 = vector.extract_strided_slice %281 {offsets = [0, 0], sizes = [2, 96], strides = [1, 1]} : vector<2x128xf32> to vector<2x96xf32>
    %283 = arith.negf %282 : vector<2x96xf32>
    %284 = math.exp %283 : vector<2x96xf32>
    %cst_48 = arith.constant 1.000000e+00 : f32
    %285 = vector.broadcast %cst_48 : f32 to vector<2x96xf32>
    %286 = arith.addf %285, %284 : vector<2x96xf32>
    %287 = arith.divf %285, %286 : vector<2x96xf32>
    %288 = vector.extract_strided_slice %281 {offsets = [0, 96], sizes = [2, 32], strides = [1, 1]} : vector<2x128xf32> to vector<2x32xf32>
    %289 = math.tanh %288 : vector<2x32xf32>
    %290 = vector.extract_strided_slice %287 {offsets = [0, 32], sizes = [2, 32], strides = [1, 1]} : vector<2x96xf32> to vector<2x32xf32>
    %291 = arith.mulf %290, %234 : vector<2x32xf32>
    %292 = vector.extract_strided_slice %287 {offsets = [0, 0], sizes = [2, 32], strides = [1, 1]} : vector<2x96xf32> to vector<2x32xf32>
    %293 = arith.mulf %292, %289 : vector<2x32xf32>
    %294 = arith.addf %291, %293 : vector<2x32xf32>
    %295 = vector.extract_strided_slice %287 {offsets = [0, 64], sizes = [2, 32], strides = [1, 1]} : vector<2x96xf32> to vector<2x32xf32>
    %296 = math.tanh %294 : vector<2x32xf32>
    %297 = arith.mulf %295, %296 : vector<2x32xf32>
    %298 = vector.extract_strided_slice %0 {offsets = [10, 0], sizes = [2, 16], strides = [1, 1]} : vector<16x16xf32> to vector<2x16xf32>
    %299 = arith.addf %239, %298 : vector<2x16xf32>
    %cst_49 = arith.constant dense<0.000000e+00> : vector<2x128xf32>
    %300 = tpu.matmul %237, %2, %cst_49 {dimension_numbers = #tpu.dot_dimension_numbers<[1], [0], [0], [1], [0, 0, 1, 1], [], []>} : vector<2x32xf32>, vector<32x128xf32>, vector<2x128xf32> -> vector<2x128xf32>
    %301 = vector.broadcast %4 : vector<1x128xf32> to vector<2x128xf32>
    %302 = arith.addf %300, %301 : vector<2x128xf32>
    %cst_50 = arith.constant dense<0.000000e+00> : vector<2x128xf32>
    %303 = tpu.matmul %260, %3, %cst_50 {dimension_numbers = #tpu.dot_dimension_numbers<[1], [0], [0], [1], [0, 0, 1, 1], [], []>} : vector<2x32xf32>, vector<32x128xf32>, vector<2x128xf32> -> vector<2x128xf32>
    %304 = arith.addf %302, %303 : vector<2x128xf32>
    %305 = vector.extract_strided_slice %304 {offsets = [0, 0], sizes = [2, 96], strides = [1, 1]} : vector<2x128xf32> to vector<2x96xf32>
    %306 = arith.negf %305 : vector<2x96xf32>
    %307 = math.exp %306 : vector<2x96xf32>
    %cst_51 = arith.constant 1.000000e+00 : f32
    %308 = vector.broadcast %cst_51 : f32 to vector<2x96xf32>
    %309 = arith.addf %308, %307 : vector<2x96xf32>
    %310 = arith.divf %308, %309 : vector<2x96xf32>
    %311 = vector.extract_strided_slice %304 {offsets = [0, 96], sizes = [2, 32], strides = [1, 1]} : vector<2x128xf32> to vector<2x32xf32>
    %312 = math.tanh %311 : vector<2x32xf32>
    %313 = vector.extract_strided_slice %310 {offsets = [0, 32], sizes = [2, 32], strides = [1, 1]} : vector<2x96xf32> to vector<2x32xf32>
    %314 = arith.mulf %313, %257 : vector<2x32xf32>
    %315 = vector.extract_strided_slice %310 {offsets = [0, 0], sizes = [2, 32], strides = [1, 1]} : vector<2x96xf32> to vector<2x32xf32>
    %316 = arith.mulf %315, %312 : vector<2x32xf32>
    %317 = arith.addf %314, %316 : vector<2x32xf32>
    %318 = vector.extract_strided_slice %310 {offsets = [0, 64], sizes = [2, 32], strides = [1, 1]} : vector<2x96xf32> to vector<2x32xf32>
    %319 = math.tanh %317 : vector<2x32xf32>
    %320 = arith.mulf %318, %319 : vector<2x32xf32>
    %cst_52 = arith.constant dense<0.000000e+00> : vector<2x1xf32>
    %321 = tpu.matmul %320, %5, %cst_52 {dimension_numbers = #tpu.dot_dimension_numbers<[1], [0], [0], [1], [0, 0, 1, 1], [], []>} : vector<2x32xf32>, vector<32x1xf32>, vector<2x1xf32> -> vector<2x1xf32>
    %c4_i32 = arith.constant 4 : i32
    %322 = vector.broadcast %c4_i32 : i32 to vector<2x8xi32>
    %323 = arith.cmpi eq, %17, %322 : vector<2x8xi32>
    %324 = vector.shape_cast %321 : vector<2x1xf32> to vector<2x1xf32>
    %325 = vector.broadcast %324 : vector<2x1xf32> to vector<2x8xf32>
    %326 = arith.select %323, %325, %266 : vector<2x8xi1>, vector<2x8xf32>
    %327 = arith.maximumf %267, %321 : vector<2x1xf32>
    %328 = arith.subf %267, %327 : vector<2x1xf32>
    %329 = math.exp %328 : vector<2x1xf32>
    %330 = arith.subf %321, %327 : vector<2x1xf32>
    %331 = math.exp %330 : vector<2x1xf32>
    %332 = arith.mulf %329, %273 : vector<2x1xf32>
    %333 = arith.addf %332, %331 : vector<2x1xf32>
    %334 = vector.broadcast %329 : vector<2x1xf32> to vector<2x32xf32>
    %335 = arith.mulf %334, %278 : vector<2x32xf32>
    %336 = vector.broadcast %331 : vector<2x1xf32> to vector<2x32xf32>
    %337 = arith.mulf %336, %320 : vector<2x32xf32>
    %338 = arith.addf %335, %337 : vector<2x32xf32>
    %339 = vector.extract_strided_slice %10 {offsets = [12, 0], sizes = [2, 128], strides = [1, 1]} : vector<16x128xf32> to vector<2x128xf32>
    %cst_53 = arith.constant dense<0.000000e+00> : vector<2x128xf32>
    %340 = tpu.matmul %297, %1, %cst_53 {dimension_numbers = #tpu.dot_dimension_numbers<[1], [0], [0], [1], [0, 0, 1, 1], [], []>} : vector<2x32xf32>, vector<32x128xf32>, vector<2x128xf32> -> vector<2x128xf32>
    %341 = arith.addf %339, %340 : vector<2x128xf32>
    %342 = vector.extract_strided_slice %341 {offsets = [0, 0], sizes = [2, 96], strides = [1, 1]} : vector<2x128xf32> to vector<2x96xf32>
    %343 = arith.negf %342 : vector<2x96xf32>
    %344 = math.exp %343 : vector<2x96xf32>
    %cst_54 = arith.constant 1.000000e+00 : f32
    %345 = vector.broadcast %cst_54 : f32 to vector<2x96xf32>
    %346 = arith.addf %345, %344 : vector<2x96xf32>
    %347 = arith.divf %345, %346 : vector<2x96xf32>
    %348 = vector.extract_strided_slice %341 {offsets = [0, 96], sizes = [2, 32], strides = [1, 1]} : vector<2x128xf32> to vector<2x32xf32>
    %349 = math.tanh %348 : vector<2x32xf32>
    %350 = vector.extract_strided_slice %347 {offsets = [0, 32], sizes = [2, 32], strides = [1, 1]} : vector<2x96xf32> to vector<2x32xf32>
    %351 = arith.mulf %350, %294 : vector<2x32xf32>
    %352 = vector.extract_strided_slice %347 {offsets = [0, 0], sizes = [2, 32], strides = [1, 1]} : vector<2x96xf32> to vector<2x32xf32>
    %353 = arith.mulf %352, %349 : vector<2x32xf32>
    %354 = arith.addf %351, %353 : vector<2x32xf32>
    %355 = vector.extract_strided_slice %347 {offsets = [0, 64], sizes = [2, 32], strides = [1, 1]} : vector<2x96xf32> to vector<2x32xf32>
    %356 = math.tanh %354 : vector<2x32xf32>
    %357 = arith.mulf %355, %356 : vector<2x32xf32>
    %358 = vector.extract_strided_slice %0 {offsets = [12, 0], sizes = [2, 16], strides = [1, 1]} : vector<16x16xf32> to vector<2x16xf32>
    %359 = arith.addf %299, %358 : vector<2x16xf32>
    %cst_55 = arith.constant dense<0.000000e+00> : vector<2x128xf32>
    %360 = tpu.matmul %297, %2, %cst_55 {dimension_numbers = #tpu.dot_dimension_numbers<[1], [0], [0], [1], [0, 0, 1, 1], [], []>} : vector<2x32xf32>, vector<32x128xf32>, vector<2x128xf32> -> vector<2x128xf32>
    %361 = vector.broadcast %4 : vector<1x128xf32> to vector<2x128xf32>
    %362 = arith.addf %360, %361 : vector<2x128xf32>
    %cst_56 = arith.constant dense<0.000000e+00> : vector<2x128xf32>
    %363 = tpu.matmul %320, %3, %cst_56 {dimension_numbers = #tpu.dot_dimension_numbers<[1], [0], [0], [1], [0, 0, 1, 1], [], []>} : vector<2x32xf32>, vector<32x128xf32>, vector<2x128xf32> -> vector<2x128xf32>
    %364 = arith.addf %362, %363 : vector<2x128xf32>
    %365 = vector.extract_strided_slice %364 {offsets = [0, 0], sizes = [2, 96], strides = [1, 1]} : vector<2x128xf32> to vector<2x96xf32>
    %366 = arith.negf %365 : vector<2x96xf32>
    %367 = math.exp %366 : vector<2x96xf32>
    %cst_57 = arith.constant 1.000000e+00 : f32
    %368 = vector.broadcast %cst_57 : f32 to vector<2x96xf32>
    %369 = arith.addf %368, %367 : vector<2x96xf32>
    %370 = arith.divf %368, %369 : vector<2x96xf32>
    %371 = vector.extract_strided_slice %364 {offsets = [0, 96], sizes = [2, 32], strides = [1, 1]} : vector<2x128xf32> to vector<2x32xf32>
    %372 = math.tanh %371 : vector<2x32xf32>
    %373 = vector.extract_strided_slice %370 {offsets = [0, 32], sizes = [2, 32], strides = [1, 1]} : vector<2x96xf32> to vector<2x32xf32>
    %374 = arith.mulf %373, %317 : vector<2x32xf32>
    %375 = vector.extract_strided_slice %370 {offsets = [0, 0], sizes = [2, 32], strides = [1, 1]} : vector<2x96xf32> to vector<2x32xf32>
    %376 = arith.mulf %375, %372 : vector<2x32xf32>
    %377 = arith.addf %374, %376 : vector<2x32xf32>
    %378 = vector.extract_strided_slice %370 {offsets = [0, 64], sizes = [2, 32], strides = [1, 1]} : vector<2x96xf32> to vector<2x32xf32>
    %379 = math.tanh %377 : vector<2x32xf32>
    %380 = arith.mulf %378, %379 : vector<2x32xf32>
    %cst_58 = arith.constant dense<0.000000e+00> : vector<2x1xf32>
    %381 = tpu.matmul %380, %5, %cst_58 {dimension_numbers = #tpu.dot_dimension_numbers<[1], [0], [0], [1], [0, 0, 1, 1], [], []>} : vector<2x32xf32>, vector<32x1xf32>, vector<2x1xf32> -> vector<2x1xf32>
    %c5_i32 = arith.constant 5 : i32
    %382 = vector.broadcast %c5_i32 : i32 to vector<2x8xi32>
    %383 = arith.cmpi eq, %17, %382 : vector<2x8xi32>
    %384 = vector.shape_cast %381 : vector<2x1xf32> to vector<2x1xf32>
    %385 = vector.broadcast %384 : vector<2x1xf32> to vector<2x8xf32>
    %386 = arith.select %383, %385, %326 : vector<2x8xi1>, vector<2x8xf32>
    %387 = arith.maximumf %327, %381 : vector<2x1xf32>
    %388 = arith.subf %327, %387 : vector<2x1xf32>
    %389 = math.exp %388 : vector<2x1xf32>
    %390 = arith.subf %381, %387 : vector<2x1xf32>
    %391 = math.exp %390 : vector<2x1xf32>
    %392 = arith.mulf %389, %333 : vector<2x1xf32>
    %393 = arith.addf %392, %391 : vector<2x1xf32>
    %394 = vector.broadcast %389 : vector<2x1xf32> to vector<2x32xf32>
    %395 = arith.mulf %394, %338 : vector<2x32xf32>
    %396 = vector.broadcast %391 : vector<2x1xf32> to vector<2x32xf32>
    %397 = arith.mulf %396, %380 : vector<2x32xf32>
    %398 = arith.addf %395, %397 : vector<2x32xf32>
    %399 = vector.extract_strided_slice %10 {offsets = [14, 0], sizes = [2, 128], strides = [1, 1]} : vector<16x128xf32> to vector<2x128xf32>
    %cst_59 = arith.constant dense<0.000000e+00> : vector<2x128xf32>
    %400 = tpu.matmul %357, %1, %cst_59 {dimension_numbers = #tpu.dot_dimension_numbers<[1], [0], [0], [1], [0, 0, 1, 1], [], []>} : vector<2x32xf32>, vector<32x128xf32>, vector<2x128xf32> -> vector<2x128xf32>
    %401 = arith.addf %399, %400 : vector<2x128xf32>
    %402 = vector.extract_strided_slice %401 {offsets = [0, 0], sizes = [2, 96], strides = [1, 1]} : vector<2x128xf32> to vector<2x96xf32>
    %403 = arith.negf %402 : vector<2x96xf32>
    %404 = math.exp %403 : vector<2x96xf32>
    %cst_60 = arith.constant 1.000000e+00 : f32
    %405 = vector.broadcast %cst_60 : f32 to vector<2x96xf32>
    %406 = arith.addf %405, %404 : vector<2x96xf32>
    %407 = arith.divf %405, %406 : vector<2x96xf32>
    %408 = vector.extract_strided_slice %401 {offsets = [0, 96], sizes = [2, 32], strides = [1, 1]} : vector<2x128xf32> to vector<2x32xf32>
    %409 = math.tanh %408 : vector<2x32xf32>
    %410 = vector.extract_strided_slice %407 {offsets = [0, 32], sizes = [2, 32], strides = [1, 1]} : vector<2x96xf32> to vector<2x32xf32>
    %411 = arith.mulf %410, %354 : vector<2x32xf32>
    %412 = vector.extract_strided_slice %407 {offsets = [0, 0], sizes = [2, 32], strides = [1, 1]} : vector<2x96xf32> to vector<2x32xf32>
    %413 = arith.mulf %412, %409 : vector<2x32xf32>
    %414 = arith.addf %411, %413 : vector<2x32xf32>
    %415 = vector.extract_strided_slice %407 {offsets = [0, 64], sizes = [2, 32], strides = [1, 1]} : vector<2x96xf32> to vector<2x32xf32>
    %416 = math.tanh %414 : vector<2x32xf32>
    %417 = arith.mulf %415, %416 : vector<2x32xf32>
    %418 = vector.extract_strided_slice %0 {offsets = [14, 0], sizes = [2, 16], strides = [1, 1]} : vector<16x16xf32> to vector<2x16xf32>
    %419 = arith.addf %359, %418 : vector<2x16xf32>
    %cst_61 = arith.constant dense<0.000000e+00> : vector<2x128xf32>
    %420 = tpu.matmul %357, %2, %cst_61 {dimension_numbers = #tpu.dot_dimension_numbers<[1], [0], [0], [1], [0, 0, 1, 1], [], []>} : vector<2x32xf32>, vector<32x128xf32>, vector<2x128xf32> -> vector<2x128xf32>
    %421 = vector.broadcast %4 : vector<1x128xf32> to vector<2x128xf32>
    %422 = arith.addf %420, %421 : vector<2x128xf32>
    %cst_62 = arith.constant dense<0.000000e+00> : vector<2x128xf32>
    %423 = tpu.matmul %380, %3, %cst_62 {dimension_numbers = #tpu.dot_dimension_numbers<[1], [0], [0], [1], [0, 0, 1, 1], [], []>} : vector<2x32xf32>, vector<32x128xf32>, vector<2x128xf32> -> vector<2x128xf32>
    %424 = arith.addf %422, %423 : vector<2x128xf32>
    %425 = vector.extract_strided_slice %424 {offsets = [0, 0], sizes = [2, 96], strides = [1, 1]} : vector<2x128xf32> to vector<2x96xf32>
    %426 = arith.negf %425 : vector<2x96xf32>
    %427 = math.exp %426 : vector<2x96xf32>
    %cst_63 = arith.constant 1.000000e+00 : f32
    %428 = vector.broadcast %cst_63 : f32 to vector<2x96xf32>
    %429 = arith.addf %428, %427 : vector<2x96xf32>
    %430 = arith.divf %428, %429 : vector<2x96xf32>
    %431 = vector.extract_strided_slice %424 {offsets = [0, 96], sizes = [2, 32], strides = [1, 1]} : vector<2x128xf32> to vector<2x32xf32>
    %432 = math.tanh %431 : vector<2x32xf32>
    %433 = vector.extract_strided_slice %430 {offsets = [0, 32], sizes = [2, 32], strides = [1, 1]} : vector<2x96xf32> to vector<2x32xf32>
    %434 = arith.mulf %433, %377 : vector<2x32xf32>
    %435 = vector.extract_strided_slice %430 {offsets = [0, 0], sizes = [2, 32], strides = [1, 1]} : vector<2x96xf32> to vector<2x32xf32>
    %436 = arith.mulf %435, %432 : vector<2x32xf32>
    %437 = arith.addf %434, %436 : vector<2x32xf32>
    %438 = vector.extract_strided_slice %430 {offsets = [0, 64], sizes = [2, 32], strides = [1, 1]} : vector<2x96xf32> to vector<2x32xf32>
    %439 = math.tanh %437 : vector<2x32xf32>
    %440 = arith.mulf %438, %439 : vector<2x32xf32>
    %cst_64 = arith.constant dense<0.000000e+00> : vector<2x1xf32>
    %441 = tpu.matmul %440, %5, %cst_64 {dimension_numbers = #tpu.dot_dimension_numbers<[1], [0], [0], [1], [0, 0, 1, 1], [], []>} : vector<2x32xf32>, vector<32x1xf32>, vector<2x1xf32> -> vector<2x1xf32>
    %c6_i32 = arith.constant 6 : i32
    %442 = vector.broadcast %c6_i32 : i32 to vector<2x8xi32>
    %443 = arith.cmpi eq, %17, %442 : vector<2x8xi32>
    %444 = vector.shape_cast %441 : vector<2x1xf32> to vector<2x1xf32>
    %445 = vector.broadcast %444 : vector<2x1xf32> to vector<2x8xf32>
    %446 = arith.select %443, %445, %386 : vector<2x8xi1>, vector<2x8xf32>
    %447 = arith.maximumf %387, %441 : vector<2x1xf32>
    %448 = arith.subf %387, %447 : vector<2x1xf32>
    %449 = math.exp %448 : vector<2x1xf32>
    %450 = arith.subf %441, %447 : vector<2x1xf32>
    %451 = math.exp %450 : vector<2x1xf32>
    %452 = arith.mulf %449, %393 : vector<2x1xf32>
    %453 = arith.addf %452, %451 : vector<2x1xf32>
    %454 = vector.broadcast %449 : vector<2x1xf32> to vector<2x32xf32>
    %455 = arith.mulf %454, %398 : vector<2x32xf32>
    %456 = vector.broadcast %451 : vector<2x1xf32> to vector<2x32xf32>
    %457 = arith.mulf %456, %440 : vector<2x32xf32>
    %458 = arith.addf %455, %457 : vector<2x32xf32>
    %cst_65 = arith.constant dense<0.000000e+00> : vector<2x128xf32>
    %459 = tpu.matmul %417, %2, %cst_65 {dimension_numbers = #tpu.dot_dimension_numbers<[1], [0], [0], [1], [0, 0, 1, 1], [], []>} : vector<2x32xf32>, vector<32x128xf32>, vector<2x128xf32> -> vector<2x128xf32>
    %460 = vector.broadcast %4 : vector<1x128xf32> to vector<2x128xf32>
    %461 = arith.addf %459, %460 : vector<2x128xf32>
    %cst_66 = arith.constant dense<0.000000e+00> : vector<2x128xf32>
    %462 = tpu.matmul %440, %3, %cst_66 {dimension_numbers = #tpu.dot_dimension_numbers<[1], [0], [0], [1], [0, 0, 1, 1], [], []>} : vector<2x32xf32>, vector<32x128xf32>, vector<2x128xf32> -> vector<2x128xf32>
    %463 = arith.addf %461, %462 : vector<2x128xf32>
    %464 = vector.extract_strided_slice %463 {offsets = [0, 0], sizes = [2, 96], strides = [1, 1]} : vector<2x128xf32> to vector<2x96xf32>
    %465 = arith.negf %464 : vector<2x96xf32>
    %466 = math.exp %465 : vector<2x96xf32>
    %cst_67 = arith.constant 1.000000e+00 : f32
    %467 = vector.broadcast %cst_67 : f32 to vector<2x96xf32>
    %468 = arith.addf %467, %466 : vector<2x96xf32>
    %469 = arith.divf %467, %468 : vector<2x96xf32>
    %470 = vector.extract_strided_slice %463 {offsets = [0, 96], sizes = [2, 32], strides = [1, 1]} : vector<2x128xf32> to vector<2x32xf32>
    %471 = math.tanh %470 : vector<2x32xf32>
    %472 = vector.extract_strided_slice %469 {offsets = [0, 32], sizes = [2, 32], strides = [1, 1]} : vector<2x96xf32> to vector<2x32xf32>
    %473 = arith.mulf %472, %437 : vector<2x32xf32>
    %474 = vector.extract_strided_slice %469 {offsets = [0, 0], sizes = [2, 32], strides = [1, 1]} : vector<2x96xf32> to vector<2x32xf32>
    %475 = arith.mulf %474, %471 : vector<2x32xf32>
    %476 = arith.addf %473, %475 : vector<2x32xf32>
    %477 = vector.extract_strided_slice %469 {offsets = [0, 64], sizes = [2, 32], strides = [1, 1]} : vector<2x96xf32> to vector<2x32xf32>
    %478 = math.tanh %476 : vector<2x32xf32>
    %479 = arith.mulf %477, %478 : vector<2x32xf32>
    %cst_68 = arith.constant dense<0.000000e+00> : vector<2x1xf32>
    %480 = tpu.matmul %479, %5, %cst_68 {dimension_numbers = #tpu.dot_dimension_numbers<[1], [0], [0], [1], [0, 0, 1, 1], [], []>} : vector<2x32xf32>, vector<32x1xf32>, vector<2x1xf32> -> vector<2x1xf32>
    %c7_i32 = arith.constant 7 : i32
    %481 = vector.broadcast %c7_i32 : i32 to vector<2x8xi32>
    %482 = arith.cmpi eq, %17, %481 : vector<2x8xi32>
    %483 = vector.shape_cast %480 : vector<2x1xf32> to vector<2x1xf32>
    %484 = vector.broadcast %483 : vector<2x1xf32> to vector<2x8xf32>
    %485 = arith.select %482, %484, %446 : vector<2x8xi1>, vector<2x8xf32>
    %486 = arith.maximumf %447, %480 : vector<2x1xf32>
    %487 = arith.subf %447, %486 : vector<2x1xf32>
    %488 = math.exp %487 : vector<2x1xf32>
    %489 = arith.subf %480, %486 : vector<2x1xf32>
    %490 = math.exp %489 : vector<2x1xf32>
    %491 = arith.mulf %488, %453 : vector<2x1xf32>
    %492 = arith.addf %491, %490 : vector<2x1xf32>
    %493 = vector.broadcast %488 : vector<2x1xf32> to vector<2x32xf32>
    %494 = arith.mulf %493, %458 : vector<2x32xf32>
    %495 = vector.broadcast %490 : vector<2x1xf32> to vector<2x32xf32>
    %496 = arith.mulf %495, %479 : vector<2x32xf32>
    %497 = arith.addf %494, %496 : vector<2x32xf32>
    %498 = tpu.reciprocal %492 {approx = true} : vector<2x1xf32> -> vector<2x1xf32>
    %499 = vector.broadcast %486 : vector<2x1xf32> to vector<2x8xf32>
    %500 = arith.subf %485, %499 : vector<2x8xf32>
    %501 = math.exp %500 : vector<2x8xf32>
    %502 = vector.broadcast %498 : vector<2x1xf32> to vector<2x8xf32>
    %503 = arith.mulf %501, %502 : vector<2x8xf32>
    %c0_69 = arith.constant 0 : index
    %c0_70 = arith.constant 0 : index
    %504 = vector.load %arg13[%c0_69, %c0_70] : memref<2x8xf32, #tpu.memory_space<vmem>>, vector<2x8xf32>
    tpu.vector_store %arg13[%c0_69, %c0_70], %503 {strides = array<i32>} : memref<2x8xf32, #tpu.memory_space<vmem>>, vector<2x8xf32>,
    %505 = vector.broadcast %498 : vector<2x1xf32> to vector<2x32xf32>
    %506 = arith.mulf %497, %505 : vector<2x32xf32>
    %cst_71 = arith.constant 1.250000e-01 : f32
    %507 = vector.broadcast %cst_71 : f32 to vector<2x16xf32>
    %508 = arith.mulf %419, %507 : vector<2x16xf32>
    %c0_72 = arith.constant 0 : index
    %c0_73 = arith.constant 0 : index
    %509 = vector.load %arg8[%c0_72, %c0_73] : memref<16x32xf32, #tpu.memory_space<vmem>>, vector<16x32xf32>
    %cst_74 = arith.constant dense<0.000000e+00> : vector<2x32xf32>
    %510 = tpu.matmul %508, %509, %cst_74 {dimension_numbers = #tpu.dot_dimension_numbers<[1], [0], [0], [1], [0, 0, 1, 1], [], []>} : vector<2x16xf32>, vector<16x32xf32>, vector<2x32xf32> -> vector<2x32xf32>
    %c0_75 = arith.constant 0 : index
    %c0_76 = arith.constant 0 : index
    %511 = vector.load %arg9[%c0_75, %c0_76] : memref<1x32xf32, #tpu.memory_space<vmem>>, vector<1x32xf32>
    %512 = vector.broadcast %511 : vector<1x32xf32> to vector<2x32xf32>
    %513 = arith.addf %510, %512 : vector<2x32xf32>
    %514 = arith.addf %506, %513 : vector<2x32xf32>
    %515 = arith.negf %514 : vector<2x32xf32>
    %516 = math.exp %515 : vector<2x32xf32>
    %cst_77 = arith.constant 1.000000e+00 : f32
    %517 = vector.broadcast %cst_77 : f32 to vector<2x32xf32>
    %518 = arith.addf %517, %516 : vector<2x32xf32>
    %519 = arith.divf %517, %518 : vector<2x32xf32>
    %520 = arith.mulf %514, %519 : vector<2x32xf32>
    %c0_78 = arith.constant 0 : index
    %c0_79 = arith.constant 0 : index
    %521 = vector.load %arg10[%c0_78, %c0_79] : memref<32x2xf32, #tpu.memory_space<vmem>>, vector<32x2xf32>
    %cst_80 = arith.constant dense<0.000000e+00> : vector<2x2xf32>
    %522 = tpu.matmul %520, %521, %cst_80 {dimension_numbers = #tpu.dot_dimension_numbers<[1], [0], [0], [1], [0, 0, 1, 1], [], []>} : vector<2x32xf32>, vector<32x2xf32>, vector<2x2xf32> -> vector<2x2xf32>
    %c0_81 = arith.constant 0 : index
    %c0_82 = arith.constant 0 : index
    %523 = vector.load %arg11[%c0_81, %c0_82] : memref<1x2xf32, #tpu.memory_space<vmem>>, vector<1x2xf32>
    %524 = vector.broadcast %523 : vector<1x2xf32> to vector<2x2xf32>
    %525 = arith.addf %522, %524 : vector<2x2xf32>
    %c0_83 = arith.constant 0 : index
    %c0_84 = arith.constant 0 : index
    %526 = vector.load %arg12[%c0_83, %c0_84] : memref<2x2xf32, #tpu.memory_space<vmem>>, vector<2x2xf32>
    tpu.vector_store %arg12[%c0_83, %c0_84], %525 {strides = array<i32>} : memref<2x2xf32, #tpu.memory_space<vmem>>, vector<2x2xf32>,
    return
  }
}

</mosaic_0001>

<llo_original>
// kernel: disease_lstm_attention_forward.1
$region0: #{disease_lstm_attention_forward.1}
  #allocation0 [shape = 'u32[]', space=smem, size = 0x4, offset = 0x4, fixed_abs, tag = 'smem constant byte address 0x4 - core index']
  #allocation1 [shape = 'u32[144,128]{1,0:T(1,128)}', space=vmem, size = 0x12000, scoped, tag = 'internal scratch']
  %s0 = inlined_call_operand.vmem [shape: f32[16,16], index: 0, kind: input, shape index: {}]
  %s1 = inlined_call_operand.vmem [shape: f32[16,128], index: 1, kind: input, shape index: {}]
  %s2 = inlined_call_operand.vmem [shape: f32[32,128], index: 2, kind: input, shape index: {}]
  %s3 = inlined_call_operand.hbm [shape: f32[1,128], index: 3, kind: input, shape index: {}]
  %s4 = inlined_call_operand.vmem [shape: f32[32,128], index: 4, kind: input, shape index: {}]
  %s5 = inlined_call_operand.vmem [shape: f32[32,128], index: 5, kind: input, shape index: {}]
  %s6 = inlined_call_operand.hbm [shape: f32[1,128], index: 6, kind: input, shape index: {}]
  %s7 = inlined_call_operand.vmem [shape: f32[32,1], index: 7, kind: input, shape index: {}]
  %s8 = inlined_call_operand.hbm [shape: f32[16,32], index: 8, kind: input, shape index: {}]
  %s9 = inlined_call_operand.hbm [shape: f32[1,32], index: 9, kind: input, shape index: {}]
  %s10 = inlined_call_operand.vmem [shape: f32[32,2], index: 10, kind: input, shape index: {}]
  %s11 = inlined_call_operand.hbm [shape: f32[1,2], index: 11, kind: input, shape index: {}]
  %s12 = inlined_call_operand.hbm [shape: f32[2,2], index: 12, kind: output, shape index: {0}]
  %s13 = inlined_call_operand.hbm [shape: f32[2,8], index: 13, kind: output, shape index: {1}]
  %14 = xla_tuple %s12, %s13
  %s15 = sld [smem:[#allocation0]]
  $region86: #{disease_lstm_attention_forward.1} parent=0
    _
  %s17 = ssub.s32 1, %s15
  %s18 = scalar_select 0, %s17, %s15
  $region1: #{disease_lstm_attention_forward.1} parent=0
    #allocation2 [shape = 'u8[512]{0}', space=vmem, size = 0x400, scoped, tag = 'input window, operand 3, single buffered']
    #allocation3 [shape = 's32[1]{0}', space=sflag, size = 0x4, scoped, tag = 'scoped memory for disease_lstm_attention_forward.1']
    #allocation4 [shape = 's32[1]{0}', space=sflag, size = 0x4, scoped, tag = 'scoped memory for disease_lstm_attention_forward.1']
    #allocation5 [shape = 'u8[512]{0}', space=vmem, size = 0x400, scoped, tag = 'input window, operand 6, single buffered']
    #allocation6 [shape = 's32[1]{0}', space=sflag, size = 0x4, scoped, tag = 'scoped memory for disease_lstm_attention_forward.1']
    #allocation7 [shape = 'u8[8192]{0}', space=vmem, size = 0x2000, scoped, tag = 'input window, operand 8, single buffered']
    #allocation8 [shape = 'u8[512]{0}', space=vmem, size = 0x400, scoped, tag = 'input window, operand 9, single buffered']
    #allocation9 [shape = 's32[1]{0}', space=sflag, size = 0x4, scoped, tag = 'scoped memory for disease_lstm_attention_forward.1']
    #allocation10 [shape = 'u8[512]{0}', space=vmem, size = 0x400, scoped, tag = 'input window, operand 11, single buffered']
    #allocation11 [shape = 'u8[1024]{0}', space=vmem, size = 0x400, scoped, tag = 'output window, operand 0, single buffered']
    #allocation12 [shape = 'u8[1024]{0}', space=vmem, size = 0x400, scoped, tag = 'output window, operand 1, single buffered']
    #allocation13 [shape = 's32[1]{0}', space=sflag, size = 0x4, scoped, tag = 'scoped memory for disease_lstm_attention_forward.1']
    %19 = vsyncpa [#allocation3], 0
    %20 = vsyncpa [#allocation6], 0
    %21 = vsyncpa [#allocation9], 0
    %22 = vsyncpa [#allocation4], 0
    %23 = vsyncpa [#allocation13], 0
    // Predicated region
    $region2: #{disease_lstm_attention_forward.1} parent=1 // pred_check
      _
    $region3: #{disease_lstm_attention_forward.1} parent=1 // pred_check_branch
      %25 = sbr.rel (0) target = $region5
    $region4: #{disease_lstm_attention_forward.1} parent=1 // pred_region
      _
    $region5: #{disease_lstm_attention_forward.1} parent=1 // pred_fallthru
      _
    // Predicated region
    $region6: #{disease_lstm_attention_forward.1} parent=1 // pred_check
      _
    $region7: #{disease_lstm_attention_forward.1} parent=1 // pred_check_branch
      %27 = sbr.rel (0) target = $region9
    $region8: #{disease_lstm_attention_forward.1} parent=1 // pred_region
      _
    $region9: #{disease_lstm_attention_forward.1} parent=1 // pred_fallthru
      _
    // Predicated region
    $region10: #{disease_lstm_attention_forward.1} parent=1 // pred_check
      _
    $region11: #{disease_lstm_attention_forward.1} parent=1 // pred_check_branch
      %29 = sbr.rel (0) target = $region13
    $region12: #{disease_lstm_attention_forward.1} parent=1 // pred_region
      _
    $region13: #{disease_lstm_attention_forward.1} parent=1 // pred_fallthru
      _
    // Predicated region
    $region14: #{disease_lstm_attention_forward.1} parent=1 // pred_check
      _
    $region15: #{disease_lstm_attention_forward.1} parent=1 // pred_check_branch
      %31 = sbr.rel (0) target = $region17
    $region16: #{disease_lstm_attention_forward.1} parent=1 // pred_region
      %s33 = ssub.s32 16, 16
      %34 = vsyncadd [#allocation3], %s33
      %s36 = sshll.u32 [#allocation2], 4
      %s37 = int_to_ptr.vmem [resolvable:$true] %s36
      %39 = dma.hbm_to_vmem [thread:$0]  %s3, 16, %s37, [#allocation3]
    $region17: #{disease_lstm_attention_forward.1} parent=1 // pred_fallthru
      _
    // Predicated region
    $region18: #{disease_lstm_attention_forward.1} parent=1 // pred_check
      _
    $region19: #{disease_lstm_attention_forward.1} parent=1 // pred_check_branch
      %41 = sbr.rel (0) target = $region21
    $region20: #{disease_lstm_attention_forward.1} parent=1 // pred_region
      _
    $region21: #{disease_lstm_attention_forward.1} parent=1 // pred_fallthru
      _
    // Predicated region
    $region22: #{disease_lstm_attention_forward.1} parent=1 // pred_check
      _
    $region23: #{disease_lstm_attention_forward.1} parent=1 // pred_check_branch
      %43 = sbr.rel (0) target = $region25
    $region24: #{disease_lstm_attention_forward.1} parent=1 // pred_region
      _
    $region25: #{disease_lstm_attention_forward.1} parent=1 // pred_fallthru
      _
    // Predicated region
    $region26: #{disease_lstm_attention_forward.1} parent=1 // pred_check
      _
    $region27: #{disease_lstm_attention_forward.1} parent=1 // pred_check_branch
      %45 = sbr.rel (0) target = $region29
    $region28: #{disease_lstm_attention_forward.1} parent=1 // pred_region
      %s47 = ssub.s32 16, 16
      %48 = vsyncadd [#allocation6], %s47
      %s50 = sshll.u32 [#allocation5], 4
      %s51 = int_to_ptr.vmem [resolvable:$true] %s50
      %53 = dma.hbm_to_vmem [thread:$0]  %s6, 16, %s51, [#allocation6]
    $region29: #{disease_lstm_attention_forward.1} parent=1 // pred_fallthru
      _
    // Predicated region
    $region30: #{disease_lstm_attention_forward.1} parent=1 // pred_check
      _
    $region31: #{disease_lstm_attention_forward.1} parent=1 // pred_check_branch
      %55 = sbr.rel (0) target = $region33
    $region32: #{disease_lstm_attention_forward.1} parent=1 // pred_region
      _
    $region33: #{disease_lstm_attention_forward.1} parent=1 // pred_fallthru
      _
    // Predicated region
    $region34: #{disease_lstm_attention_forward.1} parent=1 // pred_check
      _
    $region35: #{disease_lstm_attention_forward.1} parent=1 // pred_check_branch
      %57 = sbr.rel (0) target = $region37
    $region36: #{disease_lstm_attention_forward.1} parent=1 // pred_region
      %s59 = ssub.s32 256, 256
      %60 = vsyncadd [#allocation6], %s59
      %s61 = sshll.u32 [#allocation7], 4
      %s62 = int_to_ptr.vmem [resolvable:$true] %s61
      %67 = dma.hbm_to_vmem [thread:$0]  %s8, 256, %s62, [#allocation6], 128, 128, 8
    $region37: #{disease_lstm_attention_forward.1} parent=1 // pred_fallthru
      _
    // Predicated region
    $region38: #{disease_lstm_attention_forward.1} parent=1 // pred_check
      _
    $region39: #{disease_lstm_attention_forward.1} parent=1 // pred_check_branch
      %69 = sbr.rel (0) target = $region41
    $region40: #{disease_lstm_attention_forward.1} parent=1 // pred_region
      %s71 = ssub.s32 16, 16
      %72 = vsyncadd [#allocation9], %s71
      %s74 = sshll.u32 [#allocation8], 4
      %s75 = int_to_ptr.vmem [resolvable:$true] %s74
      %77 = dma.hbm_to_vmem [thread:$0]  %s9, 16, %s75, [#allocation9]
    $region41: #{disease_lstm_attention_forward.1} parent=1 // pred_fallthru
      _
    // Predicated region
    $region42: #{disease_lstm_attention_forward.1} parent=1 // pred_check
      _
    $region43: #{disease_lstm_attention_forward.1} parent=1 // pred_check_branch
      %79 = sbr.rel (0) target = $region45
    $region44: #{disease_lstm_attention_forward.1} parent=1 // pred_region
      _
    $region45: #{disease_lstm_attention_forward.1} parent=1 // pred_fallthru
      _
    // Predicated region
    $region46: #{disease_lstm_attention_forward.1} parent=1 // pred_check
      _
    $region47: #{disease_lstm_attention_forward.1} parent=1 // pred_check_branch
      %81 = sbr.rel (0) target = $region49
    $region48: #{disease_lstm_attention_forward.1} parent=1 // pred_region
      %s83 = ssub.s32 16, 16
      %84 = vsyncadd [#allocation9], %s83
      %s86 = sshll.u32 [#allocation10], 4
      %s87 = int_to_ptr.vmem [resolvable:$true] %s86
      %89 = dma.hbm_to_vmem [thread:$0]  %s11, 16, %s87, [#allocation9]
    $region49: #{disease_lstm_attention_forward.1} parent=1 // pred_fallthru
      _
    // Predicated region
    $region50: #{disease_lstm_attention_forward.1} parent=1 // pred_check
      _
    $region51: #{disease_lstm_attention_forward.1} parent=1 // pred_check_branch
      %91 = sbr.rel (0) target = $region53
    $region52: #{disease_lstm_attention_forward.1} parent=1 // pred_region
      %92 = dma.done [#allocation3], 16
    $region53: #{disease_lstm_attention_forward.1} parent=1 // pred_fallthru
      _
    // Predicated region
    $region54: #{disease_lstm_attention_forward.1} parent=1 // pred_check
      _
    $region55: #{disease_lstm_attention_forward.1} parent=1 // pred_check_branch
      %94 = sbr.rel (0) target = $region57
    $region56: #{disease_lstm_attention_forward.1} parent=1 // pred_region
      %95 = dma.done [#allocation6], 16
    $region57: #{disease_lstm_attention_forward.1} parent=1 // pred_fallthru
      _
    // Predicated region
    $region58: #{disease_lstm_attention_forward.1} parent=1 // pred_check
      _
    $region59: #{disease_lstm_attention_forward.1} parent=1 // pred_check_branch
      %97 = sbr.rel (0) target = $region61
    $region60: #{disease_lstm_attention_forward.1} parent=1 // pred_region
      %98 = dma.done [#allocation6], 256
    $region61: #{disease_lstm_attention_forward.1} parent=1 // pred_fallthru
      _
    // Predicated region
    $region62: #{disease_lstm_attention_forward.1} parent=1 // pred_check
      _
    $region63: #{disease_lstm_attention_forward.1} parent=1 // pred_check_branch
      %100 = sbr.rel (0) target = $region65
    $region64: #{disease_lstm_attention_forward.1} parent=1 // pred_region
      %101 = dma.done [#allocation9], 16
    $region65: #{disease_lstm_attention_forward.1} parent=1 // pred_fallthru
      _
    // Predicated region
    $region66: #{disease_lstm_attention_forward.1} parent=1 // pred_check
      _
    $region67: #{disease_lstm_attention_forward.1} parent=1 // pred_check_branch
      %103 = sbr.rel (0) target = $region69
    $region68: #{disease_lstm_attention_forward.1} parent=1 // pred_region
      %104 = dma.done [#allocation9], 16
    $region69: #{disease_lstm_attention_forward.1} parent=1 // pred_fallthru
      _
    %v105 = vld [vmem:[%s0] sm:$0xff]
    %v106 = vld [vmem:[%s0 + $0x8] sm:$0xff]
    %v107 = vld [vmem:[%s2] sm:$0xff]
    %v108 = vld [vmem:[%s2 + $0x8] sm:$0xff]
    %v109 = vld [vmem:[%s2 + $0x10] sm:$0xff]
    %v110 = vld [vmem:[%s2 + $0x18] sm:$0xff]
    %v111 = vld [vmem:[%s4] sm:$0xff]
    %v112 = vld [vmem:[%s4 + $0x8] sm:$0xff]
    %v113 = vld [vmem:[%s4 + $0x10] sm:$0xff]
    %v114 = vld [vmem:[%s4 + $0x18] sm:$0xff]
    %v115 = vld [vmem:[%s5] sm:$0xff]
    %v116 = vld [vmem:[%s5 + $0x8] sm:$0xff]
    %v117 = vld [vmem:[%s5 + $0x10] sm:$0xff]
    %v118 = vld [vmem:[%s5 + $0x18] sm:$0xff]
    %v119 = vld [vmem:[#allocation5] sm:$0x1]
    %v120 = vld [vmem:[%s7] sm:$0xff]
    %v121 = vld [vmem:[%s7 + $0x8] sm:$0xff]
    %v122 = vld [vmem:[%s7 + $0x10] sm:$0xff]
    %v123 = vld [vmem:[%s7 + $0x18] sm:$0xff]
    %v124 = vld [vmem:[%s1] sm:$0xff]
    %v125 = vld [vmem:[%s1 + $0x8] sm:$0xff]
    %v126 = vld [vmem:[#allocation2] sm:$0x1]
    %v128 = vlaneseq
    %v129 = vshrl.u32 %v128, 7
    %v130 = vsub.s32 0, %v129
    %v131 = vrot.slane %v126, %v130
    %vm133 = vcmask 130048
    %v135 = vsel %vm133, %v105, 0
    %v138 = vsel %vm133, %v106, 0
    %140 = vmatprep.subr.mxu0 0.0
    %141 = vmatpush1.msra.mxu0 0.0
    %142 = vmatprep.subr.mxu0 0.0
    %143 = vmatpush1.msra.mxu0 0.0
    %144 = vmatprep.subr.mxu0 0.0
    %145 = vmatpush1.msra.mxu0 0.0
    %146 = vmatprep.subr.mxu0 0.0
    %147 = vmatpush1.msra.mxu0 0.0
    %148 = vmatprep.subr.mxu0 0.0
    %149 = vmatpush1.msra.mxu0 0.0
    %150 = vmatprep.subr.mxu0 0.0
    %151 = vmatpush1.msra.mxu0 0.0
    %152 = vmatprep.subr.mxu0 0.0
    %153 = vmatpush1.msra.mxu0 0.0
    %154 = vmatprep.subr.mxu0 0.0
    %155 = vmatpush1.msra.mxu0 0.0
    %156 = vmatprep.subr.mxu0 0.0
    %157 = vmatpush1.msra.mxu0 0.0
    %158 = vmatprep.subr.mxu0 0.0
    %159 = vmatpush1.msra.mxu0 0.0
    %160 = vmatprep.subr.mxu0 0.0
    %161 = vmatpush1.msra.mxu0 0.0
    %162 = vmatprep.subr.mxu0 0.0
    %163 = vmatpush1.msra.mxu0 0.0
    %164 = vmatprep.subr.mxu0 0.0
    %165 = vmatpush1.msra.mxu0 0.0
    %166 = vmatprep.subr.mxu0 0.0
    %167 = vmatpush1.msra.mxu0 0.0
    %168 = vmatprep.subr.mxu0 0.0
    %169 = vmatpush1.msra.mxu0 %v125
    %170 = vmatprep.subr.mxu0 0.0
    %171 = vmatpush1.msra.mxu0 %v124
    %172 = vmatprep.subr.mxu0 0.0
    %173 = vmatpush2.msra.mxu0 0.0
    %174 = vmatprep.subr.mxu0 0.0
    %175 = vmatpush2.msra.mxu0 0.0
    %176 = vmatprep.subr.mxu0 0.0
    %177 = vmatpush2.msra.mxu0 0.0
    %178 = vmatprep.subr.mxu0 0.0
    %179 = vmatpush2.msra.mxu0 0.0
    %180 = vmatprep.subr.mxu0 0.0
    %181 = vmatpush2.msra.mxu0 0.0
    %182 = vmatprep.subr.mxu0 0.0
    %183 = vmatpush2.msra.mxu0 0.0
    %184 = vmatprep.subr.mxu0 0.0
    %185 = vmatpush2.msra.mxu0 0.0
    %186 = vmatprep.subr.mxu0 0.0
    %187 = vmatpush2.msra.mxu0 0.0
    %188 = vmatprep.subr.mxu0 0.0
    %189 = vmatpush2.msra.mxu0 0.0
    %190 = vmatprep.subr.mxu0 0.0
    %191 = vmatpush2.msra.mxu0 0.0
    %192 = vmatprep.subr.mxu0 0.0
    %193 = vmatpush2.msra.mxu0 0.0
    %194 = vmatprep.subr.mxu0 0.0
    %195 = vmatpush2.msra.mxu0 0.0
    %196 = vmatprep.subr.mxu0 0.0
    %197 = vmatpush2.msra.mxu0 0.0
    %198 = vmatprep.subr.mxu0 0.0
    %199 = vmatpush2.msra.mxu0 0.0
    %200 = vmatprep.subr.mxu0 0.0
    %201 = vmatpush2.msra.mxu0 0.0
    %202 = vmatprep.subr.mxu0 0.0
    %203 = vmatpush2.msra.mxu0 0.0
    %204 = vmatprep.mubr.f32.mxu0 0.0
    %205 = vmatmul.mubr.f32.gmra.mxu0 %v135
    %v206 = vpop.f32.mrf.mxu0
    %v207 = vadd.f32 %v131, %v206
    %v208 = vpop.f32.mrf.mxu0
    %209 = vmatprep.mubr.f32.mxu0 0.0
    %210 = vmatmul.mubr.f32.gmra.mxu0 %v138
    %v211 = vpop.f32.mrf.mxu0
    %v212 = vadd.f32 %v131, %v211
    %v213 = vpop.f32.mrf.mxu0
    %214 = vdwg.mxu0
    %v215 = vlaneseq
    %v216 = vand.u32 %v215, 127
    %vm217 = vcmask 261120
    %v219 = vsel %vm217, 0.0, 0
    %221 = vmatprep.subr.mxu0 0.0
    %222 = vmatpush1.msra.mxu0 0.0
    %223 = vmatprep.subr.mxu0 0.0
    %224 = vmatpush1.msra.mxu0 0.0
    %225 = vmatprep.subr.mxu0 0.0
    %226 = vmatpush1.msra.mxu0 0.0
    %227 = vmatprep.subr.mxu0 0.0
    %228 = vmatpush1.msra.mxu0 0.0
    %229 = vmatprep.subr.mxu0 0.0
    %230 = vmatpush1.msra.mxu0 0.0
    %231 = vmatprep.subr.mxu0 0.0
    %232 = vmatpush1.msra.mxu0 0.0
    %233 = vmatprep.subr.mxu0 0.0
    %234 = vmatpush1.msra.mxu0 0.0
    %235 = vmatprep.subr.mxu0 0.0
    %236 = vmatpush1.msra.mxu0 0.0
    %237 = vmatprep.subr.mxu0 0.0
    %238 = vmatpush1.msra.mxu0 0.0
    %239 = vmatprep.subr.mxu0 0.0
    %240 = vmatpush1.msra.mxu0 0.0
    %241 = vmatprep.subr.mxu0 0.0
    %242 = vmatpush1.msra.mxu0 0.0
    %243 = vmatprep.subr.mxu0 0.0
    %244 = vmatpush1.msra.mxu0 0.0
    %245 = vmatprep.subr.mxu0 0.0
    %246 = vmatpush1.msra.mxu0 %v110
    %247 = vmatprep.subr.mxu0 0.0
    %248 = vmatpush1.msra.mxu0 %v109
    %249 = vmatprep.subr.mxu0 0.0
    %250 = vmatpush1.msra.mxu0 %v108
    %251 = vmatprep.subr.mxu0 0.0
    %252 = vmatpush1.msra.mxu0 %v107
    %253 = vmatprep.subr.mxu0 0.0
    %254 = vmatpush2.msra.mxu0 0.0
    %255 = vmatprep.subr.mxu0 0.0
    %256 = vmatpush2.msra.mxu0 0.0
    %257 = vmatprep.subr.mxu0 0.0
    %258 = vmatpush2.msra.mxu0 0.0
    %259 = vmatprep.subr.mxu0 0.0
    %260 = vmatpush2.msra.mxu0 0.0
    %261 = vmatprep.subr.mxu0 0.0
    %262 = vmatpush2.msra.mxu0 0.0
    %263 = vmatprep.subr.mxu0 0.0
    %264 = vmatpush2.msra.mxu0 0.0
    %265 = vmatprep.subr.mxu0 0.0
    %266 = vmatpush2.msra.mxu0 0.0
    %267 = vmatprep.subr.mxu0 0.0
    %268 = vmatpush2.msra.mxu0 0.0
    %269 = vmatprep.subr.mxu0 0.0
    %270 = vmatpush2.msra.mxu0 0.0
    %271 = vmatprep.subr.mxu0 0.0
    %272 = vmatpush2.msra.mxu0 0.0
    %273 = vmatprep.subr.mxu0 0.0
    %274 = vmatpush2.msra.mxu0 0.0
    %275 = vmatprep.subr.mxu0 0.0
    %276 = vmatpush2.msra.mxu0 0.0
    %277 = vmatprep.subr.mxu0 0.0
    %278 = vmatpush2.msra.mxu0 0.0
    %279 = vmatprep.subr.mxu0 0.0
    %280 = vmatpush2.msra.mxu0 0.0
    %281 = vmatprep.subr.mxu0 0.0
    %282 = vmatpush2.msra.mxu0 0.0
    %283 = vmatprep.subr.mxu0 0.0
    %284 = vmatpush2.msra.mxu0 0.0
    %285 = vmatprep.mubr.f32.mxu0 0.0
    %286 = vmatmul.mubr.f32.gmra.mxu0 %v219
    %v287 = vpop.f32.mrf.mxu0
    %v288 = vadd.f32 0.0, %v287
    %v289 = vpop.f32.mrf.mxu0
    %290 = vdwg.mxu0
    %v291 = vadd.f32 %v207, %v288
    %v292 = vxor.u32 %v291, 2147483648
    %v293 = vmul.f32 %v292, 1.442695
    %v294 = vpow.pop %v293
    %v295 = vadd.f32 %v294, 1.0
    %v296 = vrcp.pop %v295
    %v297 = vmul.f32 1.0, %v296
    %v298 = vtanh.pop %v291
    %v299 = vmul.f32 %v297, 0.0
    %301 = vrot.lane.b32.xlu0 %v298, 32
    %v302 = vpop.permute.xlu0 %301
    %v304 = vmul.f32 %v297, %v302
    %306 = vrot.lane.b32.xlu0 %v304, 32
    %v307 = vpop.permute.xlu0 %306
    %v309 = vadd.f32 %v299, %v307
    %v310 = vtanh.pop %v309
    %312 = vrot.lane.b32.xlu0 %v310, 32
    %v313 = vpop.permute.xlu0 %312
    %v315 = vmul.f32 %v297, %v313
    %v316 = vadd.f32 %v105, 0.0
    %318 = vrot.lane.b32.xlu0 %v315, 64
    %v319 = vpop.permute.xlu0 %318
    %v320 = vsel %vm217, %v319, 0
    %322 = vmatprep.subr.mxu0 0.0
    %323 = vmatpush1.msra.mxu0 0.0
    %324 = vmatprep.subr.mxu0 0.0
    %325 = vmatpush1.msra.mxu0 0.0
    %326 = vmatprep.subr.mxu0 0.0
    %327 = vmatpush1.msra.mxu0 0.0
    %328 = vmatprep.subr.mxu0 0.0
    %329 = vmatpush1.msra.mxu0 0.0
    %330 = vmatprep.subr.mxu0 0.0
    %331 = vmatpush1.msra.mxu0 0.0
    %332 = vmatprep.subr.mxu0 0.0
    %333 = vmatpush1.msra.mxu0 0.0
    %334 = vmatprep.subr.mxu0 0.0
    %335 = vmatpush1.msra.mxu0 0.0
    %336 = vmatprep.subr.mxu0 0.0
    %337 = vmatpush1.msra.mxu0 0.0
    %338 = vmatprep.subr.mxu0 0.0
    %339 = vmatpush1.msra.mxu0 0.0
    %340 = vmatprep.subr.mxu0 0.0
    %341 = vmatpush1.msra.mxu0 0.0
    %342 = vmatprep.subr.mxu0 0.0
    %343 = vmatpush1.msra.mxu0 0.0
    %344 = vmatprep.subr.mxu0 0.0
    %345 = vmatpush1.msra.mxu0 0.0
    %346 = vmatprep.subr.mxu0 0.0
    %347 = vmatpush1.msra.mxu0 %v110
    %348 = vmatprep.subr.mxu0 0.0
    %349 = vmatpush1.msra.mxu0 %v109
    %350 = vmatprep.subr.mxu0 0.0
    %351 = vmatpush1.msra.mxu0 %v108
    %352 = vmatprep.subr.mxu0 0.0
    %353 = vmatpush1.msra.mxu0 %v107
    %354 = vmatprep.subr.mxu0 0.0
    %355 = vmatpush2.msra.mxu0 0.0
    %356 = vmatprep.subr.mxu0 0.0
    %357 = vmatpush2.msra.mxu0 0.0
    %358 = vmatprep.subr.mxu0 0.0
    %359 = vmatpush2.msra.mxu0 0.0
    %360 = vmatprep.subr.mxu0 0.0
    %361 = vmatpush2.msra.mxu0 0.0
    %362 = vmatprep.subr.mxu0 0.0
    %363 = vmatpush2.msra.mxu0 0.0
    %364 = vmatprep.subr.mxu0 0.0
    %365 = vmatpush2.msra.mxu0 0.0
    %366 = vmatprep.subr.mxu0 0.0
    %367 = vmatpush2.msra.mxu0 0.0
    %368 = vmatprep.subr.mxu0 0.0
    %369 = vmatpush2.msra.mxu0 0.0
    %370 = vmatprep.subr.mxu0 0.0
    %371 = vmatpush2.msra.mxu0 0.0
    %372 = vmatprep.subr.mxu0 0.0
    %373 = vmatpush2.msra.mxu0 0.0
    %374 = vmatprep.subr.mxu0 0.0
    %375 = vmatpush2.msra.mxu0 0.0
    %376 = vmatprep.subr.mxu0 0.0
    %377 = vmatpush2.msra.mxu0 0.0
    %378 = vmatprep.subr.mxu0 0.0
    %379 = vmatpush2.msra.mxu0 0.0
    %380 = vmatprep.subr.mxu0 0.0
    %381 = vmatpush2.msra.mxu0 0.0
    %382 = vmatprep.subr.mxu0 0.0
    %383 = vmatpush2.msra.mxu0 0.0
    %384 = vmatprep.subr.mxu0 0.0
    %385 = vmatpush2.msra.mxu0 0.0
    %386 = vmatprep.mubr.f32.mxu0 0.0
    %387 = vmatmul.mubr.f32.gmra.mxu0 %v320
    %v388 = vpop.f32.mrf.mxu0
    %v389 = vadd.f32 0.0, %v388
    %v390 = vpop.f32.mrf.mxu0
    %391 = vdwg.mxu0
    %v393 = vrot.slane %v389, 6
    %v395 = vadd.f32 %v207, %v393
    %v396 = vxor.u32 %v395, 2147483648
    %v397 = vmul.f32 %v396, 1.442695
    %v398 = vpow.pop %v397
    %v399 = vadd.f32 %v398, 1.0
    %v400 = vrcp.pop %v399
    %v401 = vmul.f32 1.0, %v400
    %v402 = vtanh.pop %v395
    %v404 = vrot.slane %v309, 6
    %v406 = vmul.f32 %v401, %v404
    %408 = vrot.lane.b32.xlu0 %v402, 32
    %v409 = vpop.permute.xlu0 %408
    %v411 = vmul.f32 %v401, %v409
    %413 = vrot.lane.b32.xlu0 %v411, 32
    %v414 = vpop.permute.xlu0 %413
    %v416 = vadd.f32 %v406, %v414
    %v417 = vtanh.pop %v416
    %419 = vrot.lane.b32.xlu0 %v417, 32
    %v420 = vpop.permute.xlu0 %419
    %v422 = vmul.f32 %v401, %v420
    %v423 = vrot.slane %v105, 2
    %v425 = vadd.f32 %v316, %v423
    %v427 = vlaneseq
    %v428 = vshrl.u32 %v427, 7
    %v429 = vsub.s32 0, %v428
    %v430 = vrot.slane %v119, %v429
    %432 = vmatprep.subr.mxu0 0.0
    %433 = vmatpush1.msra.mxu0 0.0
    %434 = vmatprep.subr.mxu0 0.0
    %435 = vmatpush1.msra.mxu0 0.0
    %436 = vmatprep.subr.mxu0 0.0
    %437 = vmatpush1.msra.mxu0 0.0
    %438 = vmatprep.subr.mxu0 0.0
    %439 = vmatpush1.msra.mxu0 0.0
    %440 = vmatprep.subr.mxu0 0.0
    %441 = vmatpush1.msra.mxu0 0.0
    %442 = vmatprep.subr.mxu0 0.0
    %443 = vmatpush1.msra.mxu0 0.0
    %444 = vmatprep.subr.mxu0 0.0
    %445 = vmatpush1.msra.mxu0 0.0
    %446 = vmatprep.subr.mxu0 0.0
    %447 = vmatpush1.msra.mxu0 0.0
    %448 = vmatprep.subr.mxu0 0.0
    %449 = vmatpush1.msra.mxu0 0.0
    %450 = vmatprep.subr.mxu0 0.0
    %451 = vmatpush1.msra.mxu0 0.0
    %452 = vmatprep.subr.mxu0 0.0
    %453 = vmatpush1.msra.mxu0 0.0
    %454 = vmatprep.subr.mxu0 0.0
    %455 = vmatpush1.msra.mxu0 0.0
    %456 = vmatprep.subr.mxu0 0.0
    %457 = vmatpush1.msra.mxu0 %v114
    %458 = vmatprep.subr.mxu0 0.0
    %459 = vmatpush1.msra.mxu0 %v113
    %460 = vmatprep.subr.mxu0 0.0
    %461 = vmatpush1.msra.mxu0 %v112
    %462 = vmatprep.subr.mxu0 0.0
    %463 = vmatpush1.msra.mxu0 %v111
    %464 = vmatprep.subr.mxu0 0.0
    %465 = vmatpush2.msra.mxu0 0.0
    %466 = vmatprep.subr.mxu0 0.0
    %467 = vmatpush2.msra.mxu0 0.0
    %468 = vmatprep.subr.mxu0 0.0
    %469 = vmatpush2.msra.mxu0 0.0
    %470 = vmatprep.subr.mxu0 0.0
    %471 = vmatpush2.msra.mxu0 0.0
    %472 = vmatprep.subr.mxu0 0.0
    %473 = vmatpush2.msra.mxu0 0.0
    %474 = vmatprep.subr.mxu0 0.0
    %475 = vmatpush2.msra.mxu0 0.0
    %476 = vmatprep.subr.mxu0 0.0
    %477 = vmatpush2.msra.mxu0 0.0
    %478 = vmatprep.subr.mxu0 0.0
    %479 = vmatpush2.msra.mxu0 0.0
    %480 = vmatprep.subr.mxu0 0.0
    %481 = vmatpush2.msra.mxu0 0.0
    %482 = vmatprep.subr.mxu0 0.0
    %483 = vmatpush2.msra.mxu0 0.0
    %484 = vmatprep.subr.mxu0 0.0
    %485 = vmatpush2.msra.mxu0 0.0
    %486 = vmatprep.subr.mxu0 0.0
    %487 = vmatpush2.msra.mxu0 0.0
    %488 = vmatprep.subr.mxu0 0.0
    %489 = vmatpush2.msra.mxu0 0.0
    %490 = vmatprep.subr.mxu0 0.0
    %491 = vmatpush2.msra.mxu0 0.0
    %492 = vmatprep.subr.mxu0 0.0
    %493 = vmatpush2.msra.mxu0 0.0
    %494 = vmatprep.subr.mxu0 0.0
    %495 = vmatpush2.msra.mxu0 0.0
    %496 = vmatprep.mubr.f32.mxu0 0.0
    %497 = vmatmul.mubr.f32.gmra.mxu0 %v320
    %v498 = vpop.f32.mrf.mxu0
    %v499 = vadd.f32 %v430, %v498
    %v500 = vpop.f32.mrf.mxu0
    %501 = vdwg.mxu0
    %502 = vmatprep.subr.mxu0 0.0
    %503 = vmatpush1.msra.mxu0 0.0
    %504 = vmatprep.subr.mxu0 0.0
    %505 = vmatpush1.msra.mxu0 0.0
    %506 = vmatprep.subr.mxu0 0.0
    %507 = vmatpush1.msra.mxu0 0.0
    %508 = vmatprep.subr.mxu0 0.0
    %509 = vmatpush1.msra.mxu0 0.0
    %510 = vmatprep.subr.mxu0 0.0
    %511 = vmatpush1.msra.mxu0 0.0
    %512 = vmatprep.subr.mxu0 0.0
    %513 = vmatpush1.msra.mxu0 0.0
    %514 = vmatprep.subr.mxu0 0.0
    %515 = vmatpush1.msra.mxu0 0.0
    %516 = vmatprep.subr.mxu0 0.0
    %517 = vmatpush1.msra.mxu0 0.0
    %518 = vmatprep.subr.mxu0 0.0
    %519 = vmatpush1.msra.mxu0 0.0
    %520 = vmatprep.subr.mxu0 0.0
    %521 = vmatpush1.msra.mxu0 0.0
    %522 = vmatprep.subr.mxu0 0.0
    %523 = vmatpush1.msra.mxu0 0.0
    %524 = vmatprep.subr.mxu0 0.0
    %525 = vmatpush1.msra.mxu0 0.0
    %526 = vmatprep.subr.mxu0 0.0
    %527 = vmatpush1.msra.mxu0 %v118
    %528 = vmatprep.subr.mxu0 0.0
    %529 = vmatpush1.msra.mxu0 %v117
    %530 = vmatprep.subr.mxu0 0.0
    %531 = vmatpush1.msra.mxu0 %v116
    %532 = vmatprep.subr.mxu0 0.0
    %533 = vmatpush1.msra.mxu0 %v115
    %534 = vmatprep.subr.mxu0 0.0
    %535 = vmatpush2.msra.mxu0 0.0
    %536 = vmatprep.subr.mxu0 0.0
    %537 = vmatpush2.msra.mxu0 0.0
    %538 = vmatprep.subr.mxu0 0.0
    %539 = vmatpush2.msra.mxu0 0.0
    %540 = vmatprep.subr.mxu0 0.0
    %541 = vmatpush2.msra.mxu0 0.0
    %542 = vmatprep.subr.mxu0 0.0
    %543 = vmatpush2.msra.mxu0 0.0
    %544 = vmatprep.subr.mxu0 0.0
    %545 = vmatpush2.msra.mxu0 0.0
    %546 = vmatprep.subr.mxu0 0.0
    %547 = vmatpush2.msra.mxu0 0.0
    %548 = vmatprep.subr.mxu0 0.0
    %549 = vmatpush2.msra.mxu0 0.0
    %550 = vmatprep.subr.mxu0 0.0
    %551 = vmatpush2.msra.mxu0 0.0
    %552 = vmatprep.subr.mxu0 0.0
    %553 = vmatpush2.msra.mxu0 0.0
    %554 = vmatprep.subr.mxu0 0.0
    %555 = vmatpush2.msra.mxu0 0.0
    %556 = vmatprep.subr.mxu0 0.0
    %557 = vmatpush2.msra.mxu0 0.0
    %558 = vmatprep.subr.mxu0 0.0
    %559 = vmatpush2.msra.mxu0 0.0
    %560 = vmatprep.subr.mxu0 0.0
    %561 = vmatpush2.msra.mxu0 0.0
    %562 = vmatprep.subr.mxu0 0.0
    %563 = vmatpush2.msra.mxu0 0.0
    %564 = vmatprep.subr.mxu0 0.0
    %565 = vmatpush2.msra.mxu0 0.0
    %566 = vmatprep.mubr.f32.mxu0 0.0
    %567 = vmatmul.mubr.f32.gmra.mxu0 %v219
    %v568 = vpop.f32.mrf.mxu0
    %v569 = vadd.f32 0.0, %v568
    %v570 = vpop.f32.mrf.mxu0
    %571 = vdwg.mxu0
    %v572 = vadd.f32 %v499, %v569
    %v573 = vxor.u32 %v572, 2147483648
    %v574 = vmul.f32 %v573, 1.442695
    %v575 = vpow.pop %v574
    %v576 = vadd.f32 %v575, 1.0
    %v577 = vrcp.pop %v576
    %v578 = vmul.f32 1.0, %v577
    %v579 = vtanh.pop %v572
    %v580 = vmul.f32 %v578, 0.0
    %582 = vrot.lane.b32.xlu0 %v579, 32
    %v583 = vpop.permute.xlu0 %582
    %v585 = vmul.f32 %v578, %v583
    %587 = vrot.lane.b32.xlu0 %v585, 32
    %v588 = vpop.permute.xlu0 %587
    %v590 = vadd.f32 %v580, %v588
    %v591 = vtanh.pop %v590
    %593 = vrot.lane.b32.xlu0 %v591, 32
    %v594 = vpop.permute.xlu0 %593
    %v596 = vmul.f32 %v578, %v594
    %598 = vrot.lane.b32.xlu0 %v596, 64
    %v599 = vpop.permute.xlu0 %598
    %v600 = vsel %vm217, %v599, 0
    %602 = vmatprep.subr.mxu0 0.0
    %603 = vmatpush1.msra.mxu0 0.0
    %604 = vmatprep.subr.mxu0 0.0
    %605 = vmatpush1.msra.mxu0 0.0
    %606 = vmatprep.subr.mxu0 0.0
    %607 = vmatpush1.msra.mxu0 0.0
    %608 = vmatprep.subr.mxu0 0.0
    %609 = vmatpush1.msra.mxu0 0.0
    %610 = vmatprep.subr.mxu0 0.0
    %611 = vmatpush1.msra.mxu0 0.0
    %612 = vmatprep.subr.mxu0 0.0
    %613 = vmatpush1.msra.mxu0 0.0
    %614 = vmatprep.subr.mxu0 0.0
    %615 = vmatpush1.msra.mxu0 0.0
    %616 = vmatprep.subr.mxu0 0.0
    %617 = vmatpush1.msra.mxu0 0.0
    %618 = vmatprep.subr.mxu0 0.0
    %619 = vmatpush1.msra.mxu0 0.0
    %620 = vmatprep.subr.mxu0 0.0
    %621 = vmatpush1.msra.mxu0 0.0
    %622 = vmatprep.subr.mxu0 0.0
    %623 = vmatpush1.msra.mxu0 0.0
    %624 = vmatprep.subr.mxu0 0.0
    %625 = vmatpush1.msra.mxu0 0.0
    %626 = vmatprep.subr.mxu0 0.0
    %627 = vmatpush1.msra.mxu0 %v123
    %628 = vmatprep.subr.mxu0 0.0
    %629 = vmatpush1.msra.mxu0 %v122
    %630 = vmatprep.subr.mxu0 0.0
    %631 = vmatpush1.msra.mxu0 %v121
    %632 = vmatprep.subr.mxu0 0.0
    %633 = vmatpush1.msra.mxu0 %v120
    %634 = vmatprep.subr.mxu0 0.0
    %635 = vmatpush2.msra.mxu0 0.0
    %636 = vmatprep.subr.mxu0 0.0
    %637 = vmatpush2.msra.mxu0 0.0
    %638 = vmatprep.subr.mxu0 0.0
    %639 = vmatpush2.msra.mxu0 0.0
    %640 = vmatprep.subr.mxu0 0.0
    %641 = vmatpush2.msra.mxu0 0.0
    %642 = vmatprep.subr.mxu0 0.0
    %643 = vmatpush2.msra.mxu0 0.0
    %644 = vmatprep.subr.mxu0 0.0
    %645 = vmatpush2.msra.mxu0 0.0
    %646 = vmatprep.subr.mxu0 0.0
    %647 = vmatpush2.msra.mxu0 0.0
    %648 = vmatprep.subr.mxu0 0.0
    %649 = vmatpush2.msra.mxu0 0.0
    %650 = vmatprep.subr.mxu0 0.0
    %651 = vmatpush2.msra.mxu0 0.0
    %652 = vmatprep.subr.mxu0 0.0
    %653 = vmatpush2.msra.mxu0 0.0
    %654 = vmatprep.subr.mxu0 0.0
    %655 = vmatpush2.msra.mxu0 0.0
    %656 = vmatprep.subr.mxu0 0.0
    %657 = vmatpush2.msra.mxu0 0.0
    %658 = vmatprep.subr.mxu0 0.0
    %659 = vmatpush2.msra.mxu0 0.0
    %660 = vmatprep.subr.mxu0 0.0
    %661 = vmatpush2.msra.mxu0 0.0
    %662 = vmatprep.subr.mxu0 0.0
    %663 = vmatpush2.msra.mxu0 0.0
    %664 = vmatprep.subr.mxu0 0.0
    %665 = vmatpush2.msra.mxu0 0.0
    %666 = vmatprep.mubr.f32.mxu0 0.0
    %667 = vmatmul.mubr.f32.gmra.mxu0 %v600
    %v668 = vpop.f32.mrf.mxu0
    %v669 = vadd.f32 0.0, %v668
    %v670 = vpop.f32.mrf.mxu0
    %671 = vdwg.mxu0
    %vm672 = vcmp.eq.s32.totalorder %v216, 0
    %674 = vset.pattern.permute.xlu0 0
    %675 = vperm.xlu0 %674, %v669
    %v676 = vpop.permute.xlu0 %675
    %v678 = vsel %vm672, %v676, 0.0
    %v679 = vmax.f32 %v669, -1e+30
    %v680 = vsub.f32 -1e+30, %v679
    %v681 = vmul.f32 %v680, 1.442695
    %v682 = vpow.pop %v681
    %v683 = vsub.f32 %v669, %v679
    %v684 = vmul.f32 %v683, 1.442695
    %v685 = vpow.pop %v684
    %v686 = vmul.f32 %v682, 0.0
    %v687 = vadd.f32 %v686, %v685
    %689 = vset.pattern.permute.xlu0 0
    %690 = vperm.xlu0 %689, %v682
    %v691 = vpop.permute.xlu0 %690
    %v693 = vmul.f32 %v691, 0.0
    %695 = vset.pattern.permute.xlu0 0
    %696 = vperm.xlu0 %695, %v685
    %v697 = vpop.permute.xlu0 %696
    %v699 = vmul.f32 %v697, %v596
    %v700 = vadd.f32 %v693, %v699
    %v702 = vrot.slane %v422, 2
    %703 = vrot.lane.b32.xlu0 %v702, 64
    %v704 = vpop.permute.xlu0 %703
    %v705 = vsel %vm217, %v704, 0
    %707 = vmatprep.subr.mxu0 0.0
    %708 = vmatpush1.msra.mxu0 0.0
    %709 = vmatprep.subr.mxu0 0.0
    %710 = vmatpush1.msra.mxu0 0.0
    %711 = vmatprep.subr.mxu0 0.0
    %712 = vmatpush1.msra.mxu0 0.0
    %713 = vmatprep.subr.mxu0 0.0
    %714 = vmatpush1.msra.mxu0 0.0
    %715 = vmatprep.subr.mxu0 0.0
    %716 = vmatpush1.msra.mxu0 0.0
    %717 = vmatprep.subr.mxu0 0.0
    %718 = vmatpush1.msra.mxu0 0.0
    %719 = vmatprep.subr.mxu0 0.0
    %720 = vmatpush1.msra.mxu0 0.0
    %721 = vmatprep.subr.mxu0 0.0
    %722 = vmatpush1.msra.mxu0 0.0
    %723 = vmatprep.subr.mxu0 0.0
    %724 = vmatpush1.msra.mxu0 0.0
    %725 = vmatprep.subr.mxu0 0.0
    %726 = vmatpush1.msra.mxu0 0.0
    %727 = vmatprep.subr.mxu0 0.0
    %728 = vmatpush1.msra.mxu0 0.0
    %729 = vmatprep.subr.mxu0 0.0
    %730 = vmatpush1.msra.mxu0 0.0
    %731 = vmatprep.subr.mxu0 0.0
    %732 = vmatpush1.msra.mxu0 %v110
    %733 = vmatprep.subr.mxu0 0.0
    %734 = vmatpush1.msra.mxu0 %v109
    %735 = vmatprep.subr.mxu0 0.0
    %736 = vmatpush1.msra.mxu0 %v108
    %737 = vmatprep.subr.mxu0 0.0
    %738 = vmatpush1.msra.mxu0 %v107
    %739 = vmatprep.subr.mxu0 0.0
    %740 = vmatpush2.msra.mxu0 0.0
    %741 = vmatprep.subr.mxu0 0.0
    %742 = vmatpush2.msra.mxu0 0.0
    %743 = vmatprep.subr.mxu0 0.0
    %744 = vmatpush2.msra.mxu0 0.0
    %745 = vmatprep.subr.mxu0 0.0
    %746 = vmatpush2.msra.mxu0 0.0
    %747 = vmatprep.subr.mxu0 0.0
    %748 = vmatpush2.msra.mxu0 0.0
    %749 = vmatprep.subr.mxu0 0.0
    %750 = vmatpush2.msra.mxu0 0.0
    %751 = vmatprep.subr.mxu0 0.0
    %752 = vmatpush2.msra.mxu0 0.0
    %753 = vmatprep.subr.mxu0 0.0
    %754 = vmatpush2.msra.mxu0 0.0
    %755 = vmatprep.subr.mxu0 0.0
    %756 = vmatpush2.msra.mxu0 0.0
    %757 = vmatprep.subr.mxu0 0.0
    %758 = vmatpush2.msra.mxu0 0.0
    %759 = vmatprep.subr.mxu0 0.0
    %760 = vmatpush2.msra.mxu0 0.0
    %761 = vmatprep.subr.mxu0 0.0
    %762 = vmatpush2.msra.mxu0 0.0
    %763 = vmatprep.subr.mxu0 0.0
    %764 = vmatpush2.msra.mxu0 0.0
    %765 = vmatprep.subr.mxu0 0.0
    %766 = vmatpush2.msra.mxu0 0.0
    %767 = vmatprep.subr.mxu0 0.0
    %768 = vmatpush2.msra.mxu0 0.0
    %769 = vmatprep.subr.mxu0 0.0
    %770 = vmatpush2.msra.mxu0 0.0
    %771 = vmatprep.mubr.f32.mxu0 0.0
    %772 = vmatmul.mubr.f32.gmra.mxu0 %v705
    %v773 = vpop.f32.mrf.mxu0
    %v774 = vadd.f32 0.0, %v773
    %v775 = vpop.f32.mrf.mxu0
    %776 = vdwg.mxu0
    %v778 = vrot.slane %v774, 4
    %v780 = vadd.f32 %v207, %v778
    %v781 = vxor.u32 %v780, 2147483648
    %v782 = vmul.f32 %v781, 1.442695
    %v783 = vpow.pop %v782
    %v784 = vadd.f32 %v783, 1.0
    %v785 = vrcp.pop %v784
    %v786 = vmul.f32 1.0, %v785
    %v787 = vtanh.pop %v780
    %v789 = vrot.slane %v416, 6
    %v791 = vmul.f32 %v786, %v789
    %793 = vrot.lane.b32.xlu0 %v787, 32
    %v794 = vpop.permute.xlu0 %793
    %v796 = vmul.f32 %v786, %v794
    %798 = vrot.lane.b32.xlu0 %v796, 32
    %v799 = vpop.permute.xlu0 %798
    %v801 = vadd.f32 %v791, %v799
    %v802 = vtanh.pop %v801
    %804 = vrot.lane.b32.xlu0 %v802, 32
    %v805 = vpop.permute.xlu0 %804
    %v807 = vmul.f32 %v786, %v805
    %v808 = vrot.slane %v105, 4
    %v810 = vadd.f32 %v425, %v808
    %811 = vmatprep.subr.mxu0 0.0
    %812 = vmatpush1.msra.mxu0 0.0
    %813 = vmatprep.subr.mxu0 0.0
    %814 = vmatpush1.msra.mxu0 0.0
    %815 = vmatprep.subr.mxu0 0.0
    %816 = vmatpush1.msra.mxu0 0.0
    %817 = vmatprep.subr.mxu0 0.0
    %818 = vmatpush1.msra.mxu0 0.0
    %819 = vmatprep.subr.mxu0 0.0
    %820 = vmatpush1.msra.mxu0 0.0
    %821 = vmatprep.subr.mxu0 0.0
    %822 = vmatpush1.msra.mxu0 0.0
    %823 = vmatprep.subr.mxu0 0.0
    %824 = vmatpush1.msra.mxu0 0.0
    %825 = vmatprep.subr.mxu0 0.0
    %826 = vmatpush1.msra.mxu0 0.0
    %827 = vmatprep.subr.mxu0 0.0
    %828 = vmatpush1.msra.mxu0 0.0
    %829 = vmatprep.subr.mxu0 0.0
    %830 = vmatpush1.msra.mxu0 0.0
    %831 = vmatprep.subr.mxu0 0.0
    %832 = vmatpush1.msra.mxu0 0.0
    %833 = vmatprep.subr.mxu0 0.0
    %834 = vmatpush1.msra.mxu0 0.0
    %835 = vmatprep.subr.mxu0 0.0
    %836 = vmatpush1.msra.mxu0 %v114
    %837 = vmatprep.subr.mxu0 0.0
    %838 = vmatpush1.msra.mxu0 %v113
    %839 = vmatprep.subr.mxu0 0.0
    %840 = vmatpush1.msra.mxu0 %v112
    %841 = vmatprep.subr.mxu0 0.0
    %842 = vmatpush1.msra.mxu0 %v111
    %843 = vmatprep.subr.mxu0 0.0
    %844 = vmatpush2.msra.mxu0 0.0
    %845 = vmatprep.subr.mxu0 0.0
    %846 = vmatpush2.msra.mxu0 0.0
    %847 = vmatprep.subr.mxu0 0.0
    %848 = vmatpush2.msra.mxu0 0.0
    %849 = vmatprep.subr.mxu0 0.0
    %850 = vmatpush2.msra.mxu0 0.0
    %851 = vmatprep.subr.mxu0 0.0
    %852 = vmatpush2.msra.mxu0 0.0
    %853 = vmatprep.subr.mxu0 0.0
    %854 = vmatpush2.msra.mxu0 0.0
    %855 = vmatprep.subr.mxu0 0.0
    %856 = vmatpush2.msra.mxu0 0.0
    %857 = vmatprep.subr.mxu0 0.0
    %858 = vmatpush2.msra.mxu0 0.0
    %859 = vmatprep.subr.mxu0 0.0
    %860 = vmatpush2.msra.mxu0 0.0
    %861 = vmatprep.subr.mxu0 0.0
    %862 = vmatpush2.msra.mxu0 0.0
    %863 = vmatprep.subr.mxu0 0.0
    %864 = vmatpush2.msra.mxu0 0.0
    %865 = vmatprep.subr.mxu0 0.0
    %866 = vmatpush2.msra.mxu0 0.0
    %867 = vmatprep.subr.mxu0 0.0
    %868 = vmatpush2.msra.mxu0 0.0
    %869 = vmatprep.subr.mxu0 0.0
    %870 = vmatpush2.msra.mxu0 0.0
    %871 = vmatprep.subr.mxu0 0.0
    %872 = vmatpush2.msra.mxu0 0.0
    %873 = vmatprep.subr.mxu0 0.0
    %874 = vmatpush2.msra.mxu0 0.0
    %875 = vmatprep.mubr.f32.mxu0 0.0
    %876 = vmatmul.mubr.f32.gmra.mxu0 %v705
    %v877 = vpop.f32.mrf.mxu0
    %v878 = vadd.f32 %v430, %v877
    %v879 = vpop.f32.mrf.mxu0
    %880 = vdwg.mxu0
    %881 = vmatprep.subr.mxu0 0.0
    %882 = vmatpush1.msra.mxu0 0.0
    %883 = vmatprep.subr.mxu0 0.0
    %884 = vmatpush1.msra.mxu0 0.0
    %885 = vmatprep.subr.mxu0 0.0
    %886 = vmatpush1.msra.mxu0 0.0
    %887 = vmatprep.subr.mxu0 0.0
    %888 = vmatpush1.msra.mxu0 0.0
    %889 = vmatprep.subr.mxu0 0.0
    %890 = vmatpush1.msra.mxu0 0.0
    %891 = vmatprep.subr.mxu0 0.0
    %892 = vmatpush1.msra.mxu0 0.0
    %893 = vmatprep.subr.mxu0 0.0
    %894 = vmatpush1.msra.mxu0 0.0
    %895 = vmatprep.subr.mxu0 0.0
    %896 = vmatpush1.msra.mxu0 0.0
    %897 = vmatprep.subr.mxu0 0.0
    %898 = vmatpush1.msra.mxu0 0.0
    %899 = vmatprep.subr.mxu0 0.0
    %900 = vmatpush1.msra.mxu0 0.0
    %901 = vmatprep.subr.mxu0 0.0
    %902 = vmatpush1.msra.mxu0 0.0
    %903 = vmatprep.subr.mxu0 0.0
    %904 = vmatpush1.msra.mxu0 0.0
    %905 = vmatprep.subr.mxu0 0.0
    %906 = vmatpush1.msra.mxu0 %v118
    %907 = vmatprep.subr.mxu0 0.0
    %908 = vmatpush1.msra.mxu0 %v117
    %909 = vmatprep.subr.mxu0 0.0
    %910 = vmatpush1.msra.mxu0 %v116
    %911 = vmatprep.subr.mxu0 0.0
    %912 = vmatpush1.msra.mxu0 %v115
    %913 = vmatprep.subr.mxu0 0.0
    %914 = vmatpush2.msra.mxu0 0.0
    %915 = vmatprep.subr.mxu0 0.0
    %916 = vmatpush2.msra.mxu0 0.0
    %917 = vmatprep.subr.mxu0 0.0
    %918 = vmatpush2.msra.mxu0 0.0
    %919 = vmatprep.subr.mxu0 0.0
    %920 = vmatpush2.msra.mxu0 0.0
    %921 = vmatprep.subr.mxu0 0.0
    %922 = vmatpush2.msra.mxu0 0.0
    %923 = vmatprep.subr.mxu0 0.0
    %924 = vmatpush2.msra.mxu0 0.0
    %925 = vmatprep.subr.mxu0 0.0
    %926 = vmatpush2.msra.mxu0 0.0
    %927 = vmatprep.subr.mxu0 0.0
    %928 = vmatpush2.msra.mxu0 0.0
    %929 = vmatprep.subr.mxu0 0.0
    %930 = vmatpush2.msra.mxu0 0.0
    %931 = vmatprep.subr.mxu0 0.0
    %932 = vmatpush2.msra.mxu0 0.0
    %933 = vmatprep.subr.mxu0 0.0
    %934 = vmatpush2.msra.mxu0 0.0
    %935 = vmatprep.subr.mxu0 0.0
    %936 = vmatpush2.msra.mxu0 0.0
    %937 = vmatprep.subr.mxu0 0.0
    %938 = vmatpush2.msra.mxu0 0.0
    %939 = vmatprep.subr.mxu0 0.0
    %940 = vmatpush2.msra.mxu0 0.0
    %941 = vmatprep.subr.mxu0 0.0
    %942 = vmatpush2.msra.mxu0 0.0
    %943 = vmatprep.subr.mxu0 0.0
    %944 = vmatpush2.msra.mxu0 0.0
    %945 = vmatprep.mubr.f32.mxu0 0.0
    %946 = vmatmul.mubr.f32.gmra.mxu0 %v600
    %v947 = vpop.f32.mrf.mxu0
    %v948 = vadd.f32 0.0, %v947
    %v949 = vpop.f32.mrf.mxu0
    %950 = vdwg.mxu0
    %v951 = vadd.f32 %v878, %v948
    %v952 = vxor.u32 %v951, 2147483648
    %v953 = vmul.f32 %v952, 1.442695
    %v954 = vpow.pop %v953
    %v955 = vadd.f32 %v954, 1.0
    %v956 = vrcp.pop %v955
    %v957 = vmul.f32 1.0, %v956
    %v958 = vtanh.pop %v951
    %v959 = vmul.f32 %v957, %v590
    %961 = vrot.lane.b32.xlu0 %v958, 32
    %v962 = vpop.permute.xlu0 %961
    %v964 = vmul.f32 %v957, %v962
    %966 = vrot.lane.b32.xlu0 %v964, 32
    %v967 = vpop.permute.xlu0 %966
    %v969 = vadd.f32 %v959, %v967
    %v970 = vtanh.pop %v969
    %972 = vrot.lane.b32.xlu0 %v970, 32
    %v973 = vpop.permute.xlu0 %972
    %v975 = vmul.f32 %v957, %v973
    %977 = vrot.lane.b32.xlu0 %v975, 64
    %v978 = vpop.permute.xlu0 %977
    %v979 = vsel %vm217, %v978, 0
    %981 = vmatprep.subr.mxu0 0.0
    %982 = vmatpush1.msra.mxu0 0.0
    %983 = vmatprep.subr.mxu0 0.0
    %984 = vmatpush1.msra.mxu0 0.0
    %985 = vmatprep.subr.mxu0 0.0
    %986 = vmatpush1.msra.mxu0 0.0
    %987 = vmatprep.subr.mxu0 0.0
    %988 = vmatpush1.msra.mxu0 0.0
    %989 = vmatprep.subr.mxu0 0.0
    %990 = vmatpush1.msra.mxu0 0.0
    %991 = vmatprep.subr.mxu0 0.0
    %992 = vmatpush1.msra.mxu0 0.0
    %993 = vmatprep.subr.mxu0 0.0
    %994 = vmatpush1.msra.mxu0 0.0
    %995 = vmatprep.subr.mxu0 0.0
    %996 = vmatpush1.msra.mxu0 0.0
    %997 = vmatprep.subr.mxu0 0.0
    %998 = vmatpush1.msra.mxu0 0.0
    %999 = vmatprep.subr.mxu0 0.0
    %1000 = vmatpush1.msra.mxu0 0.0
    %1001 = vmatprep.subr.mxu0 0.0
    %1002 = vmatpush1.msra.mxu0 0.0
    %1003 = vmatprep.subr.mxu0 0.0
    %1004 = vmatpush1.msra.mxu0 0.0
    %1005 = vmatprep.subr.mxu0 0.0
    %1006 = vmatpush1.msra.mxu0 %v123
    %1007 = vmatprep.subr.mxu0 0.0
    %1008 = vmatpush1.msra.mxu0 %v122
    %1009 = vmatprep.subr.mxu0 0.0
    %1010 = vmatpush1.msra.mxu0 %v121
    %1011 = vmatprep.subr.mxu0 0.0
    %1012 = vmatpush1.msra.mxu0 %v120
    %1013 = vmatprep.subr.mxu0 0.0
    %1014 = vmatpush2.msra.mxu0 0.0
    %1015 = vmatprep.subr.mxu0 0.0
    %1016 = vmatpush2.msra.mxu0 0.0
    %1017 = vmatprep.subr.mxu0 0.0
    %1018 = vmatpush2.msra.mxu0 0.0
    %1019 = vmatprep.subr.mxu0 0.0
    %1020 = vmatpush2.msra.mxu0 0.0
    %1021 = vmatprep.subr.mxu0 0.0
    %1022 = vmatpush2.msra.mxu0 0.0
    %1023 = vmatprep.subr.mxu0 0.0
    %1024 = vmatpush2.msra.mxu0 0.0
    %1025 = vmatprep.subr.mxu0 0.0
    %1026 = vmatpush2.msra.mxu0 0.0
    %1027 = vmatprep.subr.mxu0 0.0
    %1028 = vmatpush2.msra.mxu0 0.0
    %1029 = vmatprep.subr.mxu0 0.0
    %1030 = vmatpush2.msra.mxu0 0.0
    %1031 = vmatprep.subr.mxu0 0.0
    %1032 = vmatpush2.msra.mxu0 0.0
    %1033 = vmatprep.subr.mxu0 0.0
    %1034 = vmatpush2.msra.mxu0 0.0
    %1035 = vmatprep.subr.mxu0 0.0
    %1036 = vmatpush2.msra.mxu0 0.0
    %1037 = vmatprep.subr.mxu0 0.0
    %1038 = vmatpush2.msra.mxu0 0.0
    %1039 = vmatprep.subr.mxu0 0.0
    %1040 = vmatpush2.msra.mxu0 0.0
    %1041 = vmatprep.subr.mxu0 0.0
    %1042 = vmatpush2.msra.mxu0 0.0
    %1043 = vmatprep.subr.mxu0 0.0
    %1044 = vmatpush2.msra.mxu0 0.0
    %1045 = vmatprep.mubr.f32.mxu0 0.0
    %1046 = vmatmul.mubr.f32.gmra.mxu0 %v979
    %v1047 = vpop.f32.mrf.mxu0
    %v1048 = vadd.f32 0.0, %v1047
    %v1049 = vpop.f32.mrf.mxu0
    %1050 = vdwg.mxu0
    %vm1051 = vcmp.eq.s32.totalorder %v216, 1
    %1053 = vset.pattern.permute.xlu0 0
    %1054 = vperm.xlu0 %1053, %v1048
    %v1055 = vpop.permute.xlu0 %1054
    %v1057 = vsel %vm1051, %v1055, %v678
    %v1058 = vmax.f32 %v679, %v1048
    %v1059 = vsub.f32 %v679, %v1058
    %v1060 = vmul.f32 %v1059, 1.442695
    %v1061 = vpow.pop %v1060
    %v1062 = vsub.f32 %v1048, %v1058
    %v1063 = vmul.f32 %v1062, 1.442695
    %v1064 = vpow.pop %v1063
    %v1065 = vmul.f32 %v1061, %v687
    %v1066 = vadd.f32 %v1065, %v1064
    %1068 = vset.pattern.permute.xlu0 0
    %1069 = vperm.xlu0 %1068, %v1061
    %v1070 = vpop.permute.xlu0 %1069
    %v1072 = vmul.f32 %v1070, %v700
    %1074 = vset.pattern.permute.xlu0 0
    %1075 = vperm.xlu0 %1074, %v1064
    %v1076 = vpop.permute.xlu0 %1075
    %v1078 = vmul.f32 %v1076, %v975
    %v1079 = vadd.f32 %v1072, %v1078
    %v1081 = vrot.slane %v807, 4
    %1082 = vrot.lane.b32.xlu0 %v1081, 64
    %v1083 = vpop.permute.xlu0 %1082
    %v1084 = vsel %vm217, %v1083, 0
    %1086 = vmatprep.subr.mxu0 0.0
    %1087 = vmatpush1.msra.mxu0 0.0
    %1088 = vmatprep.subr.mxu0 0.0
    %1089 = vmatpush1.msra.mxu0 0.0
    %1090 = vmatprep.subr.mxu0 0.0
    %1091 = vmatpush1.msra.mxu0 0.0
    %1092 = vmatprep.subr.mxu0 0.0
    %1093 = vmatpush1.msra.mxu0 0.0
    %1094 = vmatprep.subr.mxu0 0.0
    %1095 = vmatpush1.msra.mxu0 0.0
    %1096 = vmatprep.subr.mxu0 0.0
    %1097 = vmatpush1.msra.mxu0 0.0
    %1098 = vmatprep.subr.mxu0 0.0
    %1099 = vmatpush1.msra.mxu0 0.0
    %1100 = vmatprep.subr.mxu0 0.0
    %1101 = vmatpush1.msra.mxu0 0.0
    %1102 = vmatprep.subr.mxu0 0.0
    %1103 = vmatpush1.msra.mxu0 0.0
    %1104 = vmatprep.subr.mxu0 0.0
    %1105 = vmatpush1.msra.mxu0 0.0
    %1106 = vmatprep.subr.mxu0 0.0
    %1107 = vmatpush1.msra.mxu0 0.0
    %1108 = vmatprep.subr.mxu0 0.0
    %1109 = vmatpush1.msra.mxu0 0.0
    %1110 = vmatprep.subr.mxu0 0.0
    %1111 = vmatpush1.msra.mxu0 %v110
    %1112 = vmatprep.subr.mxu0 0.0
    %1113 = vmatpush1.msra.mxu0 %v109
    %1114 = vmatprep.subr.mxu0 0.0
    %1115 = vmatpush1.msra.mxu0 %v108
    %1116 = vmatprep.subr.mxu0 0.0
    %1117 = vmatpush1.msra.mxu0 %v107
    %1118 = vmatprep.subr.mxu0 0.0
    %1119 = vmatpush2.msra.mxu0 0.0
    %1120 = vmatprep.subr.mxu0 0.0
    %1121 = vmatpush2.msra.mxu0 0.0
    %1122 = vmatprep.subr.mxu0 0.0
    %1123 = vmatpush2.msra.mxu0 0.0
    %1124 = vmatprep.subr.mxu0 0.0
    %1125 = vmatpush2.msra.mxu0 0.0
    %1126 = vmatprep.subr.mxu0 0.0
    %1127 = vmatpush2.msra.mxu0 0.0
    %1128 = vmatprep.subr.mxu0 0.0
    %1129 = vmatpush2.msra.mxu0 0.0
    %1130 = vmatprep.subr.mxu0 0.0
    %1131 = vmatpush2.msra.mxu0 0.0
    %1132 = vmatprep.subr.mxu0 0.0
    %1133 = vmatpush2.msra.mxu0 0.0
    %1134 = vmatprep.subr.mxu0 0.0
    %1135 = vmatpush2.msra.mxu0 0.0
    %1136 = vmatprep.subr.mxu0 0.0
    %1137 = vmatpush2.msra.mxu0 0.0
    %1138 = vmatprep.subr.mxu0 0.0
    %1139 = vmatpush2.msra.mxu0 0.0
    %1140 = vmatprep.subr.mxu0 0.0
    %1141 = vmatpush2.msra.mxu0 0.0
    %1142 = vmatprep.subr.mxu0 0.0
    %1143 = vmatpush2.msra.mxu0 0.0
    %1144 = vmatprep.subr.mxu0 0.0
    %1145 = vmatpush2.msra.mxu0 0.0
    %1146 = vmatprep.subr.mxu0 0.0
    %1147 = vmatpush2.msra.mxu0 0.0
    %1148 = vmatprep.subr.mxu0 0.0
    %1149 = vmatpush2.msra.mxu0 0.0
    %1150 = vmatprep.mubr.f32.mxu0 0.0
    %1151 = vmatmul.mubr.f32.gmra.mxu0 %v1084
    %v1152 = vpop.f32.mrf.mxu0
    %v1153 = vadd.f32 0.0, %v1152
    %v1154 = vpop.f32.mrf.mxu0
    %1155 = vdwg.mxu0
    %v1157 = vrot.slane %v1153, 2
    %v1159 = vadd.f32 %v207, %v1157
    %v1160 = vxor.u32 %v1159, 2147483648
    %v1161 = vmul.f32 %v1160, 1.442695
    %v1162 = vpow.pop %v1161
    %v1163 = vadd.f32 %v1162, 1.0
    %v1164 = vrcp.pop %v1163
    %v1165 = vmul.f32 1.0, %v1164
    %v1166 = vtanh.pop %v1159
    %v1168 = vrot.slane %v801, 6
    %v1170 = vmul.f32 %v1165, %v1168
    %1172 = vrot.lane.b32.xlu0 %v1166, 32
    %v1173 = vpop.permute.xlu0 %1172
    %v1175 = vmul.f32 %v1165, %v1173
    %1177 = vrot.lane.b32.xlu0 %v1175, 32
    %v1178 = vpop.permute.xlu0 %1177
    %v1180 = vadd.f32 %v1170, %v1178
    %v1181 = vtanh.pop %v1180
    %1183 = vrot.lane.b32.xlu0 %v1181, 32
    %v1184 = vpop.permute.xlu0 %1183
    %v1186 = vmul.f32 %v1165, %v1184
    %v1187 = vrot.slane %v105, 6
    %v1189 = vadd.f32 %v810, %v1187
    %1190 = vmatprep.subr.mxu0 0.0
    %1191 = vmatpush1.msra.mxu0 0.0
    %1192 = vmatprep.subr.mxu0 0.0
    %1193 = vmatpush1.msra.mxu0 0.0
    %1194 = vmatprep.subr.mxu0 0.0
    %1195 = vmatpush1.msra.mxu0 0.0
    %1196 = vmatprep.subr.mxu0 0.0
    %1197 = vmatpush1.msra.mxu0 0.0
    %1198 = vmatprep.subr.mxu0 0.0
    %1199 = vmatpush1.msra.mxu0 0.0
    %1200 = vmatprep.subr.mxu0 0.0
    %1201 = vmatpush1.msra.mxu0 0.0
    %1202 = vmatprep.subr.mxu0 0.0
    %1203 = vmatpush1.msra.mxu0 0.0
    %1204 = vmatprep.subr.mxu0 0.0
    %1205 = vmatpush1.msra.mxu0 0.0
    %1206 = vmatprep.subr.mxu0 0.0
    %1207 = vmatpush1.msra.mxu0 0.0
    %1208 = vmatprep.subr.mxu0 0.0
    %1209 = vmatpush1.msra.mxu0 0.0
    %1210 = vmatprep.subr.mxu0 0.0
    %1211 = vmatpush1.msra.mxu0 0.0
    %1212 = vmatprep.subr.mxu0 0.0
    %1213 = vmatpush1.msra.mxu0 0.0
    %1214 = vmatprep.subr.mxu0 0.0
    %1215 = vmatpush1.msra.mxu0 %v114
    %1216 = vmatprep.subr.mxu0 0.0
    %1217 = vmatpush1.msra.mxu0 %v113
    %1218 = vmatprep.subr.mxu0 0.0
    %1219 = vmatpush1.msra.mxu0 %v112
    %1220 = vmatprep.subr.mxu0 0.0
    %1221 = vmatpush1.msra.mxu0 %v111
    %1222 = vmatprep.subr.mxu0 0.0
    %1223 = vmatpush2.msra.mxu0 0.0
    %1224 = vmatprep.subr.mxu0 0.0
    %1225 = vmatpush2.msra.mxu0 0.0
    %1226 = vmatprep.subr.mxu0 0.0
    %1227 = vmatpush2.msra.mxu0 0.0
    %1228 = vmatprep.subr.mxu0 0.0
    %1229 = vmatpush2.msra.mxu0 0.0
    %1230 = vmatprep.subr.mxu0 0.0
    %1231 = vmatpush2.msra.mxu0 0.0
    %1232 = vmatprep.subr.mxu0 0.0
    %1233 = vmatpush2.msra.mxu0 0.0
    %1234 = vmatprep.subr.mxu0 0.0
    %1235 = vmatpush2.msra.mxu0 0.0
    %1236 = vmatprep.subr.mxu0 0.0
    %1237 = vmatpush2.msra.mxu0 0.0
    %1238 = vmatprep.subr.mxu0 0.0
    %1239 = vmatpush2.msra.mxu0 0.0
    %1240 = vmatprep.subr.mxu0 0.0
    %1241 = vmatpush2.msra.mxu0 0.0
    %1242 = vmatprep.subr.mxu0 0.0
    %1243 = vmatpush2.msra.mxu0 0.0
    %1244 = vmatprep.subr.mxu0 0.0
    %1245 = vmatpush2.msra.mxu0 0.0
    %1246 = vmatprep.subr.mxu0 0.0
    %1247 = vmatpush2.msra.mxu0 0.0
    %1248 = vmatprep.subr.mxu0 0.0
    %1249 = vmatpush2.msra.mxu0 0.0
    %1250 = vmatprep.subr.mxu0 0.0
    %1251 = vmatpush2.msra.mxu0 0.0
    %1252 = vmatprep.subr.mxu0 0.0
    %1253 = vmatpush2.msra.mxu0 0.0
    %1254 = vmatprep.mubr.f32.mxu0 0.0
    %1255 = vmatmul.mubr.f32.gmra.mxu0 %v1084
    %v1256 = vpop.f32.mrf.mxu0
    %v1257 = vadd.f32 %v430, %v1256
    %v1258 = vpop.f32.mrf.mxu0
    %1259 = vdwg.mxu0
    %1260 = vmatprep.subr.mxu0 0.0
    %1261 = vmatpush1.msra.mxu0 0.0
    %1262 = vmatprep.subr.mxu0 0.0
    %1263 = vmatpush1.msra.mxu0 0.0
    %1264 = vmatprep.subr.mxu0 0.0
    %1265 = vmatpush1.msra.mxu0 0.0
    %1266 = vmatprep.subr.mxu0 0.0
    %1267 = vmatpush1.msra.mxu0 0.0
    %1268 = vmatprep.subr.mxu0 0.0
    %1269 = vmatpush1.msra.mxu0 0.0
    %1270 = vmatprep.subr.mxu0 0.0
    %1271 = vmatpush1.msra.mxu0 0.0
    %1272 = vmatprep.subr.mxu0 0.0
    %1273 = vmatpush1.msra.mxu0 0.0
    %1274 = vmatprep.subr.mxu0 0.0
    %1275 = vmatpush1.msra.mxu0 0.0
    %1276 = vmatprep.subr.mxu0 0.0
    %1277 = vmatpush1.msra.mxu0 0.0
    %1278 = vmatprep.subr.mxu0 0.0
    %1279 = vmatpush1.msra.mxu0 0.0
    %1280 = vmatprep.subr.mxu0 0.0
    %1281 = vmatpush1.msra.mxu0 0.0
    %1282 = vmatprep.subr.mxu0 0.0
    %1283 = vmatpush1.msra.mxu0 0.0
    %1284 = vmatprep.subr.mxu0 0.0
    %1285 = vmatpush1.msra.mxu0 %v118
    %1286 = vmatprep.subr.mxu0 0.0
    %1287 = vmatpush1.msra.mxu0 %v117
    %1288 = vmatprep.subr.mxu0 0.0
    %1289 = vmatpush1.msra.mxu0 %v116
    %1290 = vmatprep.subr.mxu0 0.0
    %1291 = vmatpush1.msra.mxu0 %v115
    %1292 = vmatprep.subr.mxu0 0.0
    %1293 = vmatpush2.msra.mxu0 0.0
    %1294 = vmatprep.subr.mxu0 0.0
    %1295 = vmatpush2.msra.mxu0 0.0
    %1296 = vmatprep.subr.mxu0 0.0
    %1297 = vmatpush2.msra.mxu0 0.0
    %1298 = vmatprep.subr.mxu0 0.0
    %1299 = vmatpush2.msra.mxu0 0.0
    %1300 = vmatprep.subr.mxu0 0.0
    %1301 = vmatpush2.msra.mxu0 0.0
    %1302 = vmatprep.subr.mxu0 0.0
    %1303 = vmatpush2.msra.mxu0 0.0
    %1304 = vmatprep.subr.mxu0 0.0
    %1305 = vmatpush2.msra.mxu0 0.0
    %1306 = vmatprep.subr.mxu0 0.0
    %1307 = vmatpush2.msra.mxu0 0.0
    %1308 = vmatprep.subr.mxu0 0.0
    %1309 = vmatpush2.msra.mxu0 0.0
    %1310 = vmatprep.subr.mxu0 0.0
    %1311 = vmatpush2.msra.mxu0 0.0
    %1312 = vmatprep.subr.mxu0 0.0
    %1313 = vmatpush2.msra.mxu0 0.0
    %1314 = vmatprep.subr.mxu0 0.0
    %1315 = vmatpush2.msra.mxu0 0.0
    %1316 = vmatprep.subr.mxu0 0.0
    %1317 = vmatpush2.msra.mxu0 0.0
    %1318 = vmatprep.subr.mxu0 0.0
    %1319 = vmatpush2.msra.mxu0 0.0
    %1320 = vmatprep.subr.mxu0 0.0
    %1321 = vmatpush2.msra.mxu0 0.0
    %1322 = vmatprep.subr.mxu0 0.0
    %1323 = vmatpush2.msra.mxu0 0.0
    %1324 = vmatprep.mubr.f32.mxu0 0.0
    %1325 = vmatmul.mubr.f32.gmra.mxu0 %v979
    %v1326 = vpop.f32.mrf.mxu0
    %v1327 = vadd.f32 0.0, %v1326
    %v1328 = vpop.f32.mrf.mxu0
    %1329 = vdwg.mxu0
    %v1330 = vadd.f32 %v1257, %v1327
    %v1331 = vxor.u32 %v1330, 2147483648
    %v1332 = vmul.f32 %v1331, 1.442695
    %v1333 = vpow.pop %v1332
    %v1334 = vadd.f32 %v1333, 1.0
    %v1335 = vrcp.pop %v1334
    %v1336 = vmul.f32 1.0, %v1335
    %v1337 = vtanh.pop %v1330
    %v1338 = vmul.f32 %v1336, %v969
    %1340 = vrot.lane.b32.xlu0 %v1337, 32
    %v1341 = vpop.permute.xlu0 %1340
    %v1343 = vmul.f32 %v1336, %v1341
    %1345 = vrot.lane.b32.xlu0 %v1343, 32
    %v1346 = vpop.permute.xlu0 %1345
    %v1348 = vadd.f32 %v1338, %v1346
    %v1349 = vtanh.pop %v1348
    %1351 = vrot.lane.b32.xlu0 %v1349, 32
    %v1352 = vpop.permute.xlu0 %1351
    %v1354 = vmul.f32 %v1336, %v1352
    %1356 = vrot.lane.b32.xlu0 %v1354, 64
    %v1357 = vpop.permute.xlu0 %1356
    %v1358 = vsel %vm217, %v1357, 0
    %1360 = vmatprep.subr.mxu0 0.0
    %1361 = vmatpush1.msra.mxu0 0.0
    %1362 = vmatprep.subr.mxu0 0.0
    %1363 = vmatpush1.msra.mxu0 0.0
    %1364 = vmatprep.subr.mxu0 0.0
    %1365 = vmatpush1.msra.mxu0 0.0
    %1366 = vmatprep.subr.mxu0 0.0
    %1367 = vmatpush1.msra.mxu0 0.0
    %1368 = vmatprep.subr.mxu0 0.0
    %1369 = vmatpush1.msra.mxu0 0.0
    %1370 = vmatprep.subr.mxu0 0.0
    %1371 = vmatpush1.msra.mxu0 0.0
    %1372 = vmatprep.subr.mxu0 0.0
    %1373 = vmatpush1.msra.mxu0 0.0
    %1374 = vmatprep.subr.mxu0 0.0
    %1375 = vmatpush1.msra.mxu0 0.0
    %1376 = vmatprep.subr.mxu0 0.0
    %1377 = vmatpush1.msra.mxu0 0.0
    %1378 = vmatprep.subr.mxu0 0.0
    %1379 = vmatpush1.msra.mxu0 0.0
    %1380 = vmatprep.subr.mxu0 0.0
    %1381 = vmatpush1.msra.mxu0 0.0
    %1382 = vmatprep.subr.mxu0 0.0
    %1383 = vmatpush1.msra.mxu0 0.0
    %1384 = vmatprep.subr.mxu0 0.0
    %1385 = vmatpush1.msra.mxu0 %v123
    %1386 = vmatprep.subr.mxu0 0.0
    %1387 = vmatpush1.msra.mxu0 %v122
    %1388 = vmatprep.subr.mxu0 0.0
    %1389 = vmatpush1.msra.mxu0 %v121
    %1390 = vmatprep.subr.mxu0 0.0
    %1391 = vmatpush1.msra.mxu0 %v120
    %1392 = vmatprep.subr.mxu0 0.0
    %1393 = vmatpush2.msra.mxu0 0.0
    %1394 = vmatprep.subr.mxu0 0.0
    %1395 = vmatpush2.msra.mxu0 0.0
    %1396 = vmatprep.subr.mxu0 0.0
    %1397 = vmatpush2.msra.mxu0 0.0
    %1398 = vmatprep.subr.mxu0 0.0
    %1399 = vmatpush2.msra.mxu0 0.0
    %1400 = vmatprep.subr.mxu0 0.0
    %1401 = vmatpush2.msra.mxu0 0.0
    %1402 = vmatprep.subr.mxu0 0.0
    %1403 = vmatpush2.msra.mxu0 0.0
    %1404 = vmatprep.subr.mxu0 0.0
    %1405 = vmatpush2.msra.mxu0 0.0
    %1406 = vmatprep.subr.mxu0 0.0
    %1407 = vmatpush2.msra.mxu0 0.0
    %1408 = vmatprep.subr.mxu0 0.0
    %1409 = vmatpush2.msra.mxu0 0.0
    %1410 = vmatprep.subr.mxu0 0.0
    %1411 = vmatpush2.msra.mxu0 0.0
    %1412 = vmatprep.subr.mxu0 0.0
    %1413 = vmatpush2.msra.mxu0 0.0
    %1414 = vmatprep.subr.mxu0 0.0
    %1415 = vmatpush2.msra.mxu0 0.0
    %1416 = vmatprep.subr.mxu0 0.0
    %1417 = vmatpush2.msra.mxu0 0.0
    %1418 = vmatprep.subr.mxu0 0.0
    %1419 = vmatpush2.msra.mxu0 0.0
    %1420 = vmatprep.subr.mxu0 0.0
    %1421 = vmatpush2.msra.mxu0 0.0
    %1422 = vmatprep.subr.mxu0 0.0
    %1423 = vmatpush2.msra.mxu0 0.0
    %1424 = vmatprep.mubr.f32.mxu0 0.0
    %1425 = vmatmul.mubr.f32.gmra.mxu0 %v1358
    %v1426 = vpop.f32.mrf.mxu0
    %v1427 = vadd.f32 0.0, %v1426
    %v1428 = vpop.f32.mrf.mxu0
    %1429 = vdwg.mxu0
    %vm1430 = vcmp.eq.s32.totalorder %v216, 2
    %1432 = vset.pattern.permute.xlu0 0
    %1433 = vperm.xlu0 %1432, %v1427
    %v1434 = vpop.permute.xlu0 %1433
    %v1436 = vsel %vm1430, %v1434, %v1057
    %v1437 = vmax.f32 %v1058, %v1427
    %v1438 = vsub.f32 %v1058, %v1437
    %v1439 = vmul.f32 %v1438, 1.442695
    %v1440 = vpow.pop %v1439
    %v1441 = vsub.f32 %v1427, %v1437
    %v1442 = vmul.f32 %v1441, 1.442695
    %v1443 = vpow.pop %v1442
    %v1444 = vmul.f32 %v1440, %v1066
    %v1445 = vadd.f32 %v1444, %v1443
    %1447 = vset.pattern.permute.xlu0 0
    %1448 = vperm.xlu0 %1447, %v1440
    %v1449 = vpop.permute.xlu0 %1448
    %v1451 = vmul.f32 %v1449, %v1079
    %1453 = vset.pattern.permute.xlu0 0
    %1454 = vperm.xlu0 %1453, %v1443
    %v1455 = vpop.permute.xlu0 %1454
    %v1457 = vmul.f32 %v1455, %v1354
    %v1458 = vadd.f32 %v1451, %v1457
    %v1460 = vrot.slane %v1186, 6
    %1461 = vrot.lane.b32.xlu0 %v1460, 64
    %v1462 = vpop.permute.xlu0 %1461
    %v1463 = vsel %vm217, %v1462, 0
    %1465 = vmatprep.subr.mxu0 0.0
    %1466 = vmatpush1.msra.mxu0 0.0
    %1467 = vmatprep.subr.mxu0 0.0
    %1468 = vmatpush1.msra.mxu0 0.0
    %1469 = vmatprep.subr.mxu0 0.0
    %1470 = vmatpush1.msra.mxu0 0.0
    %1471 = vmatprep.subr.mxu0 0.0
    %1472 = vmatpush1.msra.mxu0 0.0
    %1473 = vmatprep.subr.mxu0 0.0
    %1474 = vmatpush1.msra.mxu0 0.0
    %1475 = vmatprep.subr.mxu0 0.0
    %1476 = vmatpush1.msra.mxu0 0.0
    %1477 = vmatprep.subr.mxu0 0.0
    %1478 = vmatpush1.msra.mxu0 0.0
    %1479 = vmatprep.subr.mxu0 0.0
    %1480 = vmatpush1.msra.mxu0 0.0
    %1481 = vmatprep.subr.mxu0 0.0
    %1482 = vmatpush1.msra.mxu0 0.0
    %1483 = vmatprep.subr.mxu0 0.0
    %1484 = vmatpush1.msra.mxu0 0.0
    %1485 = vmatprep.subr.mxu0 0.0
    %1486 = vmatpush1.msra.mxu0 0.0
    %1487 = vmatprep.subr.mxu0 0.0
    %1488 = vmatpush1.msra.mxu0 0.0
    %1489 = vmatprep.subr.mxu0 0.0
    %1490 = vmatpush1.msra.mxu0 %v110
    %1491 = vmatprep.subr.mxu0 0.0
    %1492 = vmatpush1.msra.mxu0 %v109
    %1493 = vmatprep.subr.mxu0 0.0
    %1494 = vmatpush1.msra.mxu0 %v108
    %1495 = vmatprep.subr.mxu0 0.0
    %1496 = vmatpush1.msra.mxu0 %v107
    %1497 = vmatprep.subr.mxu0 0.0
    %1498 = vmatpush2.msra.mxu0 0.0
    %1499 = vmatprep.subr.mxu0 0.0
    %1500 = vmatpush2.msra.mxu0 0.0
    %1501 = vmatprep.subr.mxu0 0.0
    %1502 = vmatpush2.msra.mxu0 0.0
    %1503 = vmatprep.subr.mxu0 0.0
    %1504 = vmatpush2.msra.mxu0 0.0
    %1505 = vmatprep.subr.mxu0 0.0
    %1506 = vmatpush2.msra.mxu0 0.0
    %1507 = vmatprep.subr.mxu0 0.0
    %1508 = vmatpush2.msra.mxu0 0.0
    %1509 = vmatprep.subr.mxu0 0.0
    %1510 = vmatpush2.msra.mxu0 0.0
    %1511 = vmatprep.subr.mxu0 0.0
    %1512 = vmatpush2.msra.mxu0 0.0
    %1513 = vmatprep.subr.mxu0 0.0
    %1514 = vmatpush2.msra.mxu0 0.0
    %1515 = vmatprep.subr.mxu0 0.0
    %1516 = vmatpush2.msra.mxu0 0.0
    %1517 = vmatprep.subr.mxu0 0.0
    %1518 = vmatpush2.msra.mxu0 0.0
    %1519 = vmatprep.subr.mxu0 0.0
    %1520 = vmatpush2.msra.mxu0 0.0
    %1521 = vmatprep.subr.mxu0 0.0
    %1522 = vmatpush2.msra.mxu0 0.0
    %1523 = vmatprep.subr.mxu0 0.0
    %1524 = vmatpush2.msra.mxu0 0.0
    %1525 = vmatprep.subr.mxu0 0.0
    %1526 = vmatpush2.msra.mxu0 0.0
    %1527 = vmatprep.subr.mxu0 0.0
    %1528 = vmatpush2.msra.mxu0 0.0
    %1529 = vmatprep.mubr.f32.mxu0 0.0
    %1530 = vmatmul.mubr.f32.gmra.mxu0 %v1463
    %v1531 = vpop.f32.mrf.mxu0
    %v1532 = vadd.f32 0.0, %v1531
    %v1533 = vpop.f32.mrf.mxu0
    %1534 = vdwg.mxu0
    %v1535 = vadd.f32 %v212, %v1532
    %v1536 = vxor.u32 %v1535, 2147483648
    %v1537 = vmul.f32 %v1536, 1.442695
    %v1538 = vpow.pop %v1537
    %v1539 = vadd.f32 %v1538, 1.0
    %v1540 = vrcp.pop %v1539
    %v1541 = vmul.f32 1.0, %v1540
    %v1542 = vtanh.pop %v1535
    %v1544 = vrot.slane %v1180, 6
    %v1546 = vmul.f32 %v1541, %v1544
    %1548 = vrot.lane.b32.xlu0 %v1542, 32
    %v1549 = vpop.permute.xlu0 %1548
    %v1551 = vmul.f32 %v1541, %v1549
    %1553 = vrot.lane.b32.xlu0 %v1551, 32
    %v1554 = vpop.permute.xlu0 %1553
    %v1556 = vadd.f32 %v1546, %v1554
    %v1557 = vtanh.pop %v1556
    %1559 = vrot.lane.b32.xlu0 %v1557, 32
    %v1560 = vpop.permute.xlu0 %1559
    %v1562 = vmul.f32 %v1541, %v1560
    %v1563 = vadd.f32 %v1189, %v106
    %1564 = vmatprep.subr.mxu0 0.0
    %1565 = vmatpush1.msra.mxu0 0.0
    %1566 = vmatprep.subr.mxu0 0.0
    %1567 = vmatpush1.msra.mxu0 0.0
    %1568 = vmatprep.subr.mxu0 0.0
    %1569 = vmatpush1.msra.mxu0 0.0
    %1570 = vmatprep.subr.mxu0 0.0
    %1571 = vmatpush1.msra.mxu0 0.0
    %1572 = vmatprep.subr.mxu0 0.0
    %1573 = vmatpush1.msra.mxu0 0.0
    %1574 = vmatprep.subr.mxu0 0.0
    %1575 = vmatpush1.msra.mxu0 0.0
    %1576 = vmatprep.subr.mxu0 0.0
    %1577 = vmatpush1.msra.mxu0 0.0
    %1578 = vmatprep.subr.mxu0 0.0
    %1579 = vmatpush1.msra.mxu0 0.0
    %1580 = vmatprep.subr.mxu0 0.0
    %1581 = vmatpush1.msra.mxu0 0.0
    %1582 = vmatprep.subr.mxu0 0.0
    %1583 = vmatpush1.msra.mxu0 0.0
    %1584 = vmatprep.subr.mxu0 0.0
    %1585 = vmatpush1.msra.mxu0 0.0
    %1586 = vmatprep.subr.mxu0 0.0
    %1587 = vmatpush1.msra.mxu0 0.0
    %1588 = vmatprep.subr.mxu0 0.0
    %1589 = vmatpush1.msra.mxu0 %v114
    %1590 = vmatprep.subr.mxu0 0.0
    %1591 = vmatpush1.msra.mxu0 %v113
    %1592 = vmatprep.subr.mxu0 0.0
    %1593 = vmatpush1.msra.mxu0 %v112
    %1594 = vmatprep.subr.mxu0 0.0
    %1595 = vmatpush1.msra.mxu0 %v111
    %1596 = vmatprep.subr.mxu0 0.0
    %1597 = vmatpush2.msra.mxu0 0.0
    %1598 = vmatprep.subr.mxu0 0.0
    %1599 = vmatpush2.msra.mxu0 0.0
    %1600 = vmatprep.subr.mxu0 0.0
    %1601 = vmatpush2.msra.mxu0 0.0
    %1602 = vmatprep.subr.mxu0 0.0
    %1603 = vmatpush2.msra.mxu0 0.0
    %1604 = vmatprep.subr.mxu0 0.0
    %1605 = vmatpush2.msra.mxu0 0.0
    %1606 = vmatprep.subr.mxu0 0.0
    %1607 = vmatpush2.msra.mxu0 0.0
    %1608 = vmatprep.subr.mxu0 0.0
    %1609 = vmatpush2.msra.mxu0 0.0
    %1610 = vmatprep.subr.mxu0 0.0
    %1611 = vmatpush2.msra.mxu0 0.0
    %1612 = vmatprep.subr.mxu0 0.0
    %1613 = vmatpush2.msra.mxu0 0.0
    %1614 = vmatprep.subr.mxu0 0.0
    %1615 = vmatpush2.msra.mxu0 0.0
    %1616 = vmatprep.subr.mxu0 0.0
    %1617 = vmatpush2.msra.mxu0 0.0
    %1618 = vmatprep.subr.mxu0 0.0
    %1619 = vmatpush2.msra.mxu0 0.0
    %1620 = vmatprep.subr.mxu0 0.0
    %1621 = vmatpush2.msra.mxu0 0.0
    %1622 = vmatprep.subr.mxu0 0.0
    %1623 = vmatpush2.msra.mxu0 0.0
    %1624 = vmatprep.subr.mxu0 0.0
    %1625 = vmatpush2.msra.mxu0 0.0
    %1626 = vmatprep.subr.mxu0 0.0
    %1627 = vmatpush2.msra.mxu0 0.0
    %1628 = vmatprep.mubr.f32.mxu0 0.0
    %1629 = vmatmul.mubr.f32.gmra.mxu0 %v1463
    %v1630 = vpop.f32.mrf.mxu0
    %v1631 = vadd.f32 %v430, %v1630
    %v1632 = vpop.f32.mrf.mxu0
    %1633 = vdwg.mxu0
    %1634 = vmatprep.subr.mxu0 0.0
    %1635 = vmatpush1.msra.mxu0 0.0
    %1636 = vmatprep.subr.mxu0 0.0
    %1637 = vmatpush1.msra.mxu0 0.0
    %1638 = vmatprep.subr.mxu0 0.0
    %1639 = vmatpush1.msra.mxu0 0.0
    %1640 = vmatprep.subr.mxu0 0.0
    %1641 = vmatpush1.msra.mxu0 0.0
    %1642 = vmatprep.subr.mxu0 0.0
    %1643 = vmatpush1.msra.mxu0 0.0
    %1644 = vmatprep.subr.mxu0 0.0
    %1645 = vmatpush1.msra.mxu0 0.0
    %1646 = vmatprep.subr.mxu0 0.0
    %1647 = vmatpush1.msra.mxu0 0.0
    %1648 = vmatprep.subr.mxu0 0.0
    %1649 = vmatpush1.msra.mxu0 0.0
    %1650 = vmatprep.subr.mxu0 0.0
    %1651 = vmatpush1.msra.mxu0 0.0
    %1652 = vmatprep.subr.mxu0 0.0
    %1653 = vmatpush1.msra.mxu0 0.0
    %1654 = vmatprep.subr.mxu0 0.0
    %1655 = vmatpush1.msra.mxu0 0.0
    %1656 = vmatprep.subr.mxu0 0.0
    %1657 = vmatpush1.msra.mxu0 0.0
    %1658 = vmatprep.subr.mxu0 0.0
    %1659 = vmatpush1.msra.mxu0 %v118
    %1660 = vmatprep.subr.mxu0 0.0
    %1661 = vmatpush1.msra.mxu0 %v117
    %1662 = vmatprep.subr.mxu0 0.0
    %1663 = vmatpush1.msra.mxu0 %v116
    %1664 = vmatprep.subr.mxu0 0.0
    %1665 = vmatpush1.msra.mxu0 %v115
    %1666 = vmatprep.subr.mxu0 0.0
    %1667 = vmatpush2.msra.mxu0 0.0
    %1668 = vmatprep.subr.mxu0 0.0
    %1669 = vmatpush2.msra.mxu0 0.0
    %1670 = vmatprep.subr.mxu0 0.0
    %1671 = vmatpush2.msra.mxu0 0.0
    %1672 = vmatprep.subr.mxu0 0.0
    %1673 = vmatpush2.msra.mxu0 0.0
    %1674 = vmatprep.subr.mxu0 0.0
    %1675 = vmatpush2.msra.mxu0 0.0
    %1676 = vmatprep.subr.mxu0 0.0
    %1677 = vmatpush2.msra.mxu0 0.0
    %1678 = vmatprep.subr.mxu0 0.0
    %1679 = vmatpush2.msra.mxu0 0.0
    %1680 = vmatprep.subr.mxu0 0.0
    %1681 = vmatpush2.msra.mxu0 0.0
    %1682 = vmatprep.subr.mxu0 0.0
    %1683 = vmatpush2.msra.mxu0 0.0
    %1684 = vmatprep.subr.mxu0 0.0
    %1685 = vmatpush2.msra.mxu0 0.0
    %1686 = vmatprep.subr.mxu0 0.0
    %1687 = vmatpush2.msra.mxu0 0.0
    %1688 = vmatprep.subr.mxu0 0.0
    %1689 = vmatpush2.msra.mxu0 0.0
    %1690 = vmatprep.subr.mxu0 0.0
    %1691 = vmatpush2.msra.mxu0 0.0
    %1692 = vmatprep.subr.mxu0 0.0
    %1693 = vmatpush2.msra.mxu0 0.0
    %1694 = vmatprep.subr.mxu0 0.0
    %1695 = vmatpush2.msra.mxu0 0.0
    %1696 = vmatprep.subr.mxu0 0.0
    %1697 = vmatpush2.msra.mxu0 0.0
    %1698 = vmatprep.mubr.f32.mxu0 0.0
    %1699 = vmatmul.mubr.f32.gmra.mxu0 %v1358
    %v1700 = vpop.f32.mrf.mxu0
    %v1701 = vadd.f32 0.0, %v1700
    %v1702 = vpop.f32.mrf.mxu0
    %1703 = vdwg.mxu0
    %v1704 = vadd.f32 %v1631, %v1701
    %v1705 = vxor.u32 %v1704, 2147483648
    %v1706 = vmul.f32 %v1705, 1.442695
    %v1707 = vpow.pop %v1706
    %v1708 = vadd.f32 %v1707, 1.0
    %v1709 = vrcp.pop %v1708
    %v1710 = vmul.f32 1.0, %v1709
    %v1711 = vtanh.pop %v1704
    %v1712 = vmul.f32 %v1710, %v1348
    %1714 = vrot.lane.b32.xlu0 %v1711, 32
    %v1715 = vpop.permute.xlu0 %1714
    %v1717 = vmul.f32 %v1710, %v1715
    %1719 = vrot.lane.b32.xlu0 %v1717, 32
    %v1720 = vpop.permute.xlu0 %1719
    %v1722 = vadd.f32 %v1712, %v1720
    %v1723 = vtanh.pop %v1722
    %1725 = vrot.lane.b32.xlu0 %v1723, 32
    %v1726 = vpop.permute.xlu0 %1725
    %v1728 = vmul.f32 %v1710, %v1726
    %1730 = vrot.lane.b32.xlu0 %v1728, 64
    %v1731 = vpop.permute.xlu0 %1730
    %v1732 = vsel %vm217, %v1731, 0
    %1734 = vmatprep.subr.mxu0 0.0
    %1735 = vmatpush1.msra.mxu0 0.0
    %1736 = vmatprep.subr.mxu0 0.0
    %1737 = vmatpush1.msra.mxu0 0.0
    %1738 = vmatprep.subr.mxu0 0.0
    %1739 = vmatpush1.msra.mxu0 0.0
    %1740 = vmatprep.subr.mxu0 0.0
    %1741 = vmatpush1.msra.mxu0 0.0
    %1742 = vmatprep.subr.mxu0 0.0
    %1743 = vmatpush1.msra.mxu0 0.0
    %1744 = vmatprep.subr.mxu0 0.0
    %1745 = vmatpush1.msra.mxu0 0.0
    %1746 = vmatprep.subr.mxu0 0.0
    %1747 = vmatpush1.msra.mxu0 0.0
    %1748 = vmatprep.subr.mxu0 0.0
    %1749 = vmatpush1.msra.mxu0 0.0
    %1750 = vmatprep.subr.mxu0 0.0
    %1751 = vmatpush1.msra.mxu0 0.0
    %1752 = vmatprep.subr.mxu0 0.0
    %1753 = vmatpush1.msra.mxu0 0.0
    %1754 = vmatprep.subr.mxu0 0.0
    %1755 = vmatpush1.msra.mxu0 0.0
    %1756 = vmatprep.subr.mxu0 0.0
    %1757 = vmatpush1.msra.mxu0 0.0
    %1758 = vmatprep.subr.mxu0 0.0
    %1759 = vmatpush1.msra.mxu0 %v123
    %1760 = vmatprep.subr.mxu0 0.0
    %1761 = vmatpush1.msra.mxu0 %v122
    %1762 = vmatprep.subr.mxu0 0.0
    %1763 = vmatpush1.msra.mxu0 %v121
    %1764 = vmatprep.subr.mxu0 0.0
    %1765 = vmatpush1.msra.mxu0 %v120
    %1766 = vmatprep.subr.mxu0 0.0
    %1767 = vmatpush2.msra.mxu0 0.0
    %1768 = vmatprep.subr.mxu0 0.0
    %1769 = vmatpush2.msra.mxu0 0.0
    %1770 = vmatprep.subr.mxu0 0.0
    %1771 = vmatpush2.msra.mxu0 0.0
    %1772 = vmatprep.subr.mxu0 0.0
    %1773 = vmatpush2.msra.mxu0 0.0
    %1774 = vmatprep.subr.mxu0 0.0
    %1775 = vmatpush2.msra.mxu0 0.0
    %1776 = vmatprep.subr.mxu0 0.0
    %1777 = vmatpush2.msra.mxu0 0.0
    %1778 = vmatprep.subr.mxu0 0.0
    %1779 = vmatpush2.msra.mxu0 0.0
    %1780 = vmatprep.subr.mxu0 0.0
    %1781 = vmatpush2.msra.mxu0 0.0
    %1782 = vmatprep.subr.mxu0 0.0
    %1783 = vmatpush2.msra.mxu0 0.0
    %1784 = vmatprep.subr.mxu0 0.0
    %1785 = vmatpush2.msra.mxu0 0.0
    %1786 = vmatprep.subr.mxu0 0.0
    %1787 = vmatpush2.msra.mxu0 0.0
    %1788 = vmatprep.subr.mxu0 0.0
    %1789 = vmatpush2.msra.mxu0 0.0
    %1790 = vmatprep.subr.mxu0 0.0
    %1791 = vmatpush2.msra.mxu0 0.0
    %1792 = vmatprep.subr.mxu0 0.0
    %1793 = vmatpush2.msra.mxu0 0.0
    %1794 = vmatprep.subr.mxu0 0.0
    %1795 = vmatpush2.msra.mxu0 0.0
    %1796 = vmatprep.subr.mxu0 0.0
    %1797 = vmatpush2.msra.mxu0 0.0
    %1798 = vmatprep.mubr.f32.mxu0 0.0
    %1799 = vmatmul.mubr.f32.gmra.mxu0 %v1732
    %v1800 = vpop.f32.mrf.mxu0
    %v1801 = vadd.f32 0.0, %v1800
    %v1802 = vpop.f32.mrf.mxu0
    %1803 = vdwg.mxu0
    %vm1804 = vcmp.eq.s32.totalorder %v216, 3
    %1806 = vset.pattern.permute.xlu0 0
    %1807 = vperm.xlu0 %1806, %v1801
    %v1808 = vpop.permute.xlu0 %1807
    %v1810 = vsel %vm1804, %v1808, %v1436
    %v1811 = vmax.f32 %v1437, %v1801
    %v1812 = vsub.f32 %v1437, %v1811
    %v1813 = vmul.f32 %v1812, 1.442695
    %v1814 = vpow.pop %v1813
    %v1815 = vsub.f32 %v1801, %v1811
    %v1816 = vmul.f32 %v1815, 1.442695
    %v1817 = vpow.pop %v1816
    %v1818 = vmul.f32 %v1814, %v1445
    %v1819 = vadd.f32 %v1818, %v1817
    %1821 = vset.pattern.permute.xlu0 0
    %1822 = vperm.xlu0 %1821, %v1814
    %v1823 = vpop.permute.xlu0 %1822
    %v1825 = vmul.f32 %v1823, %v1458
    %1827 = vset.pattern.permute.xlu0 0
    %1828 = vperm.xlu0 %1827, %v1817
    %v1829 = vpop.permute.xlu0 %1828
    %v1831 = vmul.f32 %v1829, %v1728
    %v1832 = vadd.f32 %v1825, %v1831
    %1834 = vrot.lane.b32.xlu0 %v1562, 64
    %v1835 = vpop.permute.xlu0 %1834
    %v1836 = vsel %vm217, %v1835, 0
    %1838 = vmatprep.subr.mxu0 0.0
    %1839 = vmatpush1.msra.mxu0 0.0
    %1840 = vmatprep.subr.mxu0 0.0
    %1841 = vmatpush1.msra.mxu0 0.0
    %1842 = vmatprep.subr.mxu0 0.0
    %1843 = vmatpush1.msra.mxu0 0.0
    %1844 = vmatprep.subr.mxu0 0.0
    %1845 = vmatpush1.msra.mxu0 0.0
    %1846 = vmatprep.subr.mxu0 0.0
    %1847 = vmatpush1.msra.mxu0 0.0
    %1848 = vmatprep.subr.mxu0 0.0
    %1849 = vmatpush1.msra.mxu0 0.0
    %1850 = vmatprep.subr.mxu0 0.0
    %1851 = vmatpush1.msra.mxu0 0.0
    %1852 = vmatprep.subr.mxu0 0.0
    %1853 = vmatpush1.msra.mxu0 0.0
    %1854 = vmatprep.subr.mxu0 0.0
    %1855 = vmatpush1.msra.mxu0 0.0
    %1856 = vmatprep.subr.mxu0 0.0
    %1857 = vmatpush1.msra.mxu0 0.0
    %1858 = vmatprep.subr.mxu0 0.0
    %1859 = vmatpush1.msra.mxu0 0.0
    %1860 = vmatprep.subr.mxu0 0.0
    %1861 = vmatpush1.msra.mxu0 0.0
    %1862 = vmatprep.subr.mxu0 0.0
    %1863 = vmatpush1.msra.mxu0 %v110
    %1864 = vmatprep.subr.mxu0 0.0
    %1865 = vmatpush1.msra.mxu0 %v109
    %1866 = vmatprep.subr.mxu0 0.0
    %1867 = vmatpush1.msra.mxu0 %v108
    %1868 = vmatprep.subr.mxu0 0.0
    %1869 = vmatpush1.msra.mxu0 %v107
    %1870 = vmatprep.subr.mxu0 0.0
    %1871 = vmatpush2.msra.mxu0 0.0
    %1872 = vmatprep.subr.mxu0 0.0
    %1873 = vmatpush2.msra.mxu0 0.0
    %1874 = vmatprep.subr.mxu0 0.0
    %1875 = vmatpush2.msra.mxu0 0.0
    %1876 = vmatprep.subr.mxu0 0.0
    %1877 = vmatpush2.msra.mxu0 0.0
    %1878 = vmatprep.subr.mxu0 0.0
    %1879 = vmatpush2.msra.mxu0 0.0
    %1880 = vmatprep.subr.mxu0 0.0
    %1881 = vmatpush2.msra.mxu0 0.0
    %1882 = vmatprep.subr.mxu0 0.0
    %1883 = vmatpush2.msra.mxu0 0.0
    %1884 = vmatprep.subr.mxu0 0.0
    %1885 = vmatpush2.msra.mxu0 0.0
    %1886 = vmatprep.subr.mxu0 0.0
    %1887 = vmatpush2.msra.mxu0 0.0
    %1888 = vmatprep.subr.mxu0 0.0
    %1889 = vmatpush2.msra.mxu0 0.0
    %1890 = vmatprep.subr.mxu0 0.0
    %1891 = vmatpush2.msra.mxu0 0.0
    %1892 = vmatprep.subr.mxu0 0.0
    %1893 = vmatpush2.msra.mxu0 0.0
    %1894 = vmatprep.subr.mxu0 0.0
    %1895 = vmatpush2.msra.mxu0 0.0
    %1896 = vmatprep.subr.mxu0 0.0
    %1897 = vmatpush2.msra.mxu0 0.0
    %1898 = vmatprep.subr.mxu0 0.0
    %1899 = vmatpush2.msra.mxu0 0.0
    %1900 = vmatprep.subr.mxu0 0.0
    %1901 = vmatpush2.msra.mxu0 0.0
    %1902 = vmatprep.mubr.f32.mxu0 0.0
    %1903 = vmatmul.mubr.f32.gmra.mxu0 %v1836
    %v1904 = vpop.f32.mrf.mxu0
    %v1905 = vadd.f32 0.0, %v1904
    %v1906 = vpop.f32.mrf.mxu0
    %1907 = vdwg.mxu0
    %v1909 = vrot.slane %v1905, 6
    %v1911 = vadd.f32 %v212, %v1909
    %v1912 = vxor.u32 %v1911, 2147483648
    %v1913 = vmul.f32 %v1912, 1.442695
    %v1914 = vpow.pop %v1913
    %v1915 = vadd.f32 %v1914, 1.0
    %v1916 = vrcp.pop %v1915
    %v1917 = vmul.f32 1.0, %v1916
    %v1918 = vtanh.pop %v1911
    %v1920 = vrot.slane %v1556, 6
    %v1922 = vmul.f32 %v1917, %v1920
    %1924 = vrot.lane.b32.xlu0 %v1918, 32
    %v1925 = vpop.permute.xlu0 %1924
    %v1927 = vmul.f32 %v1917, %v1925
    %1929 = vrot.lane.b32.xlu0 %v1927, 32
    %v1930 = vpop.permute.xlu0 %1929
    %v1932 = vadd.f32 %v1922, %v1930
    %v1933 = vtanh.pop %v1932
    %1935 = vrot.lane.b32.xlu0 %v1933, 32
    %v1936 = vpop.permute.xlu0 %1935
    %v1938 = vmul.f32 %v1917, %v1936
    %v1939 = vrot.slane %v106, 2
    %v1941 = vadd.f32 %v1563, %v1939
    %1942 = vmatprep.subr.mxu0 0.0
    %1943 = vmatpush1.msra.mxu0 0.0
    %1944 = vmatprep.subr.mxu0 0.0
    %1945 = vmatpush1.msra.mxu0 0.0
    %1946 = vmatprep.subr.mxu0 0.0
    %1947 = vmatpush1.msra.mxu0 0.0
    %1948 = vmatprep.subr.mxu0 0.0
    %1949 = vmatpush1.msra.mxu0 0.0
    %1950 = vmatprep.subr.mxu0 0.0
    %1951 = vmatpush1.msra.mxu0 0.0
    %1952 = vmatprep.subr.mxu0 0.0
    %1953 = vmatpush1.msra.mxu0 0.0
    %1954 = vmatprep.subr.mxu0 0.0
    %1955 = vmatpush1.msra.mxu0 0.0
    %1956 = vmatprep.subr.mxu0 0.0
    %1957 = vmatpush1.msra.mxu0 0.0
    %1958 = vmatprep.subr.mxu0 0.0
    %1959 = vmatpush1.msra.mxu0 0.0
    %1960 = vmatprep.subr.mxu0 0.0
    %1961 = vmatpush1.msra.mxu0 0.0
    %1962 = vmatprep.subr.mxu0 0.0
    %1963 = vmatpush1.msra.mxu0 0.0
    %1964 = vmatprep.subr.mxu0 0.0
    %1965 = vmatpush1.msra.mxu0 0.0
    %1966 = vmatprep.subr.mxu0 0.0
    %1967 = vmatpush1.msra.mxu0 %v114
    %1968 = vmatprep.subr.mxu0 0.0
    %1969 = vmatpush1.msra.mxu0 %v113
    %1970 = vmatprep.subr.mxu0 0.0
    %1971 = vmatpush1.msra.mxu0 %v112
    %1972 = vmatprep.subr.mxu0 0.0
    %1973 = vmatpush1.msra.mxu0 %v111
    %1974 = vmatprep.subr.mxu0 0.0
    %1975 = vmatpush2.msra.mxu0 0.0
    %1976 = vmatprep.subr.mxu0 0.0
    %1977 = vmatpush2.msra.mxu0 0.0
    %1978 = vmatprep.subr.mxu0 0.0
    %1979 = vmatpush2.msra.mxu0 0.0
    %1980 = vmatprep.subr.mxu0 0.0
    %1981 = vmatpush2.msra.mxu0 0.0
    %1982 = vmatprep.subr.mxu0 0.0
    %1983 = vmatpush2.msra.mxu0 0.0
    %1984 = vmatprep.subr.mxu0 0.0
    %1985 = vmatpush2.msra.mxu0 0.0
    %1986 = vmatprep.subr.mxu0 0.0
    %1987 = vmatpush2.msra.mxu0 0.0
    %1988 = vmatprep.subr.mxu0 0.0
    %1989 = vmatpush2.msra.mxu0 0.0
    %1990 = vmatprep.subr.mxu0 0.0
    %1991 = vmatpush2.msra.mxu0 0.0
    %1992 = vmatprep.subr.mxu0 0.0
    %1993 = vmatpush2.msra.mxu0 0.0
    %1994 = vmatprep.subr.mxu0 0.0
    %1995 = vmatpush2.msra.mxu0 0.0
    %1996 = vmatprep.subr.mxu0 0.0
    %1997 = vmatpush2.msra.mxu0 0.0
    %1998 = vmatprep.subr.mxu0 0.0
    %1999 = vmatpush2.msra.mxu0 0.0
    %2000 = vmatprep.subr.mxu0 0.0
    %2001 = vmatpush2.msra.mxu0 0.0
    %2002 = vmatprep.subr.mxu0 0.0
    %2003 = vmatpush2.msra.mxu0 0.0
    %2004 = vmatprep.subr.mxu0 0.0
    %2005 = vmatpush2.msra.mxu0 0.0
    %2006 = vmatprep.mubr.f32.mxu0 0.0
    %2007 = vmatmul.mubr.f32.gmra.mxu0 %v1836
    %v2008 = vpop.f32.mrf.mxu0
    %v2009 = vadd.f32 %v430, %v2008
    %v2010 = vpop.f32.mrf.mxu0
    %2011 = vdwg.mxu0
    %2012 = vmatprep.subr.mxu0 0.0
    %2013 = vmatpush1.msra.mxu0 0.0
    %2014 = vmatprep.subr.mxu0 0.0
    %2015 = vmatpush1.msra.mxu0 0.0
    %2016 = vmatprep.subr.mxu0 0.0
    %2017 = vmatpush1.msra.mxu0 0.0
    %2018 = vmatprep.subr.mxu0 0.0
    %2019 = vmatpush1.msra.mxu0 0.0
    %2020 = vmatprep.subr.mxu0 0.0
    %2021 = vmatpush1.msra.mxu0 0.0
    %2022 = vmatprep.subr.mxu0 0.0
    %2023 = vmatpush1.msra.mxu0 0.0
    %2024 = vmatprep.subr.mxu0 0.0
    %2025 = vmatpush1.msra.mxu0 0.0
    %2026 = vmatprep.subr.mxu0 0.0
    %2027 = vmatpush1.msra.mxu0 0.0
    %2028 = vmatprep.subr.mxu0 0.0
    %2029 = vmatpush1.msra.mxu0 0.0
    %2030 = vmatprep.subr.mxu0 0.0
    %2031 = vmatpush1.msra.mxu0 0.0
    %2032 = vmatprep.subr.mxu0 0.0
    %2033 = vmatpush1.msra.mxu0 0.0
    %2034 = vmatprep.subr.mxu0 0.0
    %2035 = vmatpush1.msra.mxu0 0.0
    %2036 = vmatprep.subr.mxu0 0.0
    %2037 = vmatpush1.msra.mxu0 %v118
    %2038 = vmatprep.subr.mxu0 0.0
    %2039 = vmatpush1.msra.mxu0 %v117
    %2040 = vmatprep.subr.mxu0 0.0
    %2041 = vmatpush1.msra.mxu0 %v116
    %2042 = vmatprep.subr.mxu0 0.0
    %2043 = vmatpush1.msra.mxu0 %v115
    %2044 = vmatprep.subr.mxu0 0.0
    %2045 = vmatpush2.msra.mxu0 0.0
    %2046 = vmatprep.subr.mxu0 0.0
    %2047 = vmatpush2.msra.mxu0 0.0
    %2048 = vmatprep.subr.mxu0 0.0
    %2049 = vmatpush2.msra.mxu0 0.0
    %2050 = vmatprep.subr.mxu0 0.0
    %2051 = vmatpush2.msra.mxu0 0.0
    %2052 = vmatprep.subr.mxu0 0.0
    %2053 = vmatpush2.msra.mxu0 0.0
    %2054 = vmatprep.subr.mxu0 0.0
    %2055 = vmatpush2.msra.mxu0 0.0
    %2056 = vmatprep.subr.mxu0 0.0
    %2057 = vmatpush2.msra.mxu0 0.0
    %2058 = vmatprep.subr.mxu0 0.0
    %2059 = vmatpush2.msra.mxu0 0.0
    %2060 = vmatprep.subr.mxu0 0.0
    %2061 = vmatpush2.msra.mxu0 0.0
    %2062 = vmatprep.subr.mxu0 0.0
    %2063 = vmatpush2.msra.mxu0 0.0
    %2064 = vmatprep.subr.mxu0 0.0
    %2065 = vmatpush2.msra.mxu0 0.0
    %2066 = vmatprep.subr.mxu0 0.0
    %2067 = vmatpush2.msra.mxu0 0.0
    %2068 = vmatprep.subr.mxu0 0.0
    %2069 = vmatpush2.msra.mxu0 0.0
    %2070 = vmatprep.subr.mxu0 0.0
    %2071 = vmatpush2.msra.mxu0 0.0
    %2072 = vmatprep.subr.mxu0 0.0
    %2073 = vmatpush2.msra.mxu0 0.0
    %2074 = vmatprep.subr.mxu0 0.0
    %2075 = vmatpush2.msra.mxu0 0.0
    %2076 = vmatprep.mubr.f32.mxu0 0.0
    %2077 = vmatmul.mubr.f32.gmra.mxu0 %v1732
    %v2078 = vpop.f32.mrf.mxu0
    %v2079 = vadd.f32 0.0, %v2078
    %v2080 = vpop.f32.mrf.mxu0
    %2081 = vdwg.mxu0
    %v2082 = vadd.f32 %v2009, %v2079
    %v2083 = vxor.u32 %v2082, 2147483648
    %v2084 = vmul.f32 %v2083, 1.442695
    %v2085 = vpow.pop %v2084
    %v2086 = vadd.f32 %v2085, 1.0
    %v2087 = vrcp.pop %v2086
    %v2088 = vmul.f32 1.0, %v2087
    %v2089 = vtanh.pop %v2082
    %v2090 = vmul.f32 %v2088, %v1722
    %2092 = vrot.lane.b32.xlu0 %v2089, 32
    %v2093 = vpop.permute.xlu0 %2092
    %v2095 = vmul.f32 %v2088, %v2093
    %2097 = vrot.lane.b32.xlu0 %v2095, 32
    %v2098 = vpop.permute.xlu0 %2097
    %v2100 = vadd.f32 %v2090, %v2098
    %v2101 = vtanh.pop %v2100
    %2103 = vrot.lane.b32.xlu0 %v2101, 32
    %v2104 = vpop.permute.xlu0 %2103
    %v2106 = vmul.f32 %v2088, %v2104
    %2108 = vrot.lane.b32.xlu0 %v2106, 64
    %v2109 = vpop.permute.xlu0 %2108
    %v2110 = vsel %vm217, %v2109, 0
    %2112 = vmatprep.subr.mxu0 0.0
    %2113 = vmatpush1.msra.mxu0 0.0
    %2114 = vmatprep.subr.mxu0 0.0
    %2115 = vmatpush1.msra.mxu0 0.0
    %2116 = vmatprep.subr.mxu0 0.0
    %2117 = vmatpush1.msra.mxu0 0.0
    %2118 = vmatprep.subr.mxu0 0.0
    %2119 = vmatpush1.msra.mxu0 0.0
    %2120 = vmatprep.subr.mxu0 0.0
    %2121 = vmatpush1.msra.mxu0 0.0
    %2122 = vmatprep.subr.mxu0 0.0
    %2123 = vmatpush1.msra.mxu0 0.0
    %2124 = vmatprep.subr.mxu0 0.0
    %2125 = vmatpush1.msra.mxu0 0.0
    %2126 = vmatprep.subr.mxu0 0.0
    %2127 = vmatpush1.msra.mxu0 0.0
    %2128 = vmatprep.subr.mxu0 0.0
    %2129 = vmatpush1.msra.mxu0 0.0
    %2130 = vmatprep.subr.mxu0 0.0
    %2131 = vmatpush1.msra.mxu0 0.0
    %2132 = vmatprep.subr.mxu0 0.0
    %2133 = vmatpush1.msra.mxu0 0.0
    %2134 = vmatprep.subr.mxu0 0.0
    %2135 = vmatpush1.msra.mxu0 0.0
    %2136 = vmatprep.subr.mxu0 0.0
    %2137 = vmatpush1.msra.mxu0 %v123
    %2138 = vmatprep.subr.mxu0 0.0
    %2139 = vmatpush1.msra.mxu0 %v122
    %2140 = vmatprep.subr.mxu0 0.0
    %2141 = vmatpush1.msra.mxu0 %v121
    %2142 = vmatprep.subr.mxu0 0.0
    %2143 = vmatpush1.msra.mxu0 %v120
    %2144 = vmatprep.subr.mxu0 0.0
    %2145 = vmatpush2.msra.mxu0 0.0
    %2146 = vmatprep.subr.mxu0 0.0
    %2147 = vmatpush2.msra.mxu0 0.0
    %2148 = vmatprep.subr.mxu0 0.0
    %2149 = vmatpush2.msra.mxu0 0.0
    %2150 = vmatprep.subr.mxu0 0.0
    %2151 = vmatpush2.msra.mxu0 0.0
    %2152 = vmatprep.subr.mxu0 0.0
    %2153 = vmatpush2.msra.mxu0 0.0
    %2154 = vmatprep.subr.mxu0 0.0
    %2155 = vmatpush2.msra.mxu0 0.0
    %2156 = vmatprep.subr.mxu0 0.0
    %2157 = vmatpush2.msra.mxu0 0.0
    %2158 = vmatprep.subr.mxu0 0.0
    %2159 = vmatpush2.msra.mxu0 0.0
    %2160 = vmatprep.subr.mxu0 0.0
    %2161 = vmatpush2.msra.mxu0 0.0
    %2162 = vmatprep.subr.mxu0 0.0
    %2163 = vmatpush2.msra.mxu0 0.0
    %2164 = vmatprep.subr.mxu0 0.0
    %2165 = vmatpush2.msra.mxu0 0.0
    %2166 = vmatprep.subr.mxu0 0.0
    %2167 = vmatpush2.msra.mxu0 0.0
    %2168 = vmatprep.subr.mxu0 0.0
    %2169 = vmatpush2.msra.mxu0 0.0
    %2170 = vmatprep.subr.mxu0 0.0
    %2171 = vmatpush2.msra.mxu0 0.0
    %2172 = vmatprep.subr.mxu0 0.0
    %2173 = vmatpush2.msra.mxu0 0.0
    %2174 = vmatprep.subr.mxu0 0.0
    %2175 = vmatpush2.msra.mxu0 0.0
    %2176 = vmatprep.mubr.f32.mxu0 0.0
    %2177 = vmatmul.mubr.f32.gmra.mxu0 %v2110
    %v2178 = vpop.f32.mrf.mxu0
    %v2179 = vadd.f32 0.0, %v2178
    %v2180 = vpop.f32.mrf.mxu0
    %2181 = vdwg.mxu0
    %vm2182 = vcmp.eq.s32.totalorder %v216, 4
    %2184 = vset.pattern.permute.xlu0 0
    %2185 = vperm.xlu0 %2184, %v2179
    %v2186 = vpop.permute.xlu0 %2185
    %v2188 = vsel %vm2182, %v2186, %v1810
    %v2189 = vmax.f32 %v1811, %v2179
    %v2190 = vsub.f32 %v1811, %v2189
    %v2191 = vmul.f32 %v2190, 1.442695
    %v2192 = vpow.pop %v2191
    %v2193 = vsub.f32 %v2179, %v2189
    %v2194 = vmul.f32 %v2193, 1.442695
    %v2195 = vpow.pop %v2194
    %v2196 = vmul.f32 %v2192, %v1819
    %v2197 = vadd.f32 %v2196, %v2195
    %2199 = vset.pattern.permute.xlu0 0
    %2200 = vperm.xlu0 %2199, %v2192
    %v2201 = vpop.permute.xlu0 %2200
    %v2203 = vmul.f32 %v2201, %v1832
    %2205 = vset.pattern.permute.xlu0 0
    %2206 = vperm.xlu0 %2205, %v2195
    %v2207 = vpop.permute.xlu0 %2206
    %v2209 = vmul.f32 %v2207, %v2106
    %v2210 = vadd.f32 %v2203, %v2209
    %v2212 = vrot.slane %v1938, 2
    %2213 = vrot.lane.b32.xlu0 %v2212, 64
    %v2214 = vpop.permute.xlu0 %2213
    %v2215 = vsel %vm217, %v2214, 0
    %2217 = vmatprep.subr.mxu0 0.0
    %2218 = vmatpush1.msra.mxu0 0.0
    %2219 = vmatprep.subr.mxu0 0.0
    %2220 = vmatpush1.msra.mxu0 0.0
    %2221 = vmatprep.subr.mxu0 0.0
    %2222 = vmatpush1.msra.mxu0 0.0
    %2223 = vmatprep.subr.mxu0 0.0
    %2224 = vmatpush1.msra.mxu0 0.0
    %2225 = vmatprep.subr.mxu0 0.0
    %2226 = vmatpush1.msra.mxu0 0.0
    %2227 = vmatprep.subr.mxu0 0.0
    %2228 = vmatpush1.msra.mxu0 0.0
    %2229 = vmatprep.subr.mxu0 0.0
    %2230 = vmatpush1.msra.mxu0 0.0
    %2231 = vmatprep.subr.mxu0 0.0
    %2232 = vmatpush1.msra.mxu0 0.0
    %2233 = vmatprep.subr.mxu0 0.0
    %2234 = vmatpush1.msra.mxu0 0.0
    %2235 = vmatprep.subr.mxu0 0.0
    %2236 = vmatpush1.msra.mxu0 0.0
    %2237 = vmatprep.subr.mxu0 0.0
    %2238 = vmatpush1.msra.mxu0 0.0
    %2239 = vmatprep.subr.mxu0 0.0
    %2240 = vmatpush1.msra.mxu0 0.0
    %2241 = vmatprep.subr.mxu0 0.0
    %2242 = vmatpush1.msra.mxu0 %v110
    %2243 = vmatprep.subr.mxu0 0.0
    %2244 = vmatpush1.msra.mxu0 %v109
    %2245 = vmatprep.subr.mxu0 0.0
    %2246 = vmatpush1.msra.mxu0 %v108
    %2247 = vmatprep.subr.mxu0 0.0
    %2248 = vmatpush1.msra.mxu0 %v107
    %2249 = vmatprep.subr.mxu0 0.0
    %2250 = vmatpush2.msra.mxu0 0.0
    %2251 = vmatprep.subr.mxu0 0.0
    %2252 = vmatpush2.msra.mxu0 0.0
    %2253 = vmatprep.subr.mxu0 0.0
    %2254 = vmatpush2.msra.mxu0 0.0
    %2255 = vmatprep.subr.mxu0 0.0
    %2256 = vmatpush2.msra.mxu0 0.0
    %2257 = vmatprep.subr.mxu0 0.0
    %2258 = vmatpush2.msra.mxu0 0.0
    %2259 = vmatprep.subr.mxu0 0.0
    %2260 = vmatpush2.msra.mxu0 0.0
    %2261 = vmatprep.subr.mxu0 0.0
    %2262 = vmatpush2.msra.mxu0 0.0
    %2263 = vmatprep.subr.mxu0 0.0
    %2264 = vmatpush2.msra.mxu0 0.0
    %2265 = vmatprep.subr.mxu0 0.0
    %2266 = vmatpush2.msra.mxu0 0.0
    %2267 = vmatprep.subr.mxu0 0.0
    %2268 = vmatpush2.msra.mxu0 0.0
    %2269 = vmatprep.subr.mxu0 0.0
    %2270 = vmatpush2.msra.mxu0 0.0
    %2271 = vmatprep.subr.mxu0 0.0
    %2272 = vmatpush2.msra.mxu0 0.0
    %2273 = vmatprep.subr.mxu0 0.0
    %2274 = vmatpush2.msra.mxu0 0.0
    %2275 = vmatprep.subr.mxu0 0.0
    %2276 = vmatpush2.msra.mxu0 0.0
    %2277 = vmatprep.subr.mxu0 0.0
    %2278 = vmatpush2.msra.mxu0 0.0
    %2279 = vmatprep.subr.mxu0 0.0
    %2280 = vmatpush2.msra.mxu0 0.0
    %2281 = vmatprep.mubr.f32.mxu0 0.0
    %2282 = vmatmul.mubr.f32.gmra.mxu0 %v2215
    %v2283 = vpop.f32.mrf.mxu0
    %v2284 = vadd.f32 0.0, %v2283
    %v2285 = vpop.f32.mrf.mxu0
    %2286 = vdwg.mxu0
    %v2288 = vrot.slane %v2284, 4
    %v2290 = vadd.f32 %v212, %v2288
    %v2291 = vxor.u32 %v2290, 2147483648
    %v2292 = vmul.f32 %v2291, 1.442695
    %v2293 = vpow.pop %v2292
    %v2294 = vadd.f32 %v2293, 1.0
    %v2295 = vrcp.pop %v2294
    %v2296 = vmul.f32 1.0, %v2295
    %v2297 = vtanh.pop %v2290
    %v2299 = vrot.slane %v1932, 6
    %v2301 = vmul.f32 %v2296, %v2299
    %2303 = vrot.lane.b32.xlu0 %v2297, 32
    %v2304 = vpop.permute.xlu0 %2303
    %v2306 = vmul.f32 %v2296, %v2304
    %2308 = vrot.lane.b32.xlu0 %v2306, 32
    %v2309 = vpop.permute.xlu0 %2308
    %v2311 = vadd.f32 %v2301, %v2309
    %v2312 = vtanh.pop %v2311
    %2314 = vrot.lane.b32.xlu0 %v2312, 32
    %v2315 = vpop.permute.xlu0 %2314
    %v2317 = vmul.f32 %v2296, %v2315
    %v2318 = vrot.slane %v106, 4
    %v2320 = vadd.f32 %v1941, %v2318
    %2321 = vmatprep.subr.mxu0 0.0
    %2322 = vmatpush1.msra.mxu0 0.0
    %2323 = vmatprep.subr.mxu0 0.0
    %2324 = vmatpush1.msra.mxu0 0.0
    %2325 = vmatprep.subr.mxu0 0.0
    %2326 = vmatpush1.msra.mxu0 0.0
    %2327 = vmatprep.subr.mxu0 0.0
    %2328 = vmatpush1.msra.mxu0 0.0
    %2329 = vmatprep.subr.mxu0 0.0
    %2330 = vmatpush1.msra.mxu0 0.0
    %2331 = vmatprep.subr.mxu0 0.0
    %2332 = vmatpush1.msra.mxu0 0.0
    %2333 = vmatprep.subr.mxu0 0.0
    %2334 = vmatpush1.msra.mxu0 0.0
    %2335 = vmatprep.subr.mxu0 0.0
    %2336 = vmatpush1.msra.mxu0 0.0
    %2337 = vmatprep.subr.mxu0 0.0
    %2338 = vmatpush1.msra.mxu0 0.0
    %2339 = vmatprep.subr.mxu0 0.0
    %2340 = vmatpush1.msra.mxu0 0.0
    %2341 = vmatprep.subr.mxu0 0.0
    %2342 = vmatpush1.msra.mxu0 0.0
    %2343 = vmatprep.subr.mxu0 0.0
    %2344 = vmatpush1.msra.mxu0 0.0
    %2345 = vmatprep.subr.mxu0 0.0
    %2346 = vmatpush1.msra.mxu0 %v114
    %2347 = vmatprep.subr.mxu0 0.0
    %2348 = vmatpush1.msra.mxu0 %v113
    %2349 = vmatprep.subr.mxu0 0.0
    %2350 = vmatpush1.msra.mxu0 %v112
    %2351 = vmatprep.subr.mxu0 0.0
    %2352 = vmatpush1.msra.mxu0 %v111
    %2353 = vmatprep.subr.mxu0 0.0
    %2354 = vmatpush2.msra.mxu0 0.0
    %2355 = vmatprep.subr.mxu0 0.0
    %2356 = vmatpush2.msra.mxu0 0.0
    %2357 = vmatprep.subr.mxu0 0.0
    %2358 = vmatpush2.msra.mxu0 0.0
    %2359 = vmatprep.subr.mxu0 0.0
    %2360 = vmatpush2.msra.mxu0 0.0
    %2361 = vmatprep.subr.mxu0 0.0
    %2362 = vmatpush2.msra.mxu0 0.0
    %2363 = vmatprep.subr.mxu0 0.0
    %2364 = vmatpush2.msra.mxu0 0.0
    %2365 = vmatprep.subr.mxu0 0.0
    %2366 = vmatpush2.msra.mxu0 0.0
    %2367 = vmatprep.subr.mxu0 0.0
    %2368 = vmatpush2.msra.mxu0 0.0
    %2369 = vmatprep.subr.mxu0 0.0
    %2370 = vmatpush2.msra.mxu0 0.0
    %2371 = vmatprep.subr.mxu0 0.0
    %2372 = vmatpush2.msra.mxu0 0.0
    %2373 = vmatprep.subr.mxu0 0.0
    %2374 = vmatpush2.msra.mxu0 0.0
    %2375 = vmatprep.subr.mxu0 0.0
    %2376 = vmatpush2.msra.mxu0 0.0
    %2377 = vmatprep.subr.mxu0 0.0
    %2378 = vmatpush2.msra.mxu0 0.0
    %2379 = vmatprep.subr.mxu0 0.0
    %2380 = vmatpush2.msra.mxu0 0.0
    %2381 = vmatprep.subr.mxu0 0.0
    %2382 = vmatpush2.msra.mxu0 0.0
    %2383 = vmatprep.subr.mxu0 0.0
    %2384 = vmatpush2.msra.mxu0 0.0
    %2385 = vmatprep.mubr.f32.mxu0 0.0
    %2386 = vmatmul.mubr.f32.gmra.mxu0 %v2215
    %v2387 = vpop.f32.mrf.mxu0
    %v2388 = vadd.f32 %v430, %v2387
    %v2389 = vpop.f32.mrf.mxu0
    %2390 = vdwg.mxu0
    %2391 = vmatprep.subr.mxu0 0.0
    %2392 = vmatpush1.msra.mxu0 0.0
    %2393 = vmatprep.subr.mxu0 0.0
    %2394 = vmatpush1.msra.mxu0 0.0
    %2395 = vmatprep.subr.mxu0 0.0
    %2396 = vmatpush1.msra.mxu0 0.0
    %2397 = vmatprep.subr.mxu0 0.0
    %2398 = vmatpush1.msra.mxu0 0.0
    %2399 = vmatprep.subr.mxu0 0.0
    %2400 = vmatpush1.msra.mxu0 0.0
    %2401 = vmatprep.subr.mxu0 0.0
    %2402 = vmatpush1.msra.mxu0 0.0
    %2403 = vmatprep.subr.mxu0 0.0
    %2404 = vmatpush1.msra.mxu0 0.0
    %2405 = vmatprep.subr.mxu0 0.0
    %2406 = vmatpush1.msra.mxu0 0.0
    %2407 = vmatprep.subr.mxu0 0.0
    %2408 = vmatpush1.msra.mxu0 0.0
    %2409 = vmatprep.subr.mxu0 0.0
    %2410 = vmatpush1.msra.mxu0 0.0
    %2411 = vmatprep.subr.mxu0 0.0
    %2412 = vmatpush1.msra.mxu0 0.0
    %2413 = vmatprep.subr.mxu0 0.0
    %2414 = vmatpush1.msra.mxu0 0.0
    %2415 = vmatprep.subr.mxu0 0.0
    %2416 = vmatpush1.msra.mxu0 %v118
    %2417 = vmatprep.subr.mxu0 0.0
    %2418 = vmatpush1.msra.mxu0 %v117
    %2419 = vmatprep.subr.mxu0 0.0
    %2420 = vmatpush1.msra.mxu0 %v116
    %2421 = vmatprep.subr.mxu0 0.0
    %2422 = vmatpush1.msra.mxu0 %v115
    %2423 = vmatprep.subr.mxu0 0.0
    %2424 = vmatpush2.msra.mxu0 0.0
    %2425 = vmatprep.subr.mxu0 0.0
    %2426 = vmatpush2.msra.mxu0 0.0
    %2427 = vmatprep.subr.mxu0 0.0
    %2428 = vmatpush2.msra.mxu0 0.0
    %2429 = vmatprep.subr.mxu0 0.0
    %2430 = vmatpush2.msra.mxu0 0.0
    %2431 = vmatprep.subr.mxu0 0.0
    %2432 = vmatpush2.msra.mxu0 0.0
    %2433 = vmatprep.subr.mxu0 0.0
    %2434 = vmatpush2.msra.mxu0 0.0
    %2435 = vmatprep.subr.mxu0 0.0
    %2436 = vmatpush2.msra.mxu0 0.0
    %2437 = vmatprep.subr.mxu0 0.0
    %2438 = vmatpush2.msra.mxu0 0.0
    %2439 = vmatprep.subr.mxu0 0.0
    %2440 = vmatpush2.msra.mxu0 0.0
    %2441 = vmatprep.subr.mxu0 0.0
    %2442 = vmatpush2.msra.mxu0 0.0
    %2443 = vmatprep.subr.mxu0 0.0
    %2444 = vmatpush2.msra.mxu0 0.0
    %2445 = vmatprep.subr.mxu0 0.0
    %2446 = vmatpush2.msra.mxu0 0.0
    %2447 = vmatprep.subr.mxu0 0.0
    %2448 = vmatpush2.msra.mxu0 0.0
    %2449 = vmatprep.subr.mxu0 0.0
    %2450 = vmatpush2.msra.mxu0 0.0
    %2451 = vmatprep.subr.mxu0 0.0
    %2452 = vmatpush2.msra.mxu0 0.0
    %2453 = vmatprep.subr.mxu0 0.0
    %2454 = vmatpush2.msra.mxu0 0.0
    %2455 = vmatprep.mubr.f32.mxu0 0.0
    %2456 = vmatmul.mubr.f32.gmra.mxu0 %v2110
    %v2457 = vpop.f32.mrf.mxu0
    %v2458 = vadd.f32 0.0, %v2457
    %v2459 = vpop.f32.mrf.mxu0
    %2460 = vdwg.mxu0
    %v2461 = vadd.f32 %v2388, %v2458
    %v2462 = vxor.u32 %v2461, 2147483648
    %v2463 = vmul.f32 %v2462, 1.442695
    %v2464 = vpow.pop %v2463
    %v2465 = vadd.f32 %v2464, 1.0
    %v2466 = vrcp.pop %v2465
    %v2467 = vmul.f32 1.0, %v2466
    %v2468 = vtanh.pop %v2461
    %v2469 = vmul.f32 %v2467, %v2100
    %2471 = vrot.lane.b32.xlu0 %v2468, 32
    %v2472 = vpop.permute.xlu0 %2471
    %v2474 = vmul.f32 %v2467, %v2472
    %2476 = vrot.lane.b32.xlu0 %v2474, 32
    %v2477 = vpop.permute.xlu0 %2476
    %v2479 = vadd.f32 %v2469, %v2477
    %v2480 = vtanh.pop %v2479
    %2482 = vrot.lane.b32.xlu0 %v2480, 32
    %v2483 = vpop.permute.xlu0 %2482
    %v2485 = vmul.f32 %v2467, %v2483
    %2487 = vrot.lane.b32.xlu0 %v2485, 64
    %v2488 = vpop.permute.xlu0 %2487
    %v2489 = vsel %vm217, %v2488, 0
    %2491 = vmatprep.subr.mxu0 0.0
    %2492 = vmatpush1.msra.mxu0 0.0
    %2493 = vmatprep.subr.mxu0 0.0
    %2494 = vmatpush1.msra.mxu0 0.0
    %2495 = vmatprep.subr.mxu0 0.0
    %2496 = vmatpush1.msra.mxu0 0.0
    %2497 = vmatprep.subr.mxu0 0.0
    %2498 = vmatpush1.msra.mxu0 0.0
    %2499 = vmatprep.subr.mxu0 0.0
    %2500 = vmatpush1.msra.mxu0 0.0
    %2501 = vmatprep.subr.mxu0 0.0
    %2502 = vmatpush1.msra.mxu0 0.0
    %2503 = vmatprep.subr.mxu0 0.0
    %2504 = vmatpush1.msra.mxu0 0.0
    %2505 = vmatprep.subr.mxu0 0.0
    %2506 = vmatpush1.msra.mxu0 0.0
    %2507 = vmatprep.subr.mxu0 0.0
    %2508 = vmatpush1.msra.mxu0 0.0
    %2509 = vmatprep.subr.mxu0 0.0
    %2510 = vmatpush1.msra.mxu0 0.0
    %2511 = vmatprep.subr.mxu0 0.0
    %2512 = vmatpush1.msra.mxu0 0.0
    %2513 = vmatprep.subr.mxu0 0.0
    %2514 = vmatpush1.msra.mxu0 0.0
    %2515 = vmatprep.subr.mxu0 0.0
    %2516 = vmatpush1.msra.mxu0 %v123
    %2517 = vmatprep.subr.mxu0 0.0
    %2518 = vmatpush1.msra.mxu0 %v122
    %2519 = vmatprep.subr.mxu0 0.0
    %2520 = vmatpush1.msra.mxu0 %v121
    %2521 = vmatprep.subr.mxu0 0.0
    %2522 = vmatpush1.msra.mxu0 %v120
    %2523 = vmatprep.subr.mxu0 0.0
    %2524 = vmatpush2.msra.mxu0 0.0
    %2525 = vmatprep.subr.mxu0 0.0
    %2526 = vmatpush2.msra.mxu0 0.0
    %2527 = vmatprep.subr.mxu0 0.0
    %2528 = vmatpush2.msra.mxu0 0.0
    %2529 = vmatprep.subr.mxu0 0.0
    %2530 = vmatpush2.msra.mxu0 0.0
    %2531 = vmatprep.subr.mxu0 0.0
    %2532 = vmatpush2.msra.mxu0 0.0
    %2533 = vmatprep.subr.mxu0 0.0
    %2534 = vmatpush2.msra.mxu0 0.0
    %2535 = vmatprep.subr.mxu0 0.0
    %2536 = vmatpush2.msra.mxu0 0.0
    %2537 = vmatprep.subr.mxu0 0.0
    %2538 = vmatpush2.msra.mxu0 0.0
    %2539 = vmatprep.subr.mxu0 0.0
    %2540 = vmatpush2.msra.mxu0 0.0
    %2541 = vmatprep.subr.mxu0 0.0
    %2542 = vmatpush2.msra.mxu0 0.0
    %2543 = vmatprep.subr.mxu0 0.0
    %2544 = vmatpush2.msra.mxu0 0.0
    %2545 = vmatprep.subr.mxu0 0.0
    %2546 = vmatpush2.msra.mxu0 0.0
    %2547 = vmatprep.subr.mxu0 0.0
    %2548 = vmatpush2.msra.mxu0 0.0
    %2549 = vmatprep.subr.mxu0 0.0
    %2550 = vmatpush2.msra.mxu0 0.0
    %2551 = vmatprep.subr.mxu0 0.0
    %2552 = vmatpush2.msra.mxu0 0.0
    %2553 = vmatprep.subr.mxu0 0.0
    %2554 = vmatpush2.msra.mxu0 0.0
    %2555 = vmatprep.mubr.f32.mxu0 0.0
    %2556 = vmatmul.mubr.f32.gmra.mxu0 %v2489
    %v2557 = vpop.f32.mrf.mxu0
    %v2558 = vadd.f32 0.0, %v2557
    %v2559 = vpop.f32.mrf.mxu0
    %2560 = vdwg.mxu0
    %vm2561 = vcmp.eq.s32.totalorder %v216, 5
    %2563 = vset.pattern.permute.xlu0 0
    %2564 = vperm.xlu0 %2563, %v2558
    %v2565 = vpop.permute.xlu0 %2564
    %v2567 = vsel %vm2561, %v2565, %v2188
    %v2568 = vmax.f32 %v2189, %v2558
    %v2569 = vsub.f32 %v2189, %v2568
    %v2570 = vmul.f32 %v2569, 1.442695
    %v2571 = vpow.pop %v2570
    %v2572 = vsub.f32 %v2558, %v2568
    %v2573 = vmul.f32 %v2572, 1.442695
    %v2574 = vpow.pop %v2573
    %v2575 = vmul.f32 %v2571, %v2197
    %v2576 = vadd.f32 %v2575, %v2574
    %2578 = vset.pattern.permute.xlu0 0
    %2579 = vperm.xlu0 %2578, %v2571
    %v2580 = vpop.permute.xlu0 %2579
    %v2582 = vmul.f32 %v2580, %v2210
    %2584 = vset.pattern.permute.xlu0 0
    %2585 = vperm.xlu0 %2584, %v2574
    %v2586 = vpop.permute.xlu0 %2585
    %v2588 = vmul.f32 %v2586, %v2485
    %v2589 = vadd.f32 %v2582, %v2588
    %v2591 = vrot.slane %v2317, 4
    %2592 = vrot.lane.b32.xlu0 %v2591, 64
    %v2593 = vpop.permute.xlu0 %2592
    %v2594 = vsel %vm217, %v2593, 0
    %2596 = vmatprep.subr.mxu0 0.0
    %2597 = vmatpush1.msra.mxu0 0.0
    %2598 = vmatprep.subr.mxu0 0.0
    %2599 = vmatpush1.msra.mxu0 0.0
    %2600 = vmatprep.subr.mxu0 0.0
    %2601 = vmatpush1.msra.mxu0 0.0
    %2602 = vmatprep.subr.mxu0 0.0
    %2603 = vmatpush1.msra.mxu0 0.0
    %2604 = vmatprep.subr.mxu0 0.0
    %2605 = vmatpush1.msra.mxu0 0.0
    %2606 = vmatprep.subr.mxu0 0.0
    %2607 = vmatpush1.msra.mxu0 0.0
    %2608 = vmatprep.subr.mxu0 0.0
    %2609 = vmatpush1.msra.mxu0 0.0
    %2610 = vmatprep.subr.mxu0 0.0
    %2611 = vmatpush1.msra.mxu0 0.0
    %2612 = vmatprep.subr.mxu0 0.0
    %2613 = vmatpush1.msra.mxu0 0.0
    %2614 = vmatprep.subr.mxu0 0.0
    %2615 = vmatpush1.msra.mxu0 0.0
    %2616 = vmatprep.subr.mxu0 0.0
    %2617 = vmatpush1.msra.mxu0 0.0
    %2618 = vmatprep.subr.mxu0 0.0
    %2619 = vmatpush1.msra.mxu0 0.0
    %2620 = vmatprep.subr.mxu0 0.0
    %2621 = vmatpush1.msra.mxu0 %v110
    %2622 = vmatprep.subr.mxu0 0.0
    %2623 = vmatpush1.msra.mxu0 %v109
    %2624 = vmatprep.subr.mxu0 0.0
    %2625 = vmatpush1.msra.mxu0 %v108
    %2626 = vmatprep.subr.mxu0 0.0
    %2627 = vmatpush1.msra.mxu0 %v107
    %2628 = vmatprep.subr.mxu0 0.0
    %2629 = vmatpush2.msra.mxu0 0.0
    %2630 = vmatprep.subr.mxu0 0.0
    %2631 = vmatpush2.msra.mxu0 0.0
    %2632 = vmatprep.subr.mxu0 0.0
    %2633 = vmatpush2.msra.mxu0 0.0
    %2634 = vmatprep.subr.mxu0 0.0
    %2635 = vmatpush2.msra.mxu0 0.0
    %2636 = vmatprep.subr.mxu0 0.0
    %2637 = vmatpush2.msra.mxu0 0.0
    %2638 = vmatprep.subr.mxu0 0.0
    %2639 = vmatpush2.msra.mxu0 0.0
    %2640 = vmatprep.subr.mxu0 0.0
    %2641 = vmatpush2.msra.mxu0 0.0
    %2642 = vmatprep.subr.mxu0 0.0
    %2643 = vmatpush2.msra.mxu0 0.0
    %2644 = vmatprep.subr.mxu0 0.0
    %2645 = vmatpush2.msra.mxu0 0.0
    %2646 = vmatprep.subr.mxu0 0.0
    %2647 = vmatpush2.msra.mxu0 0.0
    %2648 = vmatprep.subr.mxu0 0.0
    %2649 = vmatpush2.msra.mxu0 0.0
    %2650 = vmatprep.subr.mxu0 0.0
    %2651 = vmatpush2.msra.mxu0 0.0
    %2652 = vmatprep.subr.mxu0 0.0
    %2653 = vmatpush2.msra.mxu0 0.0
    %2654 = vmatprep.subr.mxu0 0.0
    %2655 = vmatpush2.msra.mxu0 0.0
    %2656 = vmatprep.subr.mxu0 0.0
    %2657 = vmatpush2.msra.mxu0 0.0
    %2658 = vmatprep.subr.mxu0 0.0
    %2659 = vmatpush2.msra.mxu0 0.0
    %2660 = vmatprep.mubr.f32.mxu0 0.0
    %2661 = vmatmul.mubr.f32.gmra.mxu0 %v2594
    %v2662 = vpop.f32.mrf.mxu0
    %v2663 = vadd.f32 0.0, %v2662
    %v2664 = vpop.f32.mrf.mxu0
    %2665 = vdwg.mxu0
    %v2667 = vrot.slane %v2663, 2
    %v2669 = vadd.f32 %v212, %v2667
    %v2670 = vxor.u32 %v2669, 2147483648
    %v2671 = vmul.f32 %v2670, 1.442695
    %v2672 = vpow.pop %v2671
    %v2673 = vadd.f32 %v2672, 1.0
    %v2674 = vrcp.pop %v2673
    %v2675 = vmul.f32 1.0, %v2674
    %v2676 = vtanh.pop %v2669
    %v2678 = vrot.slane %v2311, 6
    %v2680 = vmul.f32 %v2675, %v2678
    %2682 = vrot.lane.b32.xlu0 %v2676, 32
    %v2683 = vpop.permute.xlu0 %2682
    %v2685 = vmul.f32 %v2675, %v2683
    %2687 = vrot.lane.b32.xlu0 %v2685, 32
    %v2688 = vpop.permute.xlu0 %2687
    %v2690 = vadd.f32 %v2680, %v2688
    %v2691 = vtanh.pop %v2690
    %2693 = vrot.lane.b32.xlu0 %v2691, 32
    %v2694 = vpop.permute.xlu0 %2693
    %v2696 = vmul.f32 %v2675, %v2694
    %v2697 = vrot.slane %v106, 6
    %v2699 = vadd.f32 %v2320, %v2697
    %2700 = vmatprep.subr.mxu0 0.0
    %2701 = vmatpush1.msra.mxu0 0.0
    %2702 = vmatprep.subr.mxu0 0.0
    %2703 = vmatpush1.msra.mxu0 0.0
    %2704 = vmatprep.subr.mxu0 0.0
    %2705 = vmatpush1.msra.mxu0 0.0
    %2706 = vmatprep.subr.mxu0 0.0
    %2707 = vmatpush1.msra.mxu0 0.0
    %2708 = vmatprep.subr.mxu0 0.0
    %2709 = vmatpush1.msra.mxu0 0.0
    %2710 = vmatprep.subr.mxu0 0.0
    %2711 = vmatpush1.msra.mxu0 0.0
    %2712 = vmatprep.subr.mxu0 0.0
    %2713 = vmatpush1.msra.mxu0 0.0
    %2714 = vmatprep.subr.mxu0 0.0
    %2715 = vmatpush1.msra.mxu0 0.0
    %2716 = vmatprep.subr.mxu0 0.0
    %2717 = vmatpush1.msra.mxu0 0.0
    %2718 = vmatprep.subr.mxu0 0.0
    %2719 = vmatpush1.msra.mxu0 0.0
    %2720 = vmatprep.subr.mxu0 0.0
    %2721 = vmatpush1.msra.mxu0 0.0
    %2722 = vmatprep.subr.mxu0 0.0
    %2723 = vmatpush1.msra.mxu0 0.0
    %2724 = vmatprep.subr.mxu0 0.0
    %2725 = vmatpush1.msra.mxu0 %v114
    %2726 = vmatprep.subr.mxu0 0.0
    %2727 = vmatpush1.msra.mxu0 %v113
    %2728 = vmatprep.subr.mxu0 0.0
    %2729 = vmatpush1.msra.mxu0 %v112
    %2730 = vmatprep.subr.mxu0 0.0
    %2731 = vmatpush1.msra.mxu0 %v111
    %2732 = vmatprep.subr.mxu0 0.0
    %2733 = vmatpush2.msra.mxu0 0.0
    %2734 = vmatprep.subr.mxu0 0.0
    %2735 = vmatpush2.msra.mxu0 0.0
    %2736 = vmatprep.subr.mxu0 0.0
    %2737 = vmatpush2.msra.mxu0 0.0
    %2738 = vmatprep.subr.mxu0 0.0
    %2739 = vmatpush2.msra.mxu0 0.0
    %2740 = vmatprep.subr.mxu0 0.0
    %2741 = vmatpush2.msra.mxu0 0.0
    %2742 = vmatprep.subr.mxu0 0.0
    %2743 = vmatpush2.msra.mxu0 0.0
    %2744 = vmatprep.subr.mxu0 0.0
    %2745 = vmatpush2.msra.mxu0 0.0
    %2746 = vmatprep.subr.mxu0 0.0
    %2747 = vmatpush2.msra.mxu0 0.0
    %2748 = vmatprep.subr.mxu0 0.0
    %2749 = vmatpush2.msra.mxu0 0.0
    %2750 = vmatprep.subr.mxu0 0.0
    %2751 = vmatpush2.msra.mxu0 0.0
    %2752 = vmatprep.subr.mxu0 0.0
    %2753 = vmatpush2.msra.mxu0 0.0
    %2754 = vmatprep.subr.mxu0 0.0
    %2755 = vmatpush2.msra.mxu0 0.0
    %2756 = vmatprep.subr.mxu0 0.0
    %2757 = vmatpush2.msra.mxu0 0.0
    %2758 = vmatprep.subr.mxu0 0.0
    %2759 = vmatpush2.msra.mxu0 0.0
    %2760 = vmatprep.subr.mxu0 0.0
    %2761 = vmatpush2.msra.mxu0 0.0
    %2762 = vmatprep.subr.mxu0 0.0
    %2763 = vmatpush2.msra.mxu0 0.0
    %2764 = vmatprep.mubr.f32.mxu0 0.0
    %2765 = vmatmul.mubr.f32.gmra.mxu0 %v2594
    %v2766 = vpop.f32.mrf.mxu0
    %v2767 = vadd.f32 %v430, %v2766
    %v2768 = vpop.f32.mrf.mxu0
    %2769 = vdwg.mxu0
    %2770 = vmatprep.subr.mxu0 0.0
    %2771 = vmatpush1.msra.mxu0 0.0
    %2772 = vmatprep.subr.mxu0 0.0
    %2773 = vmatpush1.msra.mxu0 0.0
    %2774 = vmatprep.subr.mxu0 0.0
    %2775 = vmatpush1.msra.mxu0 0.0
    %2776 = vmatprep.subr.mxu0 0.0
    %2777 = vmatpush1.msra.mxu0 0.0
    %2778 = vmatprep.subr.mxu0 0.0
    %2779 = vmatpush1.msra.mxu0 0.0
    %2780 = vmatprep.subr.mxu0 0.0
    %2781 = vmatpush1.msra.mxu0 0.0
    %2782 = vmatprep.subr.mxu0 0.0
    %2783 = vmatpush1.msra.mxu0 0.0
    %2784 = vmatprep.subr.mxu0 0.0
    %2785 = vmatpush1.msra.mxu0 0.0
    %2786 = vmatprep.subr.mxu0 0.0
    %2787 = vmatpush1.msra.mxu0 0.0
    %2788 = vmatprep.subr.mxu0 0.0
    %2789 = vmatpush1.msra.mxu0 0.0
    %2790 = vmatprep.subr.mxu0 0.0
    %2791 = vmatpush1.msra.mxu0 0.0
    %2792 = vmatprep.subr.mxu0 0.0
    %2793 = vmatpush1.msra.mxu0 0.0
    %2794 = vmatprep.subr.mxu0 0.0
    %2795 = vmatpush1.msra.mxu0 %v118
    %2796 = vmatprep.subr.mxu0 0.0
    %2797 = vmatpush1.msra.mxu0 %v117
    %2798 = vmatprep.subr.mxu0 0.0
    %2799 = vmatpush1.msra.mxu0 %v116
    %2800 = vmatprep.subr.mxu0 0.0
    %2801 = vmatpush1.msra.mxu0 %v115
    %2802 = vmatprep.subr.mxu0 0.0
    %2803 = vmatpush2.msra.mxu0 0.0
    %2804 = vmatprep.subr.mxu0 0.0
    %2805 = vmatpush2.msra.mxu0 0.0
    %2806 = vmatprep.subr.mxu0 0.0
    %2807 = vmatpush2.msra.mxu0 0.0
    %2808 = vmatprep.subr.mxu0 0.0
    %2809 = vmatpush2.msra.mxu0 0.0
    %2810 = vmatprep.subr.mxu0 0.0
    %2811 = vmatpush2.msra.mxu0 0.0
    %2812 = vmatprep.subr.mxu0 0.0
    %2813 = vmatpush2.msra.mxu0 0.0
    %2814 = vmatprep.subr.mxu0 0.0
    %2815 = vmatpush2.msra.mxu0 0.0
    %2816 = vmatprep.subr.mxu0 0.0
    %2817 = vmatpush2.msra.mxu0 0.0
    %2818 = vmatprep.subr.mxu0 0.0
    %2819 = vmatpush2.msra.mxu0 0.0
    %2820 = vmatprep.subr.mxu0 0.0
    %2821 = vmatpush2.msra.mxu0 0.0
    %2822 = vmatprep.subr.mxu0 0.0
    %2823 = vmatpush2.msra.mxu0 0.0
    %2824 = vmatprep.subr.mxu0 0.0
    %2825 = vmatpush2.msra.mxu0 0.0
    %2826 = vmatprep.subr.mxu0 0.0
    %2827 = vmatpush2.msra.mxu0 0.0
    %2828 = vmatprep.subr.mxu0 0.0
    %2829 = vmatpush2.msra.mxu0 0.0
    %2830 = vmatprep.subr.mxu0 0.0
    %2831 = vmatpush2.msra.mxu0 0.0
    %2832 = vmatprep.subr.mxu0 0.0
    %2833 = vmatpush2.msra.mxu0 0.0
    %2834 = vmatprep.mubr.f32.mxu0 0.0
    %2835 = vmatmul.mubr.f32.gmra.mxu0 %v2489
    %v2836 = vpop.f32.mrf.mxu0
    %v2837 = vadd.f32 0.0, %v2836
    %v2838 = vpop.f32.mrf.mxu0
    %2839 = vdwg.mxu0
    %v2840 = vadd.f32 %v2767, %v2837
    %v2841 = vxor.u32 %v2840, 2147483648
    %v2842 = vmul.f32 %v2841, 1.442695
    %v2843 = vpow.pop %v2842
    %v2844 = vadd.f32 %v2843, 1.0
    %v2845 = vrcp.pop %v2844
    %v2846 = vmul.f32 1.0, %v2845
    %v2847 = vtanh.pop %v2840
    %v2848 = vmul.f32 %v2846, %v2479
    %2850 = vrot.lane.b32.xlu0 %v2847, 32
    %v2851 = vpop.permute.xlu0 %2850
    %v2853 = vmul.f32 %v2846, %v2851
    %2855 = vrot.lane.b32.xlu0 %v2853, 32
    %v2856 = vpop.permute.xlu0 %2855
    %v2858 = vadd.f32 %v2848, %v2856
    %v2859 = vtanh.pop %v2858
    %2861 = vrot.lane.b32.xlu0 %v2859, 32
    %v2862 = vpop.permute.xlu0 %2861
    %v2864 = vmul.f32 %v2846, %v2862
    %2866 = vrot.lane.b32.xlu0 %v2864, 64
    %v2867 = vpop.permute.xlu0 %2866
    %v2868 = vsel %vm217, %v2867, 0
    %2870 = vmatprep.subr.mxu0 0.0
    %2871 = vmatpush1.msra.mxu0 0.0
    %2872 = vmatprep.subr.mxu0 0.0
    %2873 = vmatpush1.msra.mxu0 0.0
    %2874 = vmatprep.subr.mxu0 0.0
    %2875 = vmatpush1.msra.mxu0 0.0
    %2876 = vmatprep.subr.mxu0 0.0
    %2877 = vmatpush1.msra.mxu0 0.0
    %2878 = vmatprep.subr.mxu0 0.0
    %2879 = vmatpush1.msra.mxu0 0.0
    %2880 = vmatprep.subr.mxu0 0.0
    %2881 = vmatpush1.msra.mxu0 0.0
    %2882 = vmatprep.subr.mxu0 0.0
    %2883 = vmatpush1.msra.mxu0 0.0
    %2884 = vmatprep.subr.mxu0 0.0
    %2885 = vmatpush1.msra.mxu0 0.0
    %2886 = vmatprep.subr.mxu0 0.0
    %2887 = vmatpush1.msra.mxu0 0.0
    %2888 = vmatprep.subr.mxu0 0.0
    %2889 = vmatpush1.msra.mxu0 0.0
    %2890 = vmatprep.subr.mxu0 0.0
    %2891 = vmatpush1.msra.mxu0 0.0
    %2892 = vmatprep.subr.mxu0 0.0
    %2893 = vmatpush1.msra.mxu0 0.0
    %2894 = vmatprep.subr.mxu0 0.0
    %2895 = vmatpush1.msra.mxu0 %v123
    %2896 = vmatprep.subr.mxu0 0.0
    %2897 = vmatpush1.msra.mxu0 %v122
    %2898 = vmatprep.subr.mxu0 0.0
    %2899 = vmatpush1.msra.mxu0 %v121
    %2900 = vmatprep.subr.mxu0 0.0
    %2901 = vmatpush1.msra.mxu0 %v120
    %2902 = vmatprep.subr.mxu0 0.0
    %2903 = vmatpush2.msra.mxu0 0.0
    %2904 = vmatprep.subr.mxu0 0.0
    %2905 = vmatpush2.msra.mxu0 0.0
    %2906 = vmatprep.subr.mxu0 0.0
    %2907 = vmatpush2.msra.mxu0 0.0
    %2908 = vmatprep.subr.mxu0 0.0
    %2909 = vmatpush2.msra.mxu0 0.0
    %2910 = vmatprep.subr.mxu0 0.0
    %2911 = vmatpush2.msra.mxu0 0.0
    %2912 = vmatprep.subr.mxu0 0.0
    %2913 = vmatpush2.msra.mxu0 0.0
    %2914 = vmatprep.subr.mxu0 0.0
    %2915 = vmatpush2.msra.mxu0 0.0
    %2916 = vmatprep.subr.mxu0 0.0
    %2917 = vmatpush2.msra.mxu0 0.0
    %2918 = vmatprep.subr.mxu0 0.0
    %2919 = vmatpush2.msra.mxu0 0.0
    %2920 = vmatprep.subr.mxu0 0.0
    %2921 = vmatpush2.msra.mxu0 0.0
    %2922 = vmatprep.subr.mxu0 0.0
    %2923 = vmatpush2.msra.mxu0 0.0
    %2924 = vmatprep.subr.mxu0 0.0
    %2925 = vmatpush2.msra.mxu0 0.0
    %2926 = vmatprep.subr.mxu0 0.0
    %2927 = vmatpush2.msra.mxu0 0.0
    %2928 = vmatprep.subr.mxu0 0.0
    %2929 = vmatpush2.msra.mxu0 0.0
    %2930 = vmatprep.subr.mxu0 0.0
    %2931 = vmatpush2.msra.mxu0 0.0
    %2932 = vmatprep.subr.mxu0 0.0
    %2933 = vmatpush2.msra.mxu0 0.0
    %2934 = vmatprep.mubr.f32.mxu0 0.0
    %2935 = vmatmul.mubr.f32.gmra.mxu0 %v2868
    %v2936 = vpop.f32.mrf.mxu0
    %v2937 = vadd.f32 0.0, %v2936
    %v2938 = vpop.f32.mrf.mxu0
    %2939 = vdwg.mxu0
    %vm2940 = vcmp.eq.s32.totalorder %v216, 6
    %2942 = vset.pattern.permute.xlu0 0
    %2943 = vperm.xlu0 %2942, %v2937
    %v2944 = vpop.permute.xlu0 %2943
    %v2946 = vsel %vm2940, %v2944, %v2567
    %v2947 = vmax.f32 %v2568, %v2937
    %v2948 = vsub.f32 %v2568, %v2947
    %v2949 = vmul.f32 %v2948, 1.442695
    %v2950 = vpow.pop %v2949
    %v2951 = vsub.f32 %v2937, %v2947
    %v2952 = vmul.f32 %v2951, 1.442695
    %v2953 = vpow.pop %v2952
    %v2954 = vmul.f32 %v2950, %v2576
    %v2955 = vadd.f32 %v2954, %v2953
    %2957 = vset.pattern.permute.xlu0 0
    %2958 = vperm.xlu0 %2957, %v2950
    %v2959 = vpop.permute.xlu0 %2958
    %v2961 = vmul.f32 %v2959, %v2589
    %2963 = vset.pattern.permute.xlu0 0
    %2964 = vperm.xlu0 %2963, %v2953
    %v2965 = vpop.permute.xlu0 %2964
    %v2967 = vmul.f32 %v2965, %v2864
    %v2968 = vadd.f32 %v2961, %v2967
    %v2970 = vrot.slane %v2696, 6
    %2971 = vrot.lane.b32.xlu0 %v2970, 64
    %v2972 = vpop.permute.xlu0 %2971
    %v2973 = vsel %vm217, %v2972, 0
    %2975 = vmatprep.subr.mxu0 0.0
    %2976 = vmatpush1.msra.mxu0 0.0
    %2977 = vmatprep.subr.mxu0 0.0
    %2978 = vmatpush1.msra.mxu0 0.0
    %2979 = vmatprep.subr.mxu0 0.0
    %2980 = vmatpush1.msra.mxu0 0.0
    %2981 = vmatprep.subr.mxu0 0.0
    %2982 = vmatpush1.msra.mxu0 0.0
    %2983 = vmatprep.subr.mxu0 0.0
    %2984 = vmatpush1.msra.mxu0 0.0
    %2985 = vmatprep.subr.mxu0 0.0
    %2986 = vmatpush1.msra.mxu0 0.0
    %2987 = vmatprep.subr.mxu0 0.0
    %2988 = vmatpush1.msra.mxu0 0.0
    %2989 = vmatprep.subr.mxu0 0.0
    %2990 = vmatpush1.msra.mxu0 0.0
    %2991 = vmatprep.subr.mxu0 0.0
    %2992 = vmatpush1.msra.mxu0 0.0
    %2993 = vmatprep.subr.mxu0 0.0
    %2994 = vmatpush1.msra.mxu0 0.0
    %2995 = vmatprep.subr.mxu0 0.0
    %2996 = vmatpush1.msra.mxu0 0.0
    %2997 = vmatprep.subr.mxu0 0.0
    %2998 = vmatpush1.msra.mxu0 0.0
    %2999 = vmatprep.subr.mxu0 0.0
    %3000 = vmatpush1.msra.mxu0 %v114
    %3001 = vmatprep.subr.mxu0 0.0
    %3002 = vmatpush1.msra.mxu0 %v113
    %3003 = vmatprep.subr.mxu0 0.0
    %3004 = vmatpush1.msra.mxu0 %v112
    %3005 = vmatprep.subr.mxu0 0.0
    %3006 = vmatpush1.msra.mxu0 %v111
    %3007 = vmatprep.subr.mxu0 0.0
    %3008 = vmatpush2.msra.mxu0 0.0
    %3009 = vmatprep.subr.mxu0 0.0
    %3010 = vmatpush2.msra.mxu0 0.0
    %3011 = vmatprep.subr.mxu0 0.0
    %3012 = vmatpush2.msra.mxu0 0.0
    %3013 = vmatprep.subr.mxu0 0.0
    %3014 = vmatpush2.msra.mxu0 0.0
    %3015 = vmatprep.subr.mxu0 0.0
    %3016 = vmatpush2.msra.mxu0 0.0
    %3017 = vmatprep.subr.mxu0 0.0
    %3018 = vmatpush2.msra.mxu0 0.0
    %3019 = vmatprep.subr.mxu0 0.0
    %3020 = vmatpush2.msra.mxu0 0.0
    %3021 = vmatprep.subr.mxu0 0.0
    %3022 = vmatpush2.msra.mxu0 0.0
    %3023 = vmatprep.subr.mxu0 0.0
    %3024 = vmatpush2.msra.mxu0 0.0
    %3025 = vmatprep.subr.mxu0 0.0
    %3026 = vmatpush2.msra.mxu0 0.0
    %3027 = vmatprep.subr.mxu0 0.0
    %3028 = vmatpush2.msra.mxu0 0.0
    %3029 = vmatprep.subr.mxu0 0.0
    %3030 = vmatpush2.msra.mxu0 0.0
    %3031 = vmatprep.subr.mxu0 0.0
    %3032 = vmatpush2.msra.mxu0 0.0
    %3033 = vmatprep.subr.mxu0 0.0
    %3034 = vmatpush2.msra.mxu0 0.0
    %3035 = vmatprep.subr.mxu0 0.0
    %3036 = vmatpush2.msra.mxu0 0.0
    %3037 = vmatprep.subr.mxu0 0.0
    %3038 = vmatpush2.msra.mxu0 0.0
    %3039 = vmatprep.mubr.f32.mxu0 0.0
    %3040 = vmatmul.mubr.f32.gmra.mxu0 %v2973
    %v3041 = vpop.f32.mrf.mxu0
    %v3042 = vadd.f32 %v430, %v3041
    %v3043 = vpop.f32.mrf.mxu0
    %3044 = vdwg.mxu0
    %3045 = vmatprep.subr.mxu0 0.0
    %3046 = vmatpush1.msra.mxu0 0.0
    %3047 = vmatprep.subr.mxu0 0.0
    %3048 = vmatpush1.msra.mxu0 0.0
    %3049 = vmatprep.subr.mxu0 0.0
    %3050 = vmatpush1.msra.mxu0 0.0
    %3051 = vmatprep.subr.mxu0 0.0
    %3052 = vmatpush1.msra.mxu0 0.0
    %3053 = vmatprep.subr.mxu0 0.0
    %3054 = vmatpush1.msra.mxu0 0.0
    %3055 = vmatprep.subr.mxu0 0.0
    %3056 = vmatpush1.msra.mxu0 0.0
    %3057 = vmatprep.subr.mxu0 0.0
    %3058 = vmatpush1.msra.mxu0 0.0
    %3059 = vmatprep.subr.mxu0 0.0
    %3060 = vmatpush1.msra.mxu0 0.0
    %3061 = vmatprep.subr.mxu0 0.0
    %3062 = vmatpush1.msra.mxu0 0.0
    %3063 = vmatprep.subr.mxu0 0.0
    %3064 = vmatpush1.msra.mxu0 0.0
    %3065 = vmatprep.subr.mxu0 0.0
    %3066 = vmatpush1.msra.mxu0 0.0
    %3067 = vmatprep.subr.mxu0 0.0
    %3068 = vmatpush1.msra.mxu0 0.0
    %3069 = vmatprep.subr.mxu0 0.0
    %3070 = vmatpush1.msra.mxu0 %v118
    %3071 = vmatprep.subr.mxu0 0.0
    %3072 = vmatpush1.msra.mxu0 %v117
    %3073 = vmatprep.subr.mxu0 0.0
    %3074 = vmatpush1.msra.mxu0 %v116
    %3075 = vmatprep.subr.mxu0 0.0
    %3076 = vmatpush1.msra.mxu0 %v115
    %3077 = vmatprep.subr.mxu0 0.0
    %3078 = vmatpush2.msra.mxu0 0.0
    %3079 = vmatprep.subr.mxu0 0.0
    %3080 = vmatpush2.msra.mxu0 0.0
    %3081 = vmatprep.subr.mxu0 0.0
    %3082 = vmatpush2.msra.mxu0 0.0
    %3083 = vmatprep.subr.mxu0 0.0
    %3084 = vmatpush2.msra.mxu0 0.0
    %3085 = vmatprep.subr.mxu0 0.0
    %3086 = vmatpush2.msra.mxu0 0.0
    %3087 = vmatprep.subr.mxu0 0.0
    %3088 = vmatpush2.msra.mxu0 0.0
    %3089 = vmatprep.subr.mxu0 0.0
    %3090 = vmatpush2.msra.mxu0 0.0
    %3091 = vmatprep.subr.mxu0 0.0
    %3092 = vmatpush2.msra.mxu0 0.0
    %3093 = vmatprep.subr.mxu0 0.0
    %3094 = vmatpush2.msra.mxu0 0.0
    %3095 = vmatprep.subr.mxu0 0.0
    %3096 = vmatpush2.msra.mxu0 0.0
    %3097 = vmatprep.subr.mxu0 0.0
    %3098 = vmatpush2.msra.mxu0 0.0
    %3099 = vmatprep.subr.mxu0 0.0
    %3100 = vmatpush2.msra.mxu0 0.0
    %3101 = vmatprep.subr.mxu0 0.0
    %3102 = vmatpush2.msra.mxu0 0.0
    %3103 = vmatprep.subr.mxu0 0.0
    %3104 = vmatpush2.msra.mxu0 0.0
    %3105 = vmatprep.subr.mxu0 0.0
    %3106 = vmatpush2.msra.mxu0 0.0
    %3107 = vmatprep.subr.mxu0 0.0
    %3108 = vmatpush2.msra.mxu0 0.0
    %3109 = vmatprep.mubr.f32.mxu0 0.0
    %3110 = vmatmul.mubr.f32.gmra.mxu0 %v2868
    %v3111 = vpop.f32.mrf.mxu0
    %v3112 = vadd.f32 0.0, %v3111
    %v3113 = vpop.f32.mrf.mxu0
    %3114 = vdwg.mxu0
    %v3115 = vadd.f32 %v3042, %v3112
    %v3116 = vxor.u32 %v3115, 2147483648
    %v3117 = vmul.f32 %v3116, 1.442695
    %v3118 = vpow.pop %v3117
    %v3119 = vadd.f32 %v3118, 1.0
    %v3120 = vrcp.pop %v3119
    %v3121 = vmul.f32 1.0, %v3120
    %v3122 = vtanh.pop %v3115
    %v3123 = vmul.f32 %v3121, %v2858
    %3125 = vrot.lane.b32.xlu0 %v3122, 32
    %v3126 = vpop.permute.xlu0 %3125
    %v3128 = vmul.f32 %v3121, %v3126
    %3130 = vrot.lane.b32.xlu0 %v3128, 32
    %v3131 = vpop.permute.xlu0 %3130
    %v3133 = vadd.f32 %v3123, %v3131
    %v3134 = vtanh.pop %v3133
    %3136 = vrot.lane.b32.xlu0 %v3134, 32
    %v3137 = vpop.permute.xlu0 %3136
    %v3139 = vmul.f32 %v3121, %v3137
    %3141 = vrot.lane.b32.xlu0 %v3139, 64
    %v3142 = vpop.permute.xlu0 %3141
    %v3143 = vsel %vm217, %v3142, 0
    %3145 = vmatprep.subr.mxu0 0.0
    %3146 = vmatpush1.msra.mxu0 0.0
    %3147 = vmatprep.subr.mxu0 0.0
    %3148 = vmatpush1.msra.mxu0 0.0
    %3149 = vmatprep.subr.mxu0 0.0
    %3150 = vmatpush1.msra.mxu0 0.0
    %3151 = vmatprep.subr.mxu0 0.0
    %3152 = vmatpush1.msra.mxu0 0.0
    %3153 = vmatprep.subr.mxu0 0.0
    %3154 = vmatpush1.msra.mxu0 0.0
    %3155 = vmatprep.subr.mxu0 0.0
    %3156 = vmatpush1.msra.mxu0 0.0
    %3157 = vmatprep.subr.mxu0 0.0
    %3158 = vmatpush1.msra.mxu0 0.0
    %3159 = vmatprep.subr.mxu0 0.0
    %3160 = vmatpush1.msra.mxu0 0.0
    %3161 = vmatprep.subr.mxu0 0.0
    %3162 = vmatpush1.msra.mxu0 0.0
    %3163 = vmatprep.subr.mxu0 0.0
    %3164 = vmatpush1.msra.mxu0 0.0
    %3165 = vmatprep.subr.mxu0 0.0
    %3166 = vmatpush1.msra.mxu0 0.0
    %3167 = vmatprep.subr.mxu0 0.0
    %3168 = vmatpush1.msra.mxu0 0.0
    %3169 = vmatprep.subr.mxu0 0.0
    %3170 = vmatpush1.msra.mxu0 %v123
    %3171 = vmatprep.subr.mxu0 0.0
    %3172 = vmatpush1.msra.mxu0 %v122
    %3173 = vmatprep.subr.mxu0 0.0
    %3174 = vmatpush1.msra.mxu0 %v121
    %3175 = vmatprep.subr.mxu0 0.0
    %3176 = vmatpush1.msra.mxu0 %v120
    %3177 = vmatprep.subr.mxu0 0.0
    %3178 = vmatpush2.msra.mxu0 0.0
    %3179 = vmatprep.subr.mxu0 0.0
    %3180 = vmatpush2.msra.mxu0 0.0
    %3181 = vmatprep.subr.mxu0 0.0
    %3182 = vmatpush2.msra.mxu0 0.0
    %3183 = vmatprep.subr.mxu0 0.0
    %3184 = vmatpush2.msra.mxu0 0.0
    %3185 = vmatprep.subr.mxu0 0.0
    %3186 = vmatpush2.msra.mxu0 0.0
    %3187 = vmatprep.subr.mxu0 0.0
    %3188 = vmatpush2.msra.mxu0 0.0
    %3189 = vmatprep.subr.mxu0 0.0
    %3190 = vmatpush2.msra.mxu0 0.0
    %3191 = vmatprep.subr.mxu0 0.0
    %3192 = vmatpush2.msra.mxu0 0.0
    %3193 = vmatprep.subr.mxu0 0.0
    %3194 = vmatpush2.msra.mxu0 0.0
    %3195 = vmatprep.subr.mxu0 0.0
    %3196 = vmatpush2.msra.mxu0 0.0
    %3197 = vmatprep.subr.mxu0 0.0
    %3198 = vmatpush2.msra.mxu0 0.0
    %3199 = vmatprep.subr.mxu0 0.0
    %3200 = vmatpush2.msra.mxu0 0.0
    %3201 = vmatprep.subr.mxu0 0.0
    %3202 = vmatpush2.msra.mxu0 0.0
    %3203 = vmatprep.subr.mxu0 0.0
    %3204 = vmatpush2.msra.mxu0 0.0
    %3205 = vmatprep.subr.mxu0 0.0
    %3206 = vmatpush2.msra.mxu0 0.0
    %3207 = vmatprep.subr.mxu0 0.0
    %3208 = vmatpush2.msra.mxu0 0.0
    %3209 = vmatprep.mubr.f32.mxu0 0.0
    %3210 = vmatmul.mubr.f32.gmra.mxu0 %v3143
    %v3211 = vpop.f32.mrf.mxu0
    %v3212 = vadd.f32 0.0, %v3211
    %v3213 = vpop.f32.mrf.mxu0
    %3214 = vdwg.mxu0
    %vm3215 = vcmp.eq.s32.totalorder %v216, 7
    %3217 = vset.pattern.permute.xlu0 0
    %3218 = vperm.xlu0 %3217, %v3212
    %v3219 = vpop.permute.xlu0 %3218
    %v3221 = vsel %vm3215, %v3219, %v2946
    %v3222 = vmax.f32 %v2947, %v3212
    %v3223 = vsub.f32 %v2947, %v3222
    %v3224 = vmul.f32 %v3223, 1.442695
    %v3225 = vpow.pop %v3224
    %v3226 = vsub.f32 %v3212, %v3222
    %v3227 = vmul.f32 %v3226, 1.442695
    %v3228 = vpow.pop %v3227
    %v3229 = vmul.f32 %v3225, %v2955
    %v3230 = vadd.f32 %v3229, %v3228
    %3232 = vset.pattern.permute.xlu0 0
    %3233 = vperm.xlu0 %3232, %v3225
    %v3234 = vpop.permute.xlu0 %3233
    %v3236 = vmul.f32 %v3234, %v2968
    %3238 = vset.pattern.permute.xlu0 0
    %3239 = vperm.xlu0 %3238, %v3228
    %v3240 = vpop.permute.xlu0 %3239
    %v3242 = vmul.f32 %v3240, %v3139
    %v3243 = vadd.f32 %v3236, %v3242
    %v3244 = vrcp.pop %v3230
    %3246 = vset.pattern.permute.xlu0 0
    %3247 = vperm.xlu0 %3246, %v3222
    %v3248 = vpop.permute.xlu0 %3247
    %v3250 = vsub.f32 %v3221, %v3248
    %v3251 = vmul.f32 %v3250, 1.442695
    %v3252 = vpow.pop %v3251
    %3254 = vset.pattern.permute.xlu0 0
    %3255 = vperm.xlu0 %3254, %v3244
    %v3256 = vpop.permute.xlu0 %3255
    %v3258 = vmul.f32 %v3252, %v3256
    %vm3259 = vcmask 58368
    %3260 = vst.msk [vmem:[#allocation12] sm:$0x3] %vm3259, %v3258
    %v3261 = vmul.f32 %v3243, %v3256
    %v3262 = vmul.f32 %v2699, 0.125
    %v3263 = vld [vmem:[#allocation7] sm:$0xff]
    %v3264 = vld [vmem:[#allocation7 + $0x8] sm:$0xff]
    %v3265 = vld [vmem:[#allocation8] sm:$0x1]
    %v3267 = vlaneseq
    %v3268 = vshrl.u32 %v3267, 7
    %v3269 = vsub.s32 0, %v3268
    %v3270 = vrot.slane %v3265, %v3269
    %v3273 = vsel %vm133, %v3262, 0
    %3275 = vmatprep.subr.mxu0 0.0
    %3276 = vmatpush1.msra.mxu0 0.0
    %3277 = vmatprep.subr.mxu0 0.0
    %3278 = vmatpush1.msra.mxu0 0.0
    %3279 = vmatprep.subr.mxu0 0.0
    %3280 = vmatpush1.msra.mxu0 0.0
    %3281 = vmatprep.subr.mxu0 0.0
    %3282 = vmatpush1.msra.mxu0 0.0
    %3283 = vmatprep.subr.mxu0 0.0
    %3284 = vmatpush1.msra.mxu0 0.0
    %3285 = vmatprep.subr.mxu0 0.0
    %3286 = vmatpush1.msra.mxu0 0.0
    %3287 = vmatprep.subr.mxu0 0.0
    %3288 = vmatpush1.msra.mxu0 0.0
    %3289 = vmatprep.subr.mxu0 0.0
    %3290 = vmatpush1.msra.mxu0 0.0
    %3291 = vmatprep.subr.mxu0 0.0
    %3292 = vmatpush1.msra.mxu0 0.0
    %3293 = vmatprep.subr.mxu0 0.0
    %3294 = vmatpush1.msra.mxu0 0.0
    %3295 = vmatprep.subr.mxu0 0.0
    %3296 = vmatpush1.msra.mxu0 0.0
    %3297 = vmatprep.subr.mxu0 0.0
    %3298 = vmatpush1.msra.mxu0 0.0
    %3299 = vmatprep.subr.mxu0 0.0
    %3300 = vmatpush1.msra.mxu0 0.0
    %3301 = vmatprep.subr.mxu0 0.0
    %3302 = vmatpush1.msra.mxu0 0.0
    %3303 = vmatprep.subr.mxu0 0.0
    %3304 = vmatpush1.msra.mxu0 %v3264
    %3305 = vmatprep.subr.mxu0 0.0
    %3306 = vmatpush1.msra.mxu0 %v3263
    %3307 = vmatprep.subr.mxu0 0.0
    %3308 = vmatpush2.msra.mxu0 0.0
    %3309 = vmatprep.subr.mxu0 0.0
    %3310 = vmatpush2.msra.mxu0 0.0
    %3311 = vmatprep.subr.mxu0 0.0
    %3312 = vmatpush2.msra.mxu0 0.0
    %3313 = vmatprep.subr.mxu0 0.0
    %3314 = vmatpush2.msra.mxu0 0.0
    %3315 = vmatprep.subr.mxu0 0.0
    %3316 = vmatpush2.msra.mxu0 0.0
    %3317 = vmatprep.subr.mxu0 0.0
    %3318 = vmatpush2.msra.mxu0 0.0
    %3319 = vmatprep.subr.mxu0 0.0
    %3320 = vmatpush2.msra.mxu0 0.0
    %3321 = vmatprep.subr.mxu0 0.0
    %3322 = vmatpush2.msra.mxu0 0.0
    %3323 = vmatprep.subr.mxu0 0.0
    %3324 = vmatpush2.msra.mxu0 0.0
    %3325 = vmatprep.subr.mxu0 0.0
    %3326 = vmatpush2.msra.mxu0 0.0
    %3327 = vmatprep.subr.mxu0 0.0
    %3328 = vmatpush2.msra.mxu0 0.0
    %3329 = vmatprep.subr.mxu0 0.0
    %3330 = vmatpush2.msra.mxu0 0.0
    %3331 = vmatprep.subr.mxu0 0.0
    %3332 = vmatpush2.msra.mxu0 0.0
    %3333 = vmatprep.subr.mxu0 0.0
    %3334 = vmatpush2.msra.mxu0 0.0
    %3335 = vmatprep.subr.mxu0 0.0
    %3336 = vmatpush2.msra.mxu0 0.0
    %3337 = vmatprep.subr.mxu0 0.0
    %3338 = vmatpush2.msra.mxu0 0.0
    %3339 = vmatprep.mubr.f32.mxu0 0.0
    %3340 = vmatmul.mubr.f32.gmra.mxu0 %v3273
    %v3341 = vpop.f32.mrf.mxu0
    %v3342 = vadd.f32 %v3270, %v3341
    %v3343 = vpop.f32.mrf.mxu0
    %3344 = vdwg.mxu0
    %3346 = vrot.lane.b32.xlu0 %v3342, 64
    %v3347 = vpop.permute.xlu0 %3346
    %v3349 = vadd.f32 %v3261, %v3347
    %v3350 = vxor.u32 %v3349, 2147483648
    %v3351 = vmul.f32 %v3350, 1.442695
    %v3352 = vpow.pop %v3351
    %v3353 = vadd.f32 %v3352, 1.0
    %v3354 = vrcp.pop %v3353
    %v3355 = vmul.f32 1.0, %v3354
    %v3356 = vmul.f32 %v3349, %v3355
    %v3357 = vld [vmem:[%s10] sm:$0xff]
    %v3358 = vld [vmem:[%s10 + $0x8] sm:$0xff]
    %v3359 = vld [vmem:[%s10 + $0x10] sm:$0xff]
    %v3360 = vld [vmem:[%s10 + $0x18] sm:$0xff]
    %v3361 = vld [vmem:[#allocation10] sm:$0x1]
    %v3363 = vlaneseq
    %v3364 = vshrl.u32 %v3363, 7
    %v3365 = vsub.s32 0, %v3364
    %v3366 = vrot.slane %v3361, %v3365
    %3369 = vrot.lane.b32.xlu0 %v3356, 64
    %v3370 = vpop.permute.xlu0 %3369
    %v3371 = vsel %vm217, %v3370, 0
    %3373 = vmatprep.subr.mxu0 0.0
    %3374 = vmatpush1.msra.mxu0 0.0
    %3375 = vmatprep.subr.mxu0 0.0
    %3376 = vmatpush1.msra.mxu0 0.0
    %3377 = vmatprep.subr.mxu0 0.0
    %3378 = vmatpush1.msra.mxu0 0.0
    %3379 = vmatprep.subr.mxu0 0.0
    %3380 = vmatpush1.msra.mxu0 0.0
    %3381 = vmatprep.subr.mxu0 0.0
    %3382 = vmatpush1.msra.mxu0 0.0
    %3383 = vmatprep.subr.mxu0 0.0
    %3384 = vmatpush1.msra.mxu0 0.0
    %3385 = vmatprep.subr.mxu0 0.0
    %3386 = vmatpush1.msra.mxu0 0.0
    %3387 = vmatprep.subr.mxu0 0.0
    %3388 = vmatpush1.msra.mxu0 0.0
    %3389 = vmatprep.subr.mxu0 0.0
    %3390 = vmatpush1.msra.mxu0 0.0
    %3391 = vmatprep.subr.mxu0 0.0
    %3392 = vmatpush1.msra.mxu0 0.0
    %3393 = vmatprep.subr.mxu0 0.0
    %3394 = vmatpush1.msra.mxu0 0.0
    %3395 = vmatprep.subr.mxu0 0.0
    %3396 = vmatpush1.msra.mxu0 0.0
    %3397 = vmatprep.subr.mxu0 0.0
    %3398 = vmatpush1.msra.mxu0 %v3360
    %3399 = vmatprep.subr.mxu0 0.0
    %3400 = vmatpush1.msra.mxu0 %v3359
    %3401 = vmatprep.subr.mxu0 0.0
    %3402 = vmatpush1.msra.mxu0 %v3358
    %3403 = vmatprep.subr.mxu0 0.0
    %3404 = vmatpush1.msra.mxu0 %v3357
    %3405 = vmatprep.subr.mxu0 0.0
    %3406 = vmatpush2.msra.mxu0 0.0
    %3407 = vmatprep.subr.mxu0 0.0
    %3408 = vmatpush2.msra.mxu0 0.0
    %3409 = vmatprep.subr.mxu0 0.0
    %3410 = vmatpush2.msra.mxu0 0.0
    %3411 = vmatprep.subr.mxu0 0.0
    %3412 = vmatpush2.msra.mxu0 0.0
    %3413 = vmatprep.subr.mxu0 0.0
    %3414 = vmatpush2.msra.mxu0 0.0
    %3415 = vmatprep.subr.mxu0 0.0
    %3416 = vmatpush2.msra.mxu0 0.0
    %3417 = vmatprep.subr.mxu0 0.0
    %3418 = vmatpush2.msra.mxu0 0.0
    %3419 = vmatprep.subr.mxu0 0.0
    %3420 = vmatpush2.msra.mxu0 0.0
    %3421 = vmatprep.subr.mxu0 0.0
    %3422 = vmatpush2.msra.mxu0 0.0
    %3423 = vmatprep.subr.mxu0 0.0
    %3424 = vmatpush2.msra.mxu0 0.0
    %3425 = vmatprep.subr.mxu0 0.0
    %3426 = vmatpush2.msra.mxu0 0.0
    %3427 = vmatprep.subr.mxu0 0.0
    %3428 = vmatpush2.msra.mxu0 0.0
    %3429 = vmatprep.subr.mxu0 0.0
    %3430 = vmatpush2.msra.mxu0 0.0
    %3431 = vmatprep.subr.mxu0 0.0
    %3432 = vmatpush2.msra.mxu0 0.0
    %3433 = vmatprep.subr.mxu0 0.0
    %3434 = vmatpush2.msra.mxu0 0.0
    %3435 = vmatprep.subr.mxu0 0.0
    %3436 = vmatpush2.msra.mxu0 0.0
    %3437 = vmatprep.mubr.f32.mxu0 0.0
    %3438 = vmatmul.mubr.f32.gmra.mxu0 %v3371
    %v3439 = vpop.f32.mrf.mxu0
    %v3440 = vadd.f32 %v3366, %v3439
    %v3441 = vpop.f32.mrf.mxu0
    %3442 = vdwg.mxu0
    %vm3443 = vcmask 9216
    %3444 = vst.msk [vmem:[#allocation11] sm:$0x3] %vm3443, %v3440
    // Predicated region
    $region70: #{disease_lstm_attention_forward.1} parent=1 // pred_check
      _
    $region71: #{disease_lstm_attention_forward.1} parent=1 // pred_check_branch
      %3446 = sbr.rel (0) target = $region73
    $region72: #{disease_lstm_attention_forward.1} parent=1 // pred_region
      %s3448 = ssub.s32 32, 32
      %3449 = vsyncadd [#allocation4], %s3448
      %s3451 = sshll.u32 [#allocation11], 4
      %s3452 = int_to_ptr.vmem [resolvable:$true] %s3451
      %3454 = dma.vmem_to_hbm [thread:$0]  %s3452, 32, %s12, [#allocation4]
    $region73: #{disease_lstm_attention_forward.1} parent=1 // pred_fallthru
      _
    // Predicated region
    $region74: #{disease_lstm_attention_forward.1} parent=1 // pred_check
      _
    $region75: #{disease_lstm_attention_forward.1} parent=1 // pred_check_branch
      %3456 = sbr.rel (0) target = $region77
    $region76: #{disease_lstm_attention_forward.1} parent=1 // pred_region
      %s3458 = ssub.s32 32, 32
      %3459 = vsyncadd [#allocation13], %s3458
      %s3461 = sshll.u32 [#allocation12], 4
      %s3462 = int_to_ptr.vmem [resolvable:$true] %s3461
      %3464 = dma.vmem_to_hbm [thread:$0]  %s3462, 32, %s13, [#allocation13]
    $region77: #{disease_lstm_attention_forward.1} parent=1 // pred_fallthru
      _
    // Predicated region
    $region78: #{disease_lstm_attention_forward.1} parent=1 // pred_check
      _
    $region79: #{disease_lstm_attention_forward.1} parent=1 // pred_check_branch
      %3466 = sbr.rel (0) target = $region81
    $region80: #{disease_lstm_attention_forward.1} parent=1 // pred_region
      %3467 = dma.done [#allocation4], 32
    $region81: #{disease_lstm_attention_forward.1} parent=1 // pred_fallthru
      _
    // Predicated region
    $region82: #{disease_lstm_attention_forward.1} parent=1 // pred_check
      _
    $region83: #{disease_lstm_attention_forward.1} parent=1 // pred_check_branch
      %3469 = sbr.rel (0) target = $region85
    $region84: #{disease_lstm_attention_forward.1} parent=1 // pred_region
      %3470 = dma.done [#allocation13], 32
    $region85: #{disease_lstm_attention_forward.1} parent=1 // pred_fallthru
      _
    %3471 = vsyncpa [#allocation3], 1
    %3472 = vsyncpa [#allocation6], 1
    %3473 = vsyncpa [#allocation9], 1
    %3474 = vsyncpa [#allocation4], 1
    %3475 = vsyncpa [#allocation13], 1

</llo_original>
